<compile_context>
chip_gen: v7x
topology: tpu7x:2x2x1
jax: 0.10.0
libtpu: 0.0.40
codegen_flags: <defaults>
</compile_context>

<pallas_src>
import functools

import jax
import jax.numpy as jnp
from jax.experimental import pallas as pl
from jax.experimental.pallas import tpu as pltpu


# ------------------------------ helpers --------------------------------------

def _pick_tile(dim, candidates):
    """Largest candidate that evenly divides `dim`; else the full dim (single block)."""
    for c in candidates:
        if c <= dim and dim % c == 0:
            return c
    return dim


_MN_TILES = (512, 256, 128)
_K_TILES = (1024, 512, 256)

_SQRT_2_OVER_PI = 0.7978845608028654


def _gelu(x):
    # tanh-form GELU: transcendental goes to the EUP slot.  Matches nn.GELU()'s
    # exact-erf form to ~1e-3 relative (documented approximation).
    return 0.5 * x * (1.0 + jnp.tanh(_SQRT_2_OVER_PI * (x + 0.044715 * x * x * x)))


# ------------------------------ Pallas kernels ------------------------------

def _matmul_kernel(x_ref, w_ref, b_ref, o_ref, acc_ref, *, activation):
    """Tiled matmul with K-accumulation; bias/activation only in the finalize step."""
    @pl.when(pl.program_id(2) == 0)
    def _init():
        acc_ref[...] = jnp.zeros_like(acc_ref)

    acc_ref[...] += jnp.dot(x_ref[...], w_ref[...],
                            preferred_element_type=jnp.float32)

    @pl.when(pl.program_id(2) == pl.num_programs(2) - 1)
    def _finalize():
        acc = acc_ref[...] + b_ref[...]
        if activation == "gelu":
            acc = _gelu(acc)
        o_ref[...] = acc.astype(o_ref.dtype)


def _ln_matmul_kernel(x_ref, g_ref, bln_ref, w_ref, b_ref, o_ref, *, eps, activation):
    """LayerNorm (f32) fused into a matmul over the full K (= channel) dim."""
    x = x_ref[...].astype(jnp.float32)
    mu = jnp.mean(x, axis=-1, keepdims=True)
    var = jnp.mean(jnp.square(x - mu), axis=-1, keepdims=True)
    xn = (x - mu) * jax.lax.rsqrt(var + eps)
    xn = xn * g_ref[...] + bln_ref[...]
    acc = jnp.dot(xn.astype(jnp.bfloat16), w_ref[...],
                  preferred_element_type=jnp.float32)
    acc = acc + b_ref[...]
    if activation == "gelu":
        acc = _gelu(acc)
    o_ref[...] = acc.astype(o_ref.dtype)


def _layernorm_kernel(x_ref, g_ref, b_ref, o_ref, *, eps):
    x = x_ref[...].astype(jnp.float32)
    mu = jnp.mean(x, axis=-1, keepdims=True)
    var = jnp.mean(jnp.square(x - mu), axis=-1, keepdims=True)
    y = (x - mu) * jax.lax.rsqrt(var + eps)
    o_ref[...] = (y * g_ref[...] + b_ref[...]).astype(o_ref.dtype)


def _attention_kernel(q_ref, k_ref, v_ref, o_ref, *, scale):
    """All heads of one (window/batch) element per grid step; softmax in f32."""
    q = q_ref[0]                                           # (H, N, Dh) bf16
    k = k_ref[0]
    v = v_ref[0]
    s = jax.lax.dot_general(q, k, (((2,), (2,)), ((0,), (0,))),
                            preferred_element_type=jnp.float32) * scale   # (H, N, N)
    s = s - jnp.max(s, axis=-1, keepdims=True)
    p = jnp.exp(s)
    p = p * pl.reciprocal(jnp.sum(p, axis=-1, keepdims=True), approx=True)
    o = jax.lax.dot_general(p.astype(v.dtype), v, (((2,), (1,)), ((0,), (0,))),
                            preferred_element_type=jnp.float32)           # (H, N, Dh)
    o_ref[0] = o.astype(o_ref.dtype)


def _conv3x3_kernel(x_ref, w_ref, o_ref, *, Hh, Ww):
    """3x3 same conv (no bias): accumulate 9 matmul taps in a VMEM f32 accumulator."""
    x = x_ref[0]                                           # (H+2, W+2, C)
    C = x.shape[-1]
    O = o_ref.shape[-1]
    acc = jnp.zeros((Hh * Ww, O), jnp.float32)
    for kh in range(3):
        for kw in range(3):
            patch = x[kh:kh + Hh, kw:kw + Ww, :].reshape(Hh * Ww, C)
            acc = acc + jnp.dot(patch, w_ref[kh, kw],
                                preferred_element_type=jnp.float32)
    o_ref[0] = acc.reshape(Hh, Ww, O).astype(o_ref.dtype)


# ------------------------------ kernel wrappers ------------------------------

def pallas_matmul(x, w, b=None, activation="none", out_dtype=jnp.float32):
    """x: (M, K), w: (K, N), b: (N,) or None -> (M, N). bf16 MXU, f32 accumulate."""
    M, K = x.shape
    N = w.shape[1]
    if b is None:
        b = jnp.zeros((N,), jnp.float32)
    x = x.astype(jnp.bfloat16)
    w = w.astype(jnp.bfloat16)
    b = b.reshape(1, N).astype(jnp.float32)

    tm = _pick_tile(M, _MN_TILES)
    tn = _pick_tile(N, _MN_TILES)
    tk = _pick_tile(K, _K_TILES)
    grid = (M // tm, N // tn, K // tk)

    return pl.pallas_call(
        functools.partial(_matmul_kernel, activation=activation),
        grid=grid,
        in_specs=[
            pl.BlockSpec((tm, tk), lambda i, j, k: (i, k)),
            pl.BlockSpec((tk, tn), lambda i, j, k: (k, j)),
            pl.BlockSpec((1, tn), lambda i, j, k: (0, j)),
        ],
        out_specs=pl.BlockSpec((tm, tn), lambda i, j, k: (i, j)),
        out_shape=jax.ShapeDtypeStruct((M, N), out_dtype),
        scratch_shapes=[pltpu.VMEM((tm, tn), jnp.float32)],
        compiler_params=pltpu.CompilerParams(
            dimension_semantics=("parallel", "parallel", "arbitrary")),
    )(x, w, b)


def pallas_ln_matmul(x, gamma, beta, w, b, eps=1e-6, activation="none",
                     out_dtype=jnp.float32):
    """LayerNorm(x) @ w + b (K = channel dim kept whole so LN stats are exact)."""
    M, K = x.shape
    N = w.shape[1]
    tm = _pick_tile(M, (256, 128))
    tn = _pick_tile(N, _MN_TILES)
    grid = (M // tm, N // tn)

    return pl.pallas_call(
        functools.partial(_ln_matmul_kernel, eps=eps, activation=activation),
        grid=grid,
        in_specs=[
            pl.BlockSpec((tm, K), lambda i, j: (i, 0)),
            pl.BlockSpec((1, K), lambda i, j: (0, 0)),
            pl.BlockSpec((1, K), lambda i, j: (0, 0)),
            pl.BlockSpec((K, tn), lambda i, j: (0, j)),
            pl.BlockSpec((1, tn), lambda i, j: (0, j)),
        ],
        out_specs=pl.BlockSpec((tm, tn), lambda i, j: (i, j)),
        out_shape=jax.ShapeDtypeStruct((M, N), out_dtype),
        compiler_params=pltpu.CompilerParams(
            dimension_semantics=("parallel", "parallel")),
    )(x, gamma.reshape(1, K).astype(jnp.float32),
      beta.reshape(1, K).astype(jnp.float32),
      w.astype(jnp.bfloat16), b.reshape(1, N).astype(jnp.float32))


def pallas_layernorm(x, gamma, beta, eps):
    """Standalone LayerNorm over last dim, tiled over rows.  x: (M, C)."""
    M, C = x.shape
    tm = _pick_tile(M, (1024, 512, 256, 128))
    return pl.pallas_call(
        functools.partial(_layernorm_kernel, eps=eps),
        grid=(M // tm,),
        in_specs=[pl.BlockSpec((tm, C), lambda i: (i, 0)),
                  pl.BlockSpec((1, C), lambda i: (0, 0)),
                  pl.BlockSpec((1, C), lambda i: (0, 0))],
        out_specs=pl.BlockSpec((tm, C), lambda i: (i, 0)),
        out_shape=jax.ShapeDtypeStruct((M, C), x.dtype),
        compiler_params=pltpu.CompilerParams(dimension_semantics=("parallel",)),
    )(x, gamma.reshape(1, C), beta.reshape(1, C))


def pallas_attention(q, k, v, scale):
    """q/k/v: (B, H, N, Dh) -> (B, H, N, Dh); all heads per grid step."""
    B, H, N, Dh = q.shape
    spec = pl.BlockSpec((1, H, N, Dh), lambda i: (i, 0, 0, 0))
    # TODO(synk): for large global-attention N, switch to a flash-style kv-tiled
    #             online-softmax kernel instead of whole-sequence scores.
    return pl.pallas_call(
        functools.partial(_attention_kernel, scale=scale),
        grid=(B,),
        in_specs=[spec, spec, spec],
        out_specs=spec,
        out_shape=jax.ShapeDtypeStruct((B, H, N, Dh), q.dtype),
        compiler_params=pltpu.CompilerParams(dimension_semantics=("parallel",)),
    )(q, k, v)


def pallas_conv3x3(x_nhwc, w_oihw):
    """3x3, stride 1, padding 1, no bias.  Input read once; 9-tap accumulation in VMEM."""
    B, H, W, C = x_nhwc.shape
    O = w_oihw.shape[0]
    xp = jnp.pad(x_nhwc, ((0, 0), (1, 1), (1, 1), (0, 0))).astype(jnp.bfloat16)
    w = jnp.transpose(w_oihw, (2, 3, 1, 0)).astype(jnp.bfloat16)   # (kh, kw, C, O)
    return pl.pallas_call(
        functools.partial(_conv3x3_kernel, Hh=H, Ww=W),
        grid=(B,),
        in_specs=[pl.BlockSpec((1, H + 2, W + 2, C), lambda b: (b, 0, 0, 0)),
                  pl.BlockSpec((3, 3, C, O), lambda b: (0, 0, 0, 0))],
        out_specs=pl.BlockSpec((1, H, W, O), lambda b: (b, 0, 0, 0)),
        out_shape=jax.ShapeDtypeStruct((B, H, W, O), jnp.float32),
        compiler_params=pltpu.CompilerParams(dimension_semantics=("parallel",)),
    )(xp, w)


# ------------------------------ ViT forward ----------------------------------

def window_partition(x, ws):
    B, H, W, C = x.shape
    pad_h = (ws - H % ws) % ws
    pad_w = (ws - W % ws) % ws
    if pad_h or pad_w:
        x = jnp.pad(x, ((0, 0), (0, pad_h), (0, pad_w), (0, 0)))
    Hp, Wp = H + pad_h, W + pad_w
    x = x.reshape(B, Hp // ws, ws, Wp // ws, ws, C)
    windows = x.transpose(0, 1, 3, 2, 4, 5).reshape(-1, ws, ws, C)
    return windows, (Hp, Wp)


def window_unpartition(windows, ws, pad_hw, hw):
    Hp, Wp = pad_hw
    H, W = hw
    B = windows.shape[0] // (Hp * Wp // ws // ws)
    x = windows.reshape(B, Hp // ws, Wp // ws, ws, ws, -1)
    x = x.transpose(0, 1, 3, 2, 4, 5).reshape(B, Hp, Wp, -1)
    if Hp > H or Wp > W:
        x = x[:, :H, :W, :]
    return x


def attention_block(x, p, num_heads, fuse_norm1):
    B, H, W, C = x.shape
    N = H * W
    Dh = C // num_heads
    xf = x.reshape(B * N, C)
    if fuse_norm1:
        qkv = pallas_ln_matmul(xf, p["norm1_w"], p["norm1_b"], p["qkv_w"].T,
                               p["qkv_b"], eps=1e-6, out_dtype=jnp.bfloat16)
    else:
        qkv = pallas_matmul(xf, p["qkv_w"].T, p["qkv_b"], out_dtype=jnp.bfloat16)
    # TODO(synk): emit q/k/v directly in (B, heads, N, Dh) layout from the matmul
    #             kernel (or index into the qkv buffer from the attention kernel)
    #             to remove this XLA transpose round-trip through HBM.
    qkv = qkv.reshape(B, N, 3, num_heads, Dh).transpose(2, 0, 3, 1, 4)   # (3,B,h,N,Dh)
    o = pallas_attention(qkv[0], qkv[1], qkv[2], scale=Dh ** -0.5)       # (B,h,N,Dh) bf16
    o = o.transpose(0, 2, 1, 3).reshape(B * N, C)
    o = pallas_matmul(o, p["proj_w"].T, p["proj_b"], out_dtype=jnp.float32)
    return o.reshape(B, H, W, C)


def block_forward(x, p, window_size, num_heads):
    B, H, W, C = x.shape
    shortcut = x
    ws = window_size
    needs_pad = ws > 0 and ((H % ws != 0) or (W % ws != 0))

    if ws > 0 and needs_pad:
        # Reference order is norm1 -> zero-pad -> window; the fused LN+qkv kernel
        # would also normalize pad tokens, so fall back to the un-fused path here.
        xn = pallas_layernorm(x.reshape(-1, C), p["norm1_w"], p["norm1_b"], 1e-6)
        xw, pad_hw = window_partition(xn.reshape(B, H, W, C), ws)
        xa = attention_block(xw, p, num_heads, fuse_norm1=False)
        xa = window_unpartition(xa, ws, pad_hw, (H, W))
    elif ws > 0:
        # No padding: window partition is a pure token permutation, so the
        # per-token LayerNorm commutes with it and can be fused into qkv.
        xw, pad_hw = window_partition(x, ws)
        xa = attention_block(xw, p, num_heads, fuse_norm1=True)
        xa = window_unpartition(xa, ws, pad_hw, (H, W))
    else:
        xa = attention_block(x, p, num_heads, fuse_norm1=True)

    x = shortcut + xa
    # MLP: norm2 fused into lin1 (+GELU in the finalize), bf16 hidden activations.
    h = pallas_ln_matmul(x.reshape(-1, C), p["norm2_w"], p["norm2_b"],
                         p["lin1_w"].T, p["lin1_b"], eps=1e-6,
                         activation="gelu", out_dtype=jnp.bfloat16)
    h = pallas_matmul(h, p["lin2_w"].T, p["lin2_b"], out_dtype=jnp.float32)
    return x + h.reshape(B, H, W, C)


def vit_forward(x_nchw, params, cfg):
    B = x_nchw.shape[0]
    C, P, E = cfg["in_chans"], cfg["patch_size"], cfg["embed_dim"]
    Hp = cfg["img_size"] // P
    O = cfg["out_chans"]

    # --- patch embed: stride=kernel conv == per-patch matmul ---
    xpat = x_nchw.reshape(B, C, Hp, P, Hp, P).transpose(0, 2, 4, 1, 3, 5)
    xpat = xpat.reshape(B * Hp * Hp, C * P * P)
    wpat = params["patch_w"].reshape(E, C * P * P).T
    x = pallas_matmul(xpat, wpat, params["patch_b"]).reshape(B, Hp, Hp, E)
    x = x + params["pos_embed"]

    interm = []
    for i, blk in enumerate(params["blocks"]):
        ws = cfg["window_size"] if i not in cfg["global_attn_indexes"] else 0
        x = block_forward(x, blk, ws, cfg["num_heads"])
        if ws == 0:
            interm.append(x)

    # --- neck: 1x1 conv -> LayerNorm2d -> 3x3 conv -> LayerNorm2d ---
    BHW = B * Hp * Hp
    h = pallas_matmul(x.reshape(BHW, E), params["neck_conv1"].reshape(O, E).T, None)
    h = pallas_layernorm(h, params["neck_ln1_w"], params["neck_ln1_b"], 1e-6)
    h = pallas_conv3x3(h.reshape(B, Hp, Hp, O), params["neck_conv2"])
    h = pallas_layernorm(h.reshape(BHW, O), params["neck_ln2_w"], params["neck_ln2_b"], 1e-6)
    h = h.reshape(B, Hp, Hp, O)
    out = jnp.transpose(h, (0, 3, 1, 2))  # back to NCHW like the PyTorch output
    return out, interm


# ------------------------------ params / main --------------------------------

def init_params(key, cfg):
    E, C, P = cfg["embed_dim"], cfg["in_chans"], cfg["patch_size"]
    Hp = cfg["img_size"] // P
    hidden = int(E * cfg["mlp_ratio"])
    O = cfg["out_chans"]
    keys = iter(jax.random.split(key, 128))

    def w(shape, scale=0.02):
        return (scale * jax.random.normal(next(keys), shape)).astype(jnp.float32)

    params = {
        "patch_w": w((E, C, P, P)),
        "patch_b": w((E,)),
        "pos_embed": w((1, Hp, Hp, E)),
        "blocks": [],
        "neck_conv1": w((O, E, 1, 1)),
        "neck_ln1_w": jnp.ones((O,), jnp.float32),
        "neck_ln1_b": jnp.zeros((O,), jnp.float32),
        "neck_conv2": w((O, O, 3, 3)),
        "neck_ln2_w": jnp.ones((O,), jnp.float32),
        "neck_ln2_b": jnp.zeros((O,), jnp.float32),
    }
    for _ in range(cfg["depth"]):
        params["blocks"].append({
            "norm1_w": jnp.ones((E,), jnp.float32), "norm1_b": jnp.zeros((E,), jnp.float32),
            "qkv_w": w((3 * E, E)), "qkv_b": w((3 * E,)),
            "proj_w": w((E, E)), "proj_b": w((E,)),
            "norm2_w": jnp.ones((E,), jnp.float32), "norm2_b": jnp.zeros((E,), jnp.float32),
            "lin1_w": w((hidden, E)), "lin1_b": w((hidden,)),
            "lin2_w": w((E, hidden)), "lin2_b": w((E,)),
        })
    return params


if __name__ == "__main__":
    CFG = dict(img_size=32, patch_size=8, in_chans=3, embed_dim=32, depth=2,
               num_heads=4, mlp_ratio=4.0, out_chans=32, window_size=2,
               global_attn_indexes=(1,))

    key = jax.random.PRNGKey(0)
    kx, kp = jax.random.split(key)
    x = jax.random.normal(kx, (2, CFG["in_chans"], CFG["img_size"], CFG["img_size"]),
                          dtype=jnp.float32)
    params = init_params(kp, CFG)

    fwd = jax.jit(lambda xx, pp: vit_forward(xx, pp, CFG))
    out, interm = fwd(x, params)
    jax.block_until_ready(out)
    jax.block_until_ready(interm)

    assert out.shape == (2, CFG["out_chans"], 4, 4)
    assert len(interm) == 1 and interm[0].shape == (2, 4, 4, CFG["embed_dim"])
    print("KERNEL_OK")
</pallas_src>

<mosaic_0001>
module attributes {stable_mosaic.version = 11 : i64} {
  func.func @_matmul_kernel(%arg0: i32, %arg1: i32, %arg2: i32, %arg3: memref<32x192xbf16, #tpu.memory_space<vmem>>, %arg4: memref<192x32xbf16, #tpu.memory_space<vmem>>, %arg5: memref<1x32xf32, #tpu.memory_space<vmem>>, %arg6: memref<32x32xf32, #tpu.memory_space<vmem>>, %arg7: memref<32x32xf32, #tpu.memory_space<vmem>>) attributes {dimension_semantics = [#tpu.dimension_semantics<parallel>, #tpu.dimension_semantics<parallel>, #tpu.dimension_semantics<arbitrary>], iteration_bounds = array<i64: 1, 1, 1>, scalar_prefetch = 0 : i64, scratch_operands = 1 : i64, tpu.core_type = #tpu.core_type<tc>, window_params = [{transform_indices = @transform_0, window_bounds = array<i64: 32, 192>}, {transform_indices = @transform_1, window_bounds = array<i64: 192, 32>}, {transform_indices = @transform_2, window_bounds = array<i64: 1, 32>}, {transform_indices = @transform_3, window_bounds = array<i64: 32, 32>}]} {
    %c0_i32 = arith.constant 0 : i32
    %0 = arith.cmpi eq, %arg2, %c0_i32 : i32
    %1 = arith.extui %0 : i1 to i32
    %c0_i32_0 = arith.constant 0 : i32
    %2 = arith.cmpi ne, %1, %c0_i32_0 : i32
    scf.if %2 {
      %cst_10 = arith.constant 0.000000e+00 : f32
      %12 = vector.broadcast %cst_10 : f32 to vector<32x32xf32>
      %c0_11 = arith.constant 0 : index
      %c0_12 = arith.constant 0 : index
      %13 = vector.load %arg7[%c0_11, %c0_12] : memref<32x32xf32, #tpu.memory_space<vmem>>, vector<32x32xf32>
      tpu.vector_store %arg7[%c0_11, %c0_12], %12 {strides = array<i32>} : memref<32x32xf32, #tpu.memory_space<vmem>>, vector<32x32xf32>,
    } else {
    }
    %c0 = arith.constant 0 : index
    %c0_1 = arith.constant 0 : index
    %3 = vector.load %arg7[%c0, %c0_1] : memref<32x32xf32, #tpu.memory_space<vmem>>, vector<32x32xf32>
    %c0_2 = arith.constant 0 : index
    %c0_3 = arith.constant 0 : index
    %4 = vector.load %arg3[%c0_2, %c0_3] : memref<32x192xbf16, #tpu.memory_space<vmem>>, vector<32x192xbf16>
    %c0_4 = arith.constant 0 : index
    %c0_5 = arith.constant 0 : index
    %5 = vector.load %arg4[%c0_4, %c0_5] : memref<192x32xbf16, #tpu.memory_space<vmem>>, vector<192x32xbf16>
    %cst = arith.constant dense<0.000000e+00> : vector<32x32xf32>
    %6 = tpu.matmul %4, %5, %cst {dimension_numbers = #tpu.dot_dimension_numbers<[1], [0], [0], [1], [0, 0, 1, 1], [], []>} : vector<32x192xbf16>, vector<192x32xbf16>, vector<32x32xf32> -> vector<32x32xf32>
    %7 = arith.addf %3, %6 : vector<32x32xf32>
    %c0_6 = arith.constant 0 : index
    %c0_7 = arith.constant 0 : index
    %8 = vector.load %arg7[%c0_6, %c0_7] : memref<32x32xf32, #tpu.memory_space<vmem>>, vector<32x32xf32>
    tpu.vector_store %arg7[%c0_6, %c0_7], %7 {strides = array<i32>} : memref<32x32xf32, #tpu.memory_space<vmem>>, vector<32x32xf32>,
    %c0_i32_8 = arith.constant 0 : i32
    %9 = arith.cmpi eq, %arg2, %c0_i32_8 : i32
    %10 = arith.extui %9 : i1 to i32
    %c0_i32_9 = arith.constant 0 : i32
    %11 = arith.cmpi ne, %10, %c0_i32_9 : i32
    scf.if %11 {
      %c0_10 = arith.constant 0 : index
      %c0_11 = arith.constant 0 : index
      %12 = vector.load %arg7[%c0_10, %c0_11] : memref<32x32xf32, #tpu.memory_space<vmem>>, vector<32x32xf32>
      %c0_12 = arith.constant 0 : index
      %c0_13 = arith.constant 0 : index
      %13 = vector.load %arg5[%c0_12, %c0_13] : memref<1x32xf32, #tpu.memory_space<vmem>>, vector<1x32xf32>
      %14 = vector.broadcast %13 : vector<1x32xf32> to vector<32x32xf32>
      %15 = arith.addf %12, %14 : vector<32x32xf32>
      %c0_14 = arith.constant 0 : index
      %c0_15 = arith.constant 0 : index
      %16 = vector.load %arg6[%c0_14, %c0_15] : memref<32x32xf32, #tpu.memory_space<vmem>>, vector<32x32xf32>
      tpu.vector_store %arg6[%c0_14, %c0_15], %15 {strides = array<i32>} : memref<32x32xf32, #tpu.memory_space<vmem>>, vector<32x32xf32>,
    } else {
    }
    return
  }
  func.func @transform_0(%arg0: i32, %arg1: i32, %arg2: i32) -> (i32, i32) {
    %c0_i32 = arith.constant 0 : i32
    return %arg0, %arg2 : i32, i32
  }
  func.func @transform_1(%arg0: i32, %arg1: i32, %arg2: i32) -> (i32, i32) {
    %c0_i32 = arith.constant 0 : i32
    return %arg2, %arg1 : i32, i32
  }
  func.func @transform_2(%arg0: i32, %arg1: i32, %arg2: i32) -> (i32, i32) {
    %c0_i32 = arith.constant 0 : i32
    %c0_i32_0 = arith.constant 0 : i32
    return %c0_i32, %arg1 : i32, i32
  }
  func.func @transform_3(%arg0: i32, %arg1: i32, %arg2: i32) -> (i32, i32) {
    %c0_i32 = arith.constant 0 : i32
    return %arg0, %arg1 : i32, i32
  }
}

module attributes {stable_mosaic.version = 11 : i64} {
  func.func @_ln_matmul_kernel(%arg0: i32, %arg1: i32, %arg2: memref<32x32xf32, #tpu.memory_space<vmem>>, %arg3: memref<1x32xf32, #tpu.memory_space<vmem>>, %arg4: memref<1x32xf32, #tpu.memory_space<vmem>>, %arg5: memref<32x96xbf16, #tpu.memory_space<vmem>>, %arg6: memref<1x96xf32, #tpu.memory_space<vmem>>, %arg7: memref<32x96xbf16, #tpu.memory_space<vmem>>) attributes {dimension_semantics = [#tpu.dimension_semantics<parallel>, #tpu.dimension_semantics<parallel>], iteration_bounds = array<i64: 1, 1>, scalar_prefetch = 0 : i64, scratch_operands = 0 : i64, tpu.core_type = #tpu.core_type<tc>, window_params = [{transform_indices = @transform_0, window_bounds = array<i64: 32, 32>}, {pipeline_mode = #tpu.pipeline_mode<synchronous>, transform_indices = @transform_1, window_bounds = array<i64: 1, 32>}, {pipeline_mode = #tpu.pipeline_mode<synchronous>, transform_indices = @transform_2, window_bounds = array<i64: 1, 32>}, {transform_indices = @transform_3, window_bounds = array<i64: 32, 96>}, {transform_indices = @transform_4, window_bounds = array<i64: 1, 96>}, {transform_indices = @transform_5, window_bounds = array<i64: 32, 96>}]} {
    %c0 = arith.constant 0 : index
    %c0_0 = arith.constant 0 : index
    %0 = vector.load %arg2[%c0, %c0_0] : memref<32x32xf32, #tpu.memory_space<vmem>>, vector<32x32xf32>
    %cst = arith.constant dense<0.000000e+00> : vector<32xf32>
    %1 = vector.multi_reduction <add>, %0, %cst [1] : vector<32x32xf32> to vector<32xf32>
    %2 = vector.shape_cast %1 : vector<32xf32> to vector<32x1xf32>
    %cst_1 = arith.constant 3.200000e+01 : f32
    %3 = vector.broadcast %cst_1 : f32 to vector<32x1xf32>
    %4 = arith.divf %2, %3 : vector<32x1xf32>
    %5 = vector.broadcast %4 : vector<32x1xf32> to vector<32x32xf32>
    %6 = arith.subf %0, %5 : vector<32x32xf32>
    %7 = arith.mulf %6, %6 : vector<32x32xf32>
    %cst_2 = arith.constant dense<0.000000e+00> : vector<32xf32>
    %8 = vector.multi_reduction <add>, %7, %cst_2 [1] : vector<32x32xf32> to vector<32xf32>
    %9 = vector.shape_cast %8 : vector<32xf32> to vector<32x1xf32>
    %cst_3 = arith.constant 3.200000e+01 : f32
    %10 = vector.broadcast %cst_3 : f32 to vector<32x1xf32>
    %11 = arith.divf %9, %10 : vector<32x1xf32>
    %12 = vector.broadcast %4 : vector<32x1xf32> to vector<32x32xf32>
    %13 = arith.subf %0, %12 : vector<32x32xf32>
    %cst_4 = arith.constant 9.99999997E-7 : f32
    %14 = vector.broadcast %cst_4 : f32 to vector<32x1xf32>
    %15 = arith.addf %11, %14 : vector<32x1xf32>
    %16 = math.rsqrt %15 : vector<32x1xf32>
    %17 = vector.broadcast %16 : vector<32x1xf32> to vector<32x32xf32>
    %18 = arith.mulf %13, %17 : vector<32x32xf32>
    %c0_5 = arith.constant 0 : index
    %c0_6 = arith.constant 0 : index
    %19 = vector.load %arg3[%c0_5, %c0_6] : memref<1x32xf32, #tpu.memory_space<vmem>>, vector<1x32xf32>
    %20 = vector.broadcast %19 : vector<1x32xf32> to vector<32x32xf32>
    %21 = arith.mulf %18, %20 : vector<32x32xf32>
    %c0_7 = arith.constant 0 : index
    %c0_8 = arith.constant 0 : index
    %22 = vector.load %arg4[%c0_7, %c0_8] : memref<1x32xf32, #tpu.memory_space<vmem>>, vector<1x32xf32>
    %23 = vector.broadcast %22 : vector<1x32xf32> to vector<32x32xf32>
    %24 = arith.addf %21, %23 : vector<32x32xf32>
    %25 = arith.truncf %24 : vector<32x32xf32> to vector<32x32xbf16>
    %c0_9 = arith.constant 0 : index
    %c0_10 = arith.constant 0 : index
    %26 = vector.load %arg5[%c0_9, %c0_10] : memref<32x96xbf16, #tpu.memory_space<vmem>>, vector<32x96xbf16>
    %cst_11 = arith.constant dense<0.000000e+00> : vector<32x96xf32>
    %27 = tpu.matmul %25, %26, %cst_11 {dimension_numbers = #tpu.dot_dimension_numbers<[1], [0], [0], [1], [0, 0, 1, 1], [], []>} : vector<32x32xbf16>, vector<32x96xbf16>, vector<32x96xf32> -> vector<32x96xf32>
    %c0_12 = arith.constant 0 : index
    %c0_13 = arith.constant 0 : index
    %28 = vector.load %arg6[%c0_12, %c0_13] : memref<1x96xf32, #tpu.memory_space<vmem>>, vector<1x96xf32>
    %29 = vector.broadcast %28 : vector<1x96xf32> to vector<32x96xf32>
    %30 = arith.addf %27, %29 : vector<32x96xf32>
    %31 = arith.truncf %30 : vector<32x96xf32> to vector<32x96xbf16>
    %c0_14 = arith.constant 0 : index
    %c0_15 = arith.constant 0 : index
    %32 = vector.load %arg7[%c0_14, %c0_15] : memref<32x96xbf16, #tpu.memory_space<vmem>>, vector<32x96xbf16>
    tpu.vector_store %arg7[%c0_14, %c0_15], %31 {strides = array<i32>} : memref<32x96xbf16, #tpu.memory_space<vmem>>, vector<32x96xbf16>,
    return
  }
  func.func @transform_0(%arg0: i32, %arg1: i32) -> (i32, i32) {
    %c0_i32 = arith.constant 0 : i32
    %c0_i32_0 = arith.constant 0 : i32
    return %arg0, %c0_i32 : i32, i32
  }
  func.func @transform_1(%arg0: i32, %arg1: i32) -> (i32, i32) {
    %c0_i32 = arith.constant 0 : i32
    %c0_i32_0 = arith.constant 0 : i32
    %c0_i32_1 = arith.constant 0 : i32
    return %c0_i32, %c0_i32_0 : i32, i32
  }
  func.func @transform_2(%arg0: i32, %arg1: i32) -> (i32, i32) {
    %c0_i32 = arith.constant 0 : i32
    %c0_i32_0 = arith.constant 0 : i32
    %c0_i32_1 = arith.constant 0 : i32
    return %c0_i32, %c0_i32_0 : i32, i32
  }
  func.func @transform_3(%arg0: i32, %arg1: i32) -> (i32, i32) {
    %c0_i32 = arith.constant 0 : i32
    %c0_i32_0 = arith.constant 0 : i32
    return %c0_i32, %arg1 : i32, i32
  }
  func.func @transform_4(%arg0: i32, %arg1: i32) -> (i32, i32) {
    %c0_i32 = arith.constant 0 : i32
    %c0_i32_0 = arith.constant 0 : i32
    return %c0_i32, %arg1 : i32, i32
  }
  func.func @transform_5(%arg0: i32, %arg1: i32) -> (i32, i32) {
    %c0_i32 = arith.constant 0 : i32
    return %arg0, %arg1 : i32, i32
  }
}

module attributes {stable_mosaic.version = 11 : i64} {
  func.func @_attention_kernel(%arg0: i32, %arg1: memref<1x4x4x8xbf16, #tpu.memory_space<vmem>>, %arg2: memref<1x4x4x8xbf16, #tpu.memory_space<vmem>>, %arg3: memref<1x4x4x8xbf16, #tpu.memory_space<vmem>>, %arg4: memref<1x4x4x8xbf16, #tpu.memory_space<vmem>>) attributes {dimension_semantics = [#tpu.dimension_semantics<parallel>], iteration_bounds = array<i64: 8>, scalar_prefetch = 0 : i64, scratch_operands = 0 : i64, tpu.core_type = #tpu.core_type<tc>, window_params = [{transform_indices = @transform_0, window_bounds = array<i64: 1, 4, 4, 8>}, {transform_indices = @transform_1, window_bounds = array<i64: 1, 4, 4, 8>}, {transform_indices = @transform_2, window_bounds = array<i64: 1, 4, 4, 8>}, {transform_indices = @transform_3, window_bounds = array<i64: 1, 4, 4, 8>}]} {
    %c0 = arith.constant 0 : index
    %c0_0 = arith.constant 0 : index
    %c0_1 = arith.constant 0 : index
    %c0_2 = arith.constant 0 : index
    %0 = vector.load %arg1[%c0, %c0_0, %c0_1, %c0_2] : memref<1x4x4x8xbf16, #tpu.memory_space<vmem>>, vector<1x4x4x8xbf16>
    %1 = vector.shape_cast %0 : vector<1x4x4x8xbf16> to vector<4x4x8xbf16>
    %c0_3 = arith.constant 0 : index
    %c0_4 = arith.constant 0 : index
    %c0_5 = arith.constant 0 : index
    %c0_6 = arith.constant 0 : index
    %2 = vector.load %arg2[%c0_3, %c0_4, %c0_5, %c0_6] : memref<1x4x4x8xbf16, #tpu.memory_space<vmem>>, vector<1x4x4x8xbf16>
    %3 = vector.shape_cast %2 : vector<1x4x4x8xbf16> to vector<4x4x8xbf16>
    %c0_7 = arith.constant 0 : index
    %c0_8 = arith.constant 0 : index
    %c0_9 = arith.constant 0 : index
    %c0_10 = arith.constant 0 : index
    %4 = vector.load %arg3[%c0_7, %c0_8, %c0_9, %c0_10] : memref<1x4x4x8xbf16, #tpu.memory_space<vmem>>, vector<1x4x4x8xbf16>
    %5 = vector.shape_cast %4 : vector<1x4x4x8xbf16> to vector<4x4x8xbf16>
    %cst = arith.constant dense<0.000000e+00> : vector<4x4x4xf32>
    %6 = tpu.matmul %1, %3, %cst {dimension_numbers = #tpu.dot_dimension_numbers<[2], [2], [1], [1], [0, 0, 0, 1, 1, 1], [0], [0]>} : vector<4x4x8xbf16>, vector<4x4x8xbf16>, vector<4x4x4xf32> -> vector<4x4x4xf32>
    %cst_11 = arith.constant 0.353553385 : f32
    %7 = vector.broadcast %cst_11 : f32 to vector<4x4x4xf32>
    %8 = arith.mulf %6, %7 : vector<4x4x4xf32>
    %cst_12 = arith.constant dense<0xFF800000> : vector<4x4xf32>
    %9 = vector.multi_reduction <maximumf>, %8, %cst_12 [2] : vector<4x4x4xf32> to vector<4x4xf32>
    %10 = vector.shape_cast %9 : vector<4x4xf32> to vector<4x4x1xf32>
    %11 = vector.broadcast %10 : vector<4x4x1xf32> to vector<4x4x4xf32>
    %12 = arith.subf %8, %11 : vector<4x4x4xf32>
    %13 = math.exp %12 : vector<4x4x4xf32>
    %cst_13 = arith.constant dense<0.000000e+00> : vector<4x4xf32>
    %14 = vector.multi_reduction <add>, %13, %cst_13 [2] : vector<4x4x4xf32> to vector<4x4xf32>
    %15 = vector.shape_cast %14 : vector<4x4xf32> to vector<4x4x1xf32>
    %16 = tpu.reciprocal %15 {approx = true} : vector<4x4x1xf32> -> vector<4x4x1xf32>
    %17 = vector.broadcast %16 : vector<4x4x1xf32> to vector<4x4x4xf32>
    %18 = arith.mulf %13, %17 : vector<4x4x4xf32>
    %19 = arith.truncf %18 : vector<4x4x4xf32> to vector<4x4x4xbf16>
    %cst_14 = arith.constant dense<0.000000e+00> : vector<4x4x8xf32>
    %20 = tpu.matmul %19, %5, %cst_14 {dimension_numbers = #tpu.dot_dimension_numbers<[2], [1], [1], [2], [0, 0, 0, 1, 1, 2], [0], [0]>} : vector<4x4x4xbf16>, vector<4x4x8xbf16>, vector<4x4x8xf32> -> vector<4x4x8xf32>
    %21 = arith.truncf %20 : vector<4x4x8xf32> to vector<4x4x8xbf16>
    %c0_15 = arith.constant 0 : index
    %c0_16 = arith.constant 0 : index
    %c0_17 = arith.constant 0 : index
    %c0_18 = arith.constant 0 : index
    %22 = vector.load %arg4[%c0_15, %c0_16, %c0_17, %c0_18] : memref<1x4x4x8xbf16, #tpu.memory_space<vmem>>, vector<1x4x4x8xbf16>
    %23 = vector.shape_cast %22 : vector<1x4x4x8xbf16> to vector<4x4x8xbf16>
    %24 = vector.shape_cast %21 : vector<4x4x8xbf16> to vector<1x4x4x8xbf16>
    tpu.vector_store %arg4[%c0_15, %c0_16, %c0_17, %c0_18], %24 {strides = array<i32>} : memref<1x4x4x8xbf16, #tpu.memory_space<vmem>>, vector<1x4x4x8xbf16>,
    return
  }
  func.func @transform_0(%arg0: i32) -> (i32, i32, i32, i32) {
    %c0_i32 = arith.constant 0 : i32
    %c0_i32_0 = arith.constant 0 : i32
    %c0_i32_1 = arith.constant 0 : i32
    %c0_i32_2 = arith.constant 0 : i32
    return %arg0, %c0_i32, %c0_i32_0, %c0_i32_1 : i32, i32, i32, i32
  }
  func.func @transform_1(%arg0: i32) -> (i32, i32, i32, i32) {
    %c0_i32 = arith.constant 0 : i32
    %c0_i32_0 = arith.constant 0 : i32
    %c0_i32_1 = arith.constant 0 : i32
    %c0_i32_2 = arith.constant 0 : i32
    return %arg0, %c0_i32, %c0_i32_0, %c0_i32_1 : i32, i32, i32, i32
  }
  func.func @transform_2(%arg0: i32) -> (i32, i32, i32, i32) {
    %c0_i32 = arith.constant 0 : i32
    %c0_i32_0 = arith.constant 0 : i32
    %c0_i32_1 = arith.constant 0 : i32
    %c0_i32_2 = arith.constant 0 : i32
    return %arg0, %c0_i32, %c0_i32_0, %c0_i32_1 : i32, i32, i32, i32
  }
  func.func @transform_3(%arg0: i32) -> (i32, i32, i32, i32) {
    %c0_i32 = arith.constant 0 : i32
    %c0_i32_0 = arith.constant 0 : i32
    %c0_i32_1 = arith.constant 0 : i32
    %c0_i32_2 = arith.constant 0 : i32
    return %arg0, %c0_i32, %c0_i32_0, %c0_i32_1 : i32, i32, i32, i32
  }
}

module attributes {stable_mosaic.version = 11 : i64} {
  func.func @_ln_matmul_kernel(%arg0: i32, %arg1: i32, %arg2: memref<32x32xf32, #tpu.memory_space<vmem>>, %arg3: memref<1x32xf32, #tpu.memory_space<vmem>>, %arg4: memref<1x32xf32, #tpu.memory_space<vmem>>, %arg5: memref<32x128xbf16, #tpu.memory_space<vmem>>, %arg6: memref<1x128xf32, #tpu.memory_space<vmem>>, %arg7: memref<32x128xbf16, #tpu.memory_space<vmem>>) attributes {dimension_semantics = [#tpu.dimension_semantics<parallel>, #tpu.dimension_semantics<parallel>], iteration_bounds = array<i64: 1, 1>, scalar_prefetch = 0 : i64, scratch_operands = 0 : i64, tpu.core_type = #tpu.core_type<tc>, window_params = [{transform_indices = @transform_0, window_bounds = array<i64: 32, 32>}, {pipeline_mode = #tpu.pipeline_mode<synchronous>, transform_indices = @transform_1, window_bounds = array<i64: 1, 32>}, {pipeline_mode = #tpu.pipeline_mode<synchronous>, transform_indices = @transform_2, window_bounds = array<i64: 1, 32>}, {transform_indices = @transform_3, window_bounds = array<i64: 32, 128>}, {transform_indices = @transform_4, window_bounds = array<i64: 1, 128>}, {transform_indices = @transform_5, window_bounds = array<i64: 32, 128>}]} {
    %c0 = arith.constant 0 : index
    %c0_0 = arith.constant 0 : index
    %0 = vector.load %arg2[%c0, %c0_0] : memref<32x32xf32, #tpu.memory_space<vmem>>, vector<32x32xf32>
    %cst = arith.constant dense<0.000000e+00> : vector<32xf32>
    %1 = vector.multi_reduction <add>, %0, %cst [1] : vector<32x32xf32> to vector<32xf32>
    %2 = vector.shape_cast %1 : vector<32xf32> to vector<32x1xf32>
    %cst_1 = arith.constant 3.200000e+01 : f32
    %3 = vector.broadcast %cst_1 : f32 to vector<32x1xf32>
    %4 = arith.divf %2, %3 : vector<32x1xf32>
    %5 = vector.broadcast %4 : vector<32x1xf32> to vector<32x32xf32>
    %6 = arith.subf %0, %5 : vector<32x32xf32>
    %7 = arith.mulf %6, %6 : vector<32x32xf32>
    %cst_2 = arith.constant dense<0.000000e+00> : vector<32xf32>
    %8 = vector.multi_reduction <add>, %7, %cst_2 [1] : vector<32x32xf32> to vector<32xf32>
    %9 = vector.shape_cast %8 : vector<32xf32> to vector<32x1xf32>
    %cst_3 = arith.constant 3.200000e+01 : f32
    %10 = vector.broadcast %cst_3 : f32 to vector<32x1xf32>
    %11 = arith.divf %9, %10 : vector<32x1xf32>
    %12 = vector.broadcast %4 : vector<32x1xf32> to vector<32x32xf32>
    %13 = arith.subf %0, %12 : vector<32x32xf32>
    %cst_4 = arith.constant 9.99999997E-7 : f32
    %14 = vector.broadcast %cst_4 : f32 to vector<32x1xf32>
    %15 = arith.addf %11, %14 : vector<32x1xf32>
    %16 = math.rsqrt %15 : vector<32x1xf32>
    %17 = vector.broadcast %16 : vector<32x1xf32> to vector<32x32xf32>
    %18 = arith.mulf %13, %17 : vector<32x32xf32>
    %c0_5 = arith.constant 0 : index
    %c0_6 = arith.constant 0 : index
    %19 = vector.load %arg3[%c0_5, %c0_6] : memref<1x32xf32, #tpu.memory_space<vmem>>, vector<1x32xf32>
    %20 = vector.broadcast %19 : vector<1x32xf32> to vector<32x32xf32>
    %21 = arith.mulf %18, %20 : vector<32x32xf32>
    %c0_7 = arith.constant 0 : index
    %c0_8 = arith.constant 0 : index
    %22 = vector.load %arg4[%c0_7, %c0_8] : memref<1x32xf32, #tpu.memory_space<vmem>>, vector<1x32xf32>
    %23 = vector.broadcast %22 : vector<1x32xf32> to vector<32x32xf32>
    %24 = arith.addf %21, %23 : vector<32x32xf32>
    %25 = arith.truncf %24 : vector<32x32xf32> to vector<32x32xbf16>
    %c0_9 = arith.constant 0 : index
    %c0_10 = arith.constant 0 : index
    %26 = vector.load %arg5[%c0_9, %c0_10] : memref<32x128xbf16, #tpu.memory_space<vmem>>, vector<32x128xbf16>
    %cst_11 = arith.constant dense<0.000000e+00> : vector<32x128xf32>
    %27 = tpu.matmul %25, %26, %cst_11 {dimension_numbers = #tpu.dot_dimension_numbers<[1], [0], [0], [1], [0, 0, 1, 1], [], []>} : vector<32x32xbf16>, vector<32x128xbf16>, vector<32x128xf32> -> vector<32x128xf32>
    %c0_12 = arith.constant 0 : index
    %c0_13 = arith.constant 0 : index
    %28 = vector.load %arg6[%c0_12, %c0_13] : memref<1x128xf32, #tpu.memory_space<vmem>>, vector<1x128xf32>
    %29 = vector.broadcast %28 : vector<1x128xf32> to vector<32x128xf32>
    %30 = arith.addf %27, %29 : vector<32x128xf32>
    %cst_14 = arith.constant 5.000000e-01 : f32
    %31 = vector.broadcast %cst_14 : f32 to vector<32x128xf32>
    %32 = arith.mulf %31, %30 : vector<32x128xf32>
    %cst_15 = arith.constant 4.471500e-02 : f32
    %33 = vector.broadcast %cst_15 : f32 to vector<32x128xf32>
    %34 = arith.mulf %33, %30 : vector<32x128xf32>
    %35 = arith.mulf %34, %30 : vector<32x128xf32>
    %36 = arith.mulf %35, %30 : vector<32x128xf32>
    %37 = arith.addf %30, %36 : vector<32x128xf32>
    %cst_16 = arith.constant 0.797884583 : f32
    %38 = vector.broadcast %cst_16 : f32 to vector<32x128xf32>
    %39 = arith.mulf %38, %37 : vector<32x128xf32>
    %40 = math.tanh %39 : vector<32x128xf32>
    %cst_17 = arith.constant 1.000000e+00 : f32
    %41 = vector.broadcast %cst_17 : f32 to vector<32x128xf32>
    %42 = arith.addf %41, %40 : vector<32x128xf32>
    %43 = arith.mulf %32, %42 : vector<32x128xf32>
    %44 = arith.truncf %43 : vector<32x128xf32> to vector<32x128xbf16>
    %c0_18 = arith.constant 0 : index
    %c0_19 = arith.constant 0 : index
    %45 = vector.load %arg7[%c0_18, %c0_19] : memref<32x128xbf16, #tpu.memory_space<vmem>>, vector<32x128xbf16>
    tpu.vector_store %arg7[%c0_18, %c0_19], %44 {strides = array<i32>} : memref<32x128xbf16, #tpu.memory_space<vmem>>, vector<32x128xbf16>,
    return
  }
  func.func @transform_0(%arg0: i32, %arg1: i32) -> (i32, i32) {
    %c0_i32 = arith.constant 0 : i32
    %c0_i32_0 = arith.constant 0 : i32
    return %arg0, %c0_i32 : i32, i32
  }
  func.func @transform_1(%arg0: i32, %arg1: i32) -> (i32, i32) {
    %c0_i32 = arith.constant 0 : i32
    %c0_i32_0 = arith.constant 0 : i32
    %c0_i32_1 = arith.constant 0 : i32
    return %c0_i32, %c0_i32_0 : i32, i32
  }
  func.func @transform_2(%arg0: i32, %arg1: i32) -> (i32, i32) {
    %c0_i32 = arith.constant 0 : i32
    %c0_i32_0 = arith.constant 0 : i32
    %c0_i32_1 = arith.constant 0 : i32
    return %c0_i32, %c0_i32_0 : i32, i32
  }
  func.func @transform_3(%arg0: i32, %arg1: i32) -> (i32, i32) {
    %c0_i32 = arith.constant 0 : i32
    %c0_i32_0 = arith.constant 0 : i32
    return %c0_i32, %arg1 : i32, i32
  }
  func.func @transform_4(%arg0: i32, %arg1: i32) -> (i32, i32) {
    %c0_i32 = arith.constant 0 : i32
    %c0_i32_0 = arith.constant 0 : i32
    return %c0_i32, %arg1 : i32, i32
  }
  func.func @transform_5(%arg0: i32, %arg1: i32) -> (i32, i32) {
    %c0_i32 = arith.constant 0 : i32
    return %arg0, %arg1 : i32, i32
  }
}

module attributes {stable_mosaic.version = 11 : i64} {
  func.func @_matmul_kernel(%arg0: i32, %arg1: i32, %arg2: i32, %arg3: memref<32x32xbf16, #tpu.memory_space<vmem>>, %arg4: memref<32x32xbf16, #tpu.memory_space<vmem>>, %arg5: memref<1x32xf32, #tpu.memory_space<vmem>>, %arg6: memref<32x32xf32, #tpu.memory_space<vmem>>, %arg7: memref<32x32xf32, #tpu.memory_space<vmem>>) attributes {dimension_semantics = [#tpu.dimension_semantics<parallel>, #tpu.dimension_semantics<parallel>, #tpu.dimension_semantics<arbitrary>], iteration_bounds = array<i64: 1, 1, 1>, scalar_prefetch = 0 : i64, scratch_operands = 1 : i64, tpu.core_type = #tpu.core_type<tc>, window_params = [{transform_indices = @transform_0, window_bounds = array<i64: 32, 32>}, {transform_indices = @transform_1, window_bounds = array<i64: 32, 32>}, {transform_indices = @transform_2, window_bounds = array<i64: 1, 32>}, {transform_indices = @transform_3, window_bounds = array<i64: 32, 32>}]} {
    %c0_i32 = arith.constant 0 : i32
    %0 = arith.cmpi eq, %arg2, %c0_i32 : i32
    %1 = arith.extui %0 : i1 to i32
    %c0_i32_0 = arith.constant 0 : i32
    %2 = arith.cmpi ne, %1, %c0_i32_0 : i32
    scf.if %2 {
      %cst_10 = arith.constant 0.000000e+00 : f32
      %12 = vector.broadcast %cst_10 : f32 to vector<32x32xf32>
      %c0_11 = arith.constant 0 : index
      %c0_12 = arith.constant 0 : index
      %13 = vector.load %arg7[%c0_11, %c0_12] : memref<32x32xf32, #tpu.memory_space<vmem>>, vector<32x32xf32>
      tpu.vector_store %arg7[%c0_11, %c0_12], %12 {strides = array<i32>} : memref<32x32xf32, #tpu.memory_space<vmem>>, vector<32x32xf32>,
    } else {
    }
    %c0 = arith.constant 0 : index
    %c0_1 = arith.constant 0 : index
    %3 = vector.load %arg7[%c0, %c0_1] : memref<32x32xf32, #tpu.memory_space<vmem>>, vector<32x32xf32>
    %c0_2 = arith.constant 0 : index
    %c0_3 = arith.constant 0 : index
    %4 = vector.load %arg3[%c0_2, %c0_3] : memref<32x32xbf16, #tpu.memory_space<vmem>>, vector<32x32xbf16>
    %c0_4 = arith.constant 0 : index
    %c0_5 = arith.constant 0 : index
    %5 = vector.load %arg4[%c0_4, %c0_5] : memref<32x32xbf16, #tpu.memory_space<vmem>>, vector<32x32xbf16>
    %cst = arith.constant dense<0.000000e+00> : vector<32x32xf32>
    %6 = tpu.matmul %4, %5, %cst {dimension_numbers = #tpu.dot_dimension_numbers<[1], [0], [0], [1], [0, 0, 1, 1], [], []>} : vector<32x32xbf16>, vector<32x32xbf16>, vector<32x32xf32> -> vector<32x32xf32>
    %7 = arith.addf %3, %6 : vector<32x32xf32>
    %c0_6 = arith.constant 0 : index
    %c0_7 = arith.constant 0 : index
    %8 = vector.load %arg7[%c0_6, %c0_7] : memref<32x32xf32, #tpu.memory_space<vmem>>, vector<32x32xf32>
    tpu.vector_store %arg7[%c0_6, %c0_7], %7 {strides = array<i32>} : memref<32x32xf32, #tpu.memory_space<vmem>>, vector<32x32xf32>,
    %c0_i32_8 = arith.constant 0 : i32
    %9 = arith.cmpi eq, %arg2, %c0_i32_8 : i32
    %10 = arith.extui %9 : i1 to i32
    %c0_i32_9 = arith.constant 0 : i32
    %11 = arith.cmpi ne, %10, %c0_i32_9 : i32
    scf.if %11 {
      %c0_10 = arith.constant 0 : index
      %c0_11 = arith.constant 0 : index
      %12 = vector.load %arg7[%c0_10, %c0_11] : memref<32x32xf32, #tpu.memory_space<vmem>>, vector<32x32xf32>
      %c0_12 = arith.constant 0 : index
      %c0_13 = arith.constant 0 : index
      %13 = vector.load %arg5[%c0_12, %c0_13] : memref<1x32xf32, #tpu.memory_space<vmem>>, vector<1x32xf32>
      %14 = vector.broadcast %13 : vector<1x32xf32> to vector<32x32xf32>
      %15 = arith.addf %12, %14 : vector<32x32xf32>
      %c0_14 = arith.constant 0 : index
      %c0_15 = arith.constant 0 : index
      %16 = vector.load %arg6[%c0_14, %c0_15] : memref<32x32xf32, #tpu.memory_space<vmem>>, vector<32x32xf32>
      tpu.vector_store %arg6[%c0_14, %c0_15], %15 {strides = array<i32>} : memref<32x32xf32, #tpu.memory_space<vmem>>, vector<32x32xf32>,
    } else {
    }
    return
  }
  func.func @transform_0(%arg0: i32, %arg1: i32, %arg2: i32) -> (i32, i32) {
    %c0_i32 = arith.constant 0 : i32
    return %arg0, %arg2 : i32, i32
  }
  func.func @transform_1(%arg0: i32, %arg1: i32, %arg2: i32) -> (i32, i32) {
    %c0_i32 = arith.constant 0 : i32
    return %arg2, %arg1 : i32, i32
  }
  func.func @transform_2(%arg0: i32, %arg1: i32, %arg2: i32) -> (i32, i32) {
    %c0_i32 = arith.constant 0 : i32
    %c0_i32_0 = arith.constant 0 : i32
    return %c0_i32, %arg1 : i32, i32
  }
  func.func @transform_3(%arg0: i32, %arg1: i32, %arg2: i32) -> (i32, i32) {
    %c0_i32 = arith.constant 0 : i32
    return %arg0, %arg1 : i32, i32
  }
}

module attributes {stable_mosaic.version = 11 : i64} {
  func.func @_matmul_kernel(%arg0: i32, %arg1: i32, %arg2: i32, %arg3: memref<32x128xbf16, #tpu.memory_space<vmem>>, %arg4: memref<128x32xbf16, #tpu.memory_space<vmem>>, %arg5: memref<1x32xf32, #tpu.memory_space<vmem>>, %arg6: memref<32x32xf32, #tpu.memory_space<vmem>>, %arg7: memref<32x32xf32, #tpu.memory_space<vmem>>) attributes {dimension_semantics = [#tpu.dimension_semantics<parallel>, #tpu.dimension_semantics<parallel>, #tpu.dimension_semantics<arbitrary>], iteration_bounds = array<i64: 1, 1, 1>, scalar_prefetch = 0 : i64, scratch_operands = 1 : i64, tpu.core_type = #tpu.core_type<tc>, window_params = [{transform_indices = @transform_0, window_bounds = array<i64: 32, 128>}, {transform_indices = @transform_1, window_bounds = array<i64: 128, 32>}, {transform_indices = @transform_2, window_bounds = array<i64: 1, 32>}, {transform_indices = @transform_3, window_bounds = array<i64: 32, 32>}]} {
    %c0_i32 = arith.constant 0 : i32
    %0 = arith.cmpi eq, %arg2, %c0_i32 : i32
    %1 = arith.extui %0 : i1 to i32
    %c0_i32_0 = arith.constant 0 : i32
    %2 = arith.cmpi ne, %1, %c0_i32_0 : i32
    scf.if %2 {
      %cst_10 = arith.constant 0.000000e+00 : f32
      %12 = vector.broadcast %cst_10 : f32 to vector<32x32xf32>
      %c0_11 = arith.constant 0 : index
      %c0_12 = arith.constant 0 : index
      %13 = vector.load %arg7[%c0_11, %c0_12] : memref<32x32xf32, #tpu.memory_space<vmem>>, vector<32x32xf32>
      tpu.vector_store %arg7[%c0_11, %c0_12], %12 {strides = array<i32>} : memref<32x32xf32, #tpu.memory_space<vmem>>, vector<32x32xf32>,
    } else {
    }
    %c0 = arith.constant 0 : index
    %c0_1 = arith.constant 0 : index
    %3 = vector.load %arg7[%c0, %c0_1] : memref<32x32xf32, #tpu.memory_space<vmem>>, vector<32x32xf32>
    %c0_2 = arith.constant 0 : index
    %c0_3 = arith.constant 0 : index
    %4 = vector.load %arg3[%c0_2, %c0_3] : memref<32x128xbf16, #tpu.memory_space<vmem>>, vector<32x128xbf16>
    %c0_4 = arith.constant 0 : index
    %c0_5 = arith.constant 0 : index
    %5 = vector.load %arg4[%c0_4, %c0_5] : memref<128x32xbf16, #tpu.memory_space<vmem>>, vector<128x32xbf16>
    %cst = arith.constant dense<0.000000e+00> : vector<32x32xf32>
    %6 = tpu.matmul %4, %5, %cst {dimension_numbers = #tpu.dot_dimension_numbers<[1], [0], [0], [1], [0, 0, 1, 1], [], []>} : vector<32x128xbf16>, vector<128x32xbf16>, vector<32x32xf32> -> vector<32x32xf32>
    %7 = arith.addf %3, %6 : vector<32x32xf32>
    %c0_6 = arith.constant 0 : index
    %c0_7 = arith.constant 0 : index
    %8 = vector.load %arg7[%c0_6, %c0_7] : memref<32x32xf32, #tpu.memory_space<vmem>>, vector<32x32xf32>
    tpu.vector_store %arg7[%c0_6, %c0_7], %7 {strides = array<i32>} : memref<32x32xf32, #tpu.memory_space<vmem>>, vector<32x32xf32>,
    %c0_i32_8 = arith.constant 0 : i32
    %9 = arith.cmpi eq, %arg2, %c0_i32_8 : i32
    %10 = arith.extui %9 : i1 to i32
    %c0_i32_9 = arith.constant 0 : i32
    %11 = arith.cmpi ne, %10, %c0_i32_9 : i32
    scf.if %11 {
      %c0_10 = arith.constant 0 : index
      %c0_11 = arith.constant 0 : index
      %12 = vector.load %arg7[%c0_10, %c0_11] : memref<32x32xf32, #tpu.memory_space<vmem>>, vector<32x32xf32>
      %c0_12 = arith.constant 0 : index
      %c0_13 = arith.constant 0 : index
      %13 = vector.load %arg5[%c0_12, %c0_13] : memref<1x32xf32, #tpu.memory_space<vmem>>, vector<1x32xf32>
      %14 = vector.broadcast %13 : vector<1x32xf32> to vector<32x32xf32>
      %15 = arith.addf %12, %14 : vector<32x32xf32>
      %c0_14 = arith.constant 0 : index
      %c0_15 = arith.constant 0 : index
      %16 = vector.load %arg6[%c0_14, %c0_15] : memref<32x32xf32, #tpu.memory_space<vmem>>, vector<32x32xf32>
      tpu.vector_store %arg6[%c0_14, %c0_15], %15 {strides = array<i32>} : memref<32x32xf32, #tpu.memory_space<vmem>>, vector<32x32xf32>,
    } else {
    }
    return
  }
  func.func @transform_0(%arg0: i32, %arg1: i32, %arg2: i32) -> (i32, i32) {
    %c0_i32 = arith.constant 0 : i32
    return %arg0, %arg2 : i32, i32
  }
  func.func @transform_1(%arg0: i32, %arg1: i32, %arg2: i32) -> (i32, i32) {
    %c0_i32 = arith.constant 0 : i32
    return %arg2, %arg1 : i32, i32
  }
  func.func @transform_2(%arg0: i32, %arg1: i32, %arg2: i32) -> (i32, i32) {
    %c0_i32 = arith.constant 0 : i32
    %c0_i32_0 = arith.constant 0 : i32
    return %c0_i32, %arg1 : i32, i32
  }
  func.func @transform_3(%arg0: i32, %arg1: i32, %arg2: i32) -> (i32, i32) {
    %c0_i32 = arith.constant 0 : i32
    return %arg0, %arg1 : i32, i32
  }
}

module attributes {stable_mosaic.version = 11 : i64} {
  func.func @_attention_kernel(%arg0: i32, %arg1: memref<1x4x16x8xbf16, #tpu.memory_space<vmem>>, %arg2: memref<1x4x16x8xbf16, #tpu.memory_space<vmem>>, %arg3: memref<1x4x16x8xbf16, #tpu.memory_space<vmem>>, %arg4: memref<1x4x16x8xbf16, #tpu.memory_space<vmem>>) attributes {dimension_semantics = [#tpu.dimension_semantics<parallel>], iteration_bounds = array<i64: 2>, scalar_prefetch = 0 : i64, scratch_operands = 0 : i64, tpu.core_type = #tpu.core_type<tc>, window_params = [{transform_indices = @transform_0, window_bounds = array<i64: 1, 4, 16, 8>}, {transform_indices = @transform_1, window_bounds = array<i64: 1, 4, 16, 8>}, {transform_indices = @transform_2, window_bounds = array<i64: 1, 4, 16, 8>}, {transform_indices = @transform_3, window_bounds = array<i64: 1, 4, 16, 8>}]} {
    %c0 = arith.constant 0 : index
    %c0_0 = arith.constant 0 : index
    %c0_1 = arith.constant 0 : index
    %c0_2 = arith.constant 0 : index
    %0 = vector.load %arg1[%c0, %c0_0, %c0_1, %c0_2] : memref<1x4x16x8xbf16, #tpu.memory_space<vmem>>, vector<1x4x16x8xbf16>
    %1 = vector.shape_cast %0 : vector<1x4x16x8xbf16> to vector<4x16x8xbf16>
    %c0_3 = arith.constant 0 : index
    %c0_4 = arith.constant 0 : index
    %c0_5 = arith.constant 0 : index
    %c0_6 = arith.constant 0 : index
    %2 = vector.load %arg2[%c0_3, %c0_4, %c0_5, %c0_6] : memref<1x4x16x8xbf16, #tpu.memory_space<vmem>>, vector<1x4x16x8xbf16>
    %3 = vector.shape_cast %2 : vector<1x4x16x8xbf16> to vector<4x16x8xbf16>
    %c0_7 = arith.constant 0 : index
    %c0_8 = arith.constant 0 : index
    %c0_9 = arith.constant 0 : index
    %c0_10 = arith.constant 0 : index
    %4 = vector.load %arg3[%c0_7, %c0_8, %c0_9, %c0_10] : memref<1x4x16x8xbf16, #tpu.memory_space<vmem>>, vector<1x4x16x8xbf16>
    %5 = vector.shape_cast %4 : vector<1x4x16x8xbf16> to vector<4x16x8xbf16>
    %cst = arith.constant dense<0.000000e+00> : vector<4x16x16xf32>
    %6 = tpu.matmul %1, %3, %cst {dimension_numbers = #tpu.dot_dimension_numbers<[2], [2], [1], [1], [0, 0, 0, 1, 1, 1], [0], [0]>} : vector<4x16x8xbf16>, vector<4x16x8xbf16>, vector<4x16x16xf32> -> vector<4x16x16xf32>
    %cst_11 = arith.constant 0.353553385 : f32
    %7 = vector.broadcast %cst_11 : f32 to vector<4x16x16xf32>
    %8 = arith.mulf %6, %7 : vector<4x16x16xf32>
    %cst_12 = arith.constant dense<0xFF800000> : vector<4x16xf32>
    %9 = vector.multi_reduction <maximumf>, %8, %cst_12 [2] : vector<4x16x16xf32> to vector<4x16xf32>
    %10 = vector.shape_cast %9 : vector<4x16xf32> to vector<4x16x1xf32>
    %11 = vector.broadcast %10 : vector<4x16x1xf32> to vector<4x16x16xf32>
    %12 = arith.subf %8, %11 : vector<4x16x16xf32>
    %13 = math.exp %12 : vector<4x16x16xf32>
    %cst_13 = arith.constant dense<0.000000e+00> : vector<4x16xf32>
    %14 = vector.multi_reduction <add>, %13, %cst_13 [2] : vector<4x16x16xf32> to vector<4x16xf32>
    %15 = vector.shape_cast %14 : vector<4x16xf32> to vector<4x16x1xf32>
    %16 = tpu.reciprocal %15 {approx = true} : vector<4x16x1xf32> -> vector<4x16x1xf32>
    %17 = vector.broadcast %16 : vector<4x16x1xf32> to vector<4x16x16xf32>
    %18 = arith.mulf %13, %17 : vector<4x16x16xf32>
    %19 = arith.truncf %18 : vector<4x16x16xf32> to vector<4x16x16xbf16>
    %cst_14 = arith.constant dense<0.000000e+00> : vector<4x16x8xf32>
    %20 = tpu.matmul %19, %5, %cst_14 {dimension_numbers = #tpu.dot_dimension_numbers<[2], [1], [1], [2], [0, 0, 0, 1, 1, 2], [0], [0]>} : vector<4x16x16xbf16>, vector<4x16x8xbf16>, vector<4x16x8xf32> -> vector<4x16x8xf32>
    %21 = arith.truncf %20 : vector<4x16x8xf32> to vector<4x16x8xbf16>
    %c0_15 = arith.constant 0 : index
    %c0_16 = arith.constant 0 : index
    %c0_17 = arith.constant 0 : index
    %c0_18 = arith.constant 0 : index
    %22 = vector.load %arg4[%c0_15, %c0_16, %c0_17, %c0_18] : memref<1x4x16x8xbf16, #tpu.memory_space<vmem>>, vector<1x4x16x8xbf16>
    %23 = vector.shape_cast %22 : vector<1x4x16x8xbf16> to vector<4x16x8xbf16>
    %24 = vector.shape_cast %21 : vector<4x16x8xbf16> to vector<1x4x16x8xbf16>
    tpu.vector_store %arg4[%c0_15, %c0_16, %c0_17, %c0_18], %24 {strides = array<i32>} : memref<1x4x16x8xbf16, #tpu.memory_space<vmem>>, vector<1x4x16x8xbf16>,
    return
  }
  func.func @transform_0(%arg0: i32) -> (i32, i32, i32, i32) {
    %c0_i32 = arith.constant 0 : i32
    %c0_i32_0 = arith.constant 0 : i32
    %c0_i32_1 = arith.constant 0 : i32
    %c0_i32_2 = arith.constant 0 : i32
    return %arg0, %c0_i32, %c0_i32_0, %c0_i32_1 : i32, i32, i32, i32
  }
  func.func @transform_1(%arg0: i32) -> (i32, i32, i32, i32) {
    %c0_i32 = arith.constant 0 : i32
    %c0_i32_0 = arith.constant 0 : i32
    %c0_i32_1 = arith.constant 0 : i32
    %c0_i32_2 = arith.constant 0 : i32
    return %arg0, %c0_i32, %c0_i32_0, %c0_i32_1 : i32, i32, i32, i32
  }
  func.func @transform_2(%arg0: i32) -> (i32, i32, i32, i32) {
    %c0_i32 = arith.constant 0 : i32
    %c0_i32_0 = arith.constant 0 : i32
    %c0_i32_1 = arith.constant 0 : i32
    %c0_i32_2 = arith.constant 0 : i32
    return %arg0, %c0_i32, %c0_i32_0, %c0_i32_1 : i32, i32, i32, i32
  }
  func.func @transform_3(%arg0: i32) -> (i32, i32, i32, i32) {
    %c0_i32 = arith.constant 0 : i32
    %c0_i32_0 = arith.constant 0 : i32
    %c0_i32_1 = arith.constant 0 : i32
    %c0_i32_2 = arith.constant 0 : i32
    return %arg0, %c0_i32, %c0_i32_0, %c0_i32_1 : i32, i32, i32, i32
  }
}

module attributes {stable_mosaic.version = 11 : i64} {
  func.func @_layernorm_kernel(%arg0: i32, %arg1: memref<32x32xf32, #tpu.memory_space<vmem>>, %arg2: memref<1x32xf32, #tpu.memory_space<vmem>>, %arg3: memref<1x32xf32, #tpu.memory_space<vmem>>, %arg4: memref<32x32xf32, #tpu.memory_space<vmem>>) attributes {dimension_semantics = [#tpu.dimension_semantics<parallel>], iteration_bounds = array<i64: 1>, scalar_prefetch = 0 : i64, scratch_operands = 0 : i64, tpu.core_type = #tpu.core_type<tc>, window_params = [{transform_indices = @transform_0, window_bounds = array<i64: 32, 32>}, {pipeline_mode = #tpu.pipeline_mode<synchronous>, transform_indices = @transform_1, window_bounds = array<i64: 1, 32>}, {pipeline_mode = #tpu.pipeline_mode<synchronous>, transform_indices = @transform_2, window_bounds = array<i64: 1, 32>}, {transform_indices = @transform_3, window_bounds = array<i64: 32, 32>}]} {
    %c0 = arith.constant 0 : index
    %c0_0 = arith.constant 0 : index
    %0 = vector.load %arg1[%c0, %c0_0] : memref<32x32xf32, #tpu.memory_space<vmem>>, vector<32x32xf32>
    %cst = arith.constant dense<0.000000e+00> : vector<32xf32>
    %1 = vector.multi_reduction <add>, %0, %cst [1] : vector<32x32xf32> to vector<32xf32>
    %2 = vector.shape_cast %1 : vector<32xf32> to vector<32x1xf32>
    %cst_1 = arith.constant 3.200000e+01 : f32
    %3 = vector.broadcast %cst_1 : f32 to vector<32x1xf32>
    %4 = arith.divf %2, %3 : vector<32x1xf32>
    %5 = vector.broadcast %4 : vector<32x1xf32> to vector<32x32xf32>
    %6 = arith.subf %0, %5 : vector<32x32xf32>
    %7 = arith.mulf %6, %6 : vector<32x32xf32>
    %cst_2 = arith.constant dense<0.000000e+00> : vector<32xf32>
    %8 = vector.multi_reduction <add>, %7, %cst_2 [1] : vector<32x32xf32> to vector<32xf32>
    %9 = vector.shape_cast %8 : vector<32xf32> to vector<32x1xf32>
    %cst_3 = arith.constant 3.200000e+01 : f32
    %10 = vector.broadcast %cst_3 : f32 to vector<32x1xf32>
    %11 = arith.divf %9, %10 : vector<32x1xf32>
    %12 = vector.broadcast %4 : vector<32x1xf32> to vector<32x32xf32>
    %13 = arith.subf %0, %12 : vector<32x32xf32>
    %cst_4 = arith.constant 9.99999997E-7 : f32
    %14 = vector.broadcast %cst_4 : f32 to vector<32x1xf32>
    %15 = arith.addf %11, %14 : vector<32x1xf32>
    %16 = math.rsqrt %15 : vector<32x1xf32>
    %17 = vector.broadcast %16 : vector<32x1xf32> to vector<32x32xf32>
    %18 = arith.mulf %13, %17 : vector<32x32xf32>
    %c0_5 = arith.constant 0 : index
    %c0_6 = arith.constant 0 : index
    %19 = vector.load %arg2[%c0_5, %c0_6] : memref<1x32xf32, #tpu.memory_space<vmem>>, vector<1x32xf32>
    %20 = vector.broadcast %19 : vector<1x32xf32> to vector<32x32xf32>
    %21 = arith.mulf %18, %20 : vector<32x32xf32>
    %c0_7 = arith.constant 0 : index
    %c0_8 = arith.constant 0 : index
    %22 = vector.load %arg3[%c0_7, %c0_8] : memref<1x32xf32, #tpu.memory_space<vmem>>, vector<1x32xf32>
    %23 = vector.broadcast %22 : vector<1x32xf32> to vector<32x32xf32>
    %24 = arith.addf %21, %23 : vector<32x32xf32>
    %c0_9 = arith.constant 0 : index
    %c0_10 = arith.constant 0 : index
    %25 = vector.load %arg4[%c0_9, %c0_10] : memref<32x32xf32, #tpu.memory_space<vmem>>, vector<32x32xf32>
    tpu.vector_store %arg4[%c0_9, %c0_10], %24 {strides = array<i32>} : memref<32x32xf32, #tpu.memory_space<vmem>>, vector<32x32xf32>,
    return
  }
  func.func @transform_0(%arg0: i32) -> (i32, i32) {
    %c0_i32 = arith.constant 0 : i32
    %c0_i32_0 = arith.constant 0 : i32
    return %arg0, %c0_i32 : i32, i32
  }
  func.func @transform_1(%arg0: i32) -> (i32, i32) {
    %c0_i32 = arith.constant 0 : i32
    %c0_i32_0 = arith.constant 0 : i32
    %c0_i32_1 = arith.constant 0 : i32
    return %c0_i32, %c0_i32_0 : i32, i32
  }
  func.func @transform_2(%arg0: i32) -> (i32, i32) {
    %c0_i32 = arith.constant 0 : i32
    %c0_i32_0 = arith.constant 0 : i32
    %c0_i32_1 = arith.constant 0 : i32
    return %c0_i32, %c0_i32_0 : i32, i32
  }
  func.func @transform_3(%arg0: i32) -> (i32, i32) {
    %c0_i32 = arith.constant 0 : i32
    %c0_i32_0 = arith.constant 0 : i32
    return %arg0, %c0_i32 : i32, i32
  }
}

module attributes {stable_mosaic.version = 11 : i64} {
  func.func @_conv3x3_kernel(%arg0: i32, %arg1: memref<1x6x6x32xbf16, #tpu.memory_space<vmem>>, %arg2: memref<3x3x32x32xbf16, #tpu.memory_space<vmem>>, %arg3: memref<1x4x4x32xf32, #tpu.memory_space<vmem>>) attributes {dimension_semantics = [#tpu.dimension_semantics<parallel>], iteration_bounds = array<i64: 2>, scalar_prefetch = 0 : i64, scratch_operands = 0 : i64, tpu.core_type = #tpu.core_type<tc>, window_params = [{transform_indices = @transform_0, window_bounds = array<i64: 1, 6, 6, 32>}, {pipeline_mode = #tpu.pipeline_mode<synchronous>, transform_indices = @transform_1, window_bounds = array<i64: 3, 3, 32, 32>}, {transform_indices = @transform_2, window_bounds = array<i64: 1, 4, 4, 32>}]} {
    %c0 = arith.constant 0 : index
    %c0_0 = arith.constant 0 : index
    %c0_1 = arith.constant 0 : index
    %c0_2 = arith.constant 0 : index
    %0 = vector.load %arg1[%c0, %c0_0, %c0_1, %c0_2] : memref<1x6x6x32xbf16, #tpu.memory_space<vmem>>, vector<1x6x6x32xbf16>
    %1 = vector.shape_cast %0 : vector<1x6x6x32xbf16> to vector<6x6x32xbf16>
    %cst = arith.constant 0.000000e+00 : f32
    %2 = vector.broadcast %cst : f32 to vector<16x32xf32>
    %3 = vector.extract_strided_slice %1 {offsets = [0, 0, 0], sizes = [4, 4, 32], strides = [1, 1, 1]} : vector<6x6x32xbf16> to vector<4x4x32xbf16>
    %4 = vector.shape_cast %3 : vector<4x4x32xbf16> to vector<16x32xbf16>
    %c0_3 = arith.constant 0 : index
    %c0_4 = arith.constant 0 : index
    %c0_5 = arith.constant 0 : index
    %c0_6 = arith.constant 0 : index
    %5 = vector.load %arg2[%c0_3, %c0_4, %c0_5, %c0_6] : memref<3x3x32x32xbf16, #tpu.memory_space<vmem>>, vector<1x1x32x32xbf16>
    %6 = vector.shape_cast %5 : vector<1x1x32x32xbf16> to vector<32x32xbf16>
    %cst_7 = arith.constant dense<0.000000e+00> : vector<16x32xf32>
    %7 = tpu.matmul %4, %6, %cst_7 {dimension_numbers = #tpu.dot_dimension_numbers<[1], [0], [0], [1], [0, 0, 1, 1], [], []>} : vector<16x32xbf16>, vector<32x32xbf16>, vector<16x32xf32> -> vector<16x32xf32>
    %8 = arith.addf %2, %7 : vector<16x32xf32>
    %9 = vector.extract_strided_slice %1 {offsets = [0, 1, 0], sizes = [4, 4, 32], strides = [1, 1, 1]} : vector<6x6x32xbf16> to vector<4x4x32xbf16>
    %10 = vector.shape_cast %9 : vector<4x4x32xbf16> to vector<16x32xbf16>
    %c0_8 = arith.constant 0 : index
    %c1 = arith.constant 1 : index
    %c0_9 = arith.constant 0 : index
    %c0_10 = arith.constant 0 : index
    %11 = vector.load %arg2[%c0_8, %c1, %c0_9, %c0_10] : memref<3x3x32x32xbf16, #tpu.memory_space<vmem>>, vector<1x1x32x32xbf16>
    %12 = vector.shape_cast %11 : vector<1x1x32x32xbf16> to vector<32x32xbf16>
    %cst_11 = arith.constant dense<0.000000e+00> : vector<16x32xf32>
    %13 = tpu.matmul %10, %12, %cst_11 {dimension_numbers = #tpu.dot_dimension_numbers<[1], [0], [0], [1], [0, 0, 1, 1], [], []>} : vector<16x32xbf16>, vector<32x32xbf16>, vector<16x32xf32> -> vector<16x32xf32>
    %14 = arith.addf %8, %13 : vector<16x32xf32>
    %15 = vector.extract_strided_slice %1 {offsets = [0, 2, 0], sizes = [4, 4, 32], strides = [1, 1, 1]} : vector<6x6x32xbf16> to vector<4x4x32xbf16>
    %16 = vector.shape_cast %15 : vector<4x4x32xbf16> to vector<16x32xbf16>
    %c0_12 = arith.constant 0 : index
    %c2 = arith.constant 2 : index
    %c0_13 = arith.constant 0 : index
    %c0_14 = arith.constant 0 : index
    %17 = vector.load %arg2[%c0_12, %c2, %c0_13, %c0_14] : memref<3x3x32x32xbf16, #tpu.memory_space<vmem>>, vector<1x1x32x32xbf16>
    %18 = vector.shape_cast %17 : vector<1x1x32x32xbf16> to vector<32x32xbf16>
    %cst_15 = arith.constant dense<0.000000e+00> : vector<16x32xf32>
    %19 = tpu.matmul %16, %18, %cst_15 {dimension_numbers = #tpu.dot_dimension_numbers<[1], [0], [0], [1], [0, 0, 1, 1], [], []>} : vector<16x32xbf16>, vector<32x32xbf16>, vector<16x32xf32> -> vector<16x32xf32>
    %20 = arith.addf %14, %19 : vector<16x32xf32>
    %21 = vector.extract_strided_slice %1 {offsets = [1, 0, 0], sizes = [4, 4, 32], strides = [1, 1, 1]} : vector<6x6x32xbf16> to vector<4x4x32xbf16>
    %22 = vector.shape_cast %21 : vector<4x4x32xbf16> to vector<16x32xbf16>
    %c1_16 = arith.constant 1 : index
    %c0_17 = arith.constant 0 : index
    %c0_18 = arith.constant 0 : index
    %c0_19 = arith.constant 0 : index
    %23 = vector.load %arg2[%c1_16, %c0_17, %c0_18, %c0_19] : memref<3x3x32x32xbf16, #tpu.memory_space<vmem>>, vector<1x1x32x32xbf16>
    %24 = vector.shape_cast %23 : vector<1x1x32x32xbf16> to vector<32x32xbf16>
    %cst_20 = arith.constant dense<0.000000e+00> : vector<16x32xf32>
    %25 = tpu.matmul %22, %24, %cst_20 {dimension_numbers = #tpu.dot_dimension_numbers<[1], [0], [0], [1], [0, 0, 1, 1], [], []>} : vector<16x32xbf16>, vector<32x32xbf16>, vector<16x32xf32> -> vector<16x32xf32>
    %26 = arith.addf %20, %25 : vector<16x32xf32>
    %27 = vector.extract_strided_slice %1 {offsets = [1, 1, 0], sizes = [4, 4, 32], strides = [1, 1, 1]} : vector<6x6x32xbf16> to vector<4x4x32xbf16>
    %28 = vector.shape_cast %27 : vector<4x4x32xbf16> to vector<16x32xbf16>
    %c1_21 = arith.constant 1 : index
    %c1_22 = arith.constant 1 : index
    %c0_23 = arith.constant 0 : index
    %c0_24 = arith.constant 0 : index
    %29 = vector.load %arg2[%c1_21, %c1_22, %c0_23, %c0_24] : memref<3x3x32x32xbf16, #tpu.memory_space<vmem>>, vector<1x1x32x32xbf16>
    %30 = vector.shape_cast %29 : vector<1x1x32x32xbf16> to vector<32x32xbf16>
    %cst_25 = arith.constant dense<0.000000e+00> : vector<16x32xf32>
    %31 = tpu.matmul %28, %30, %cst_25 {dimension_numbers = #tpu.dot_dimension_numbers<[1], [0], [0], [1], [0, 0, 1, 1], [], []>} : vector<16x32xbf16>, vector<32x32xbf16>, vector<16x32xf32> -> vector<16x32xf32>
    %32 = arith.addf %26, %31 : vector<16x32xf32>
    %33 = vector.extract_strided_slice %1 {offsets = [1, 2, 0], sizes = [4, 4, 32], strides = [1, 1, 1]} : vector<6x6x32xbf16> to vector<4x4x32xbf16>
    %34 = vector.shape_cast %33 : vector<4x4x32xbf16> to vector<16x32xbf16>
    %c1_26 = arith.constant 1 : index
    %c2_27 = arith.constant 2 : index
    %c0_28 = arith.constant 0 : index
    %c0_29 = arith.constant 0 : index
    %35 = vector.load %arg2[%c1_26, %c2_27, %c0_28, %c0_29] : memref<3x3x32x32xbf16, #tpu.memory_space<vmem>>, vector<1x1x32x32xbf16>
    %36 = vector.shape_cast %35 : vector<1x1x32x32xbf16> to vector<32x32xbf16>
    %cst_30 = arith.constant dense<0.000000e+00> : vector<16x32xf32>
    %37 = tpu.matmul %34, %36, %cst_30 {dimension_numbers = #tpu.dot_dimension_numbers<[1], [0], [0], [1], [0, 0, 1, 1], [], []>} : vector<16x32xbf16>, vector<32x32xbf16>, vector<16x32xf32> -> vector<16x32xf32>
    %38 = arith.addf %32, %37 : vector<16x32xf32>
    %39 = vector.extract_strided_slice %1 {offsets = [2, 0, 0], sizes = [4, 4, 32], strides = [1, 1, 1]} : vector<6x6x32xbf16> to vector<4x4x32xbf16>
    %40 = vector.shape_cast %39 : vector<4x4x32xbf16> to vector<16x32xbf16>
    %c2_31 = arith.constant 2 : index
    %c0_32 = arith.constant 0 : index
    %c0_33 = arith.constant 0 : index
    %c0_34 = arith.constant 0 : index
    %41 = vector.load %arg2[%c2_31, %c0_32, %c0_33, %c0_34] : memref<3x3x32x32xbf16, #tpu.memory_space<vmem>>, vector<1x1x32x32xbf16>
    %42 = vector.shape_cast %41 : vector<1x1x32x32xbf16> to vector<32x32xbf16>
    %cst_35 = arith.constant dense<0.000000e+00> : vector<16x32xf32>
    %43 = tpu.matmul %40, %42, %cst_35 {dimension_numbers = #tpu.dot_dimension_numbers<[1], [0], [0], [1], [0, 0, 1, 1], [], []>} : vector<16x32xbf16>, vector<32x32xbf16>, vector<16x32xf32> -> vector<16x32xf32>
    %44 = arith.addf %38, %43 : vector<16x32xf32>
    %45 = vector.extract_strided_slice %1 {offsets = [2, 1, 0], sizes = [4, 4, 32], strides = [1, 1, 1]} : vector<6x6x32xbf16> to vector<4x4x32xbf16>
    %46 = vector.shape_cast %45 : vector<4x4x32xbf16> to vector<16x32xbf16>
    %c2_36 = arith.constant 2 : index
    %c1_37 = arith.constant 1 : index
    %c0_38 = arith.constant 0 : index
    %c0_39 = arith.constant 0 : index
    %47 = vector.load %arg2[%c2_36, %c1_37, %c0_38, %c0_39] : memref<3x3x32x32xbf16, #tpu.memory_space<vmem>>, vector<1x1x32x32xbf16>
    %48 = vector.shape_cast %47 : vector<1x1x32x32xbf16> to vector<32x32xbf16>
    %cst_40 = arith.constant dense<0.000000e+00> : vector<16x32xf32>
    %49 = tpu.matmul %46, %48, %cst_40 {dimension_numbers = #tpu.dot_dimension_numbers<[1], [0], [0], [1], [0, 0, 1, 1], [], []>} : vector<16x32xbf16>, vector<32x32xbf16>, vector<16x32xf32> -> vector<16x32xf32>
    %50 = arith.addf %44, %49 : vector<16x32xf32>
    %51 = vector.extract_strided_slice %1 {offsets = [2, 2, 0], sizes = [4, 4, 32], strides = [1, 1, 1]} : vector<6x6x32xbf16> to vector<4x4x32xbf16>
    %52 = vector.shape_cast %51 : vector<4x4x32xbf16> to vector<16x32xbf16>
    %c2_41 = arith.constant 2 : index
    %c2_42 = arith.constant 2 : index
    %c0_43 = arith.constant 0 : index
    %c0_44 = arith.constant 0 : index
    %53 = vector.load %arg2[%c2_41, %c2_42, %c0_43, %c0_44] : memref<3x3x32x32xbf16, #tpu.memory_space<vmem>>, vector<1x1x32x32xbf16>
    %54 = vector.shape_cast %53 : vector<1x1x32x32xbf16> to vector<32x32xbf16>
    %cst_45 = arith.constant dense<0.000000e+00> : vector<16x32xf32>
    %55 = tpu.matmul %52, %54, %cst_45 {dimension_numbers = #tpu.dot_dimension_numbers<[1], [0], [0], [1], [0, 0, 1, 1], [], []>} : vector<16x32xbf16>, vector<32x32xbf16>, vector<16x32xf32> -> vector<16x32xf32>
    %56 = arith.addf %50, %55 : vector<16x32xf32>
    %57 = vector.shape_cast %56 : vector<16x32xf32> to vector<4x4x32xf32>
    %c0_46 = arith.constant 0 : index
    %c0_47 = arith.constant 0 : index
    %c0_48 = arith.constant 0 : index
    %c0_49 = arith.constant 0 : index
    %58 = vector.load %arg3[%c0_46, %c0_47, %c0_48, %c0_49] : memref<1x4x4x32xf32, #tpu.memory_space<vmem>>, vector<1x4x4x32xf32>
    %59 = vector.shape_cast %58 : vector<1x4x4x32xf32> to vector<4x4x32xf32>
    %60 = vector.shape_cast %57 : vector<4x4x32xf32> to vector<1x4x4x32xf32>
    tpu.vector_store %arg3[%c0_46, %c0_47, %c0_48, %c0_49], %60 {strides = array<i32>} : memref<1x4x4x32xf32, #tpu.memory_space<vmem>>, vector<1x4x4x32xf32>,
    return
  }
  func.func @transform_0(%arg0: i32) -> (i32, i32, i32, i32) {
    %c0_i32 = arith.constant 0 : i32
    %c0_i32_0 = arith.constant 0 : i32
    %c0_i32_1 = arith.constant 0 : i32
    %c0_i32_2 = arith.constant 0 : i32
    return %arg0, %c0_i32, %c0_i32_0, %c0_i32_1 : i32, i32, i32, i32
  }
  func.func @transform_1(%arg0: i32) -> (i32, i32, i32, i32) {
    %c0_i32 = arith.constant 0 : i32
    %c0_i32_0 = arith.constant 0 : i32
    %c0_i32_1 = arith.constant 0 : i32
    %c0_i32_2 = arith.constant 0 : i32
    %c0_i32_3 = arith.constant 0 : i32
    return %c0_i32, %c0_i32_0, %c0_i32_1, %c0_i32_2 : i32, i32, i32, i32
  }
  func.func @transform_2(%arg0: i32) -> (i32, i32, i32, i32) {
    %c0_i32 = arith.constant 0 : i32
    %c0_i32_0 = arith.constant 0 : i32
    %c0_i32_1 = arith.constant 0 : i32
    %c0_i32_2 = arith.constant 0 : i32
    return %arg0, %c0_i32, %c0_i32_0, %c0_i32_1 : i32, i32, i32, i32
  }
}

module attributes {stable_mosaic.version = 11 : i64} {
  func.func @_layernorm_kernel(%arg0: i32, %arg1: memref<32x32xf32, #tpu.memory_space<vmem>>, %arg2: memref<1x32xf32, #tpu.memory_space<vmem>>, %arg3: memref<1x32xf32, #tpu.memory_space<vmem>>, %arg4: memref<32x32xf32, #tpu.memory_space<vmem>>) attributes {dimension_semantics = [#tpu.dimension_semantics<parallel>], iteration_bounds = array<i64: 1>, scalar_prefetch = 0 : i64, scratch_operands = 0 : i64, tpu.core_type = #tpu.core_type<tc>, window_params = [{transform_indices = @transform_0, window_bounds = array<i64: 32, 32>}, {pipeline_mode = #tpu.pipeline_mode<synchronous>, transform_indices = @transform_1, window_bounds = array<i64: 1, 32>}, {pipeline_mode = #tpu.pipeline_mode<synchronous>, transform_indices = @transform_2, window_bounds = array<i64: 1, 32>}, {transform_indices = @transform_3, window_bounds = array<i64: 32, 32>}]} {
    %c0 = arith.constant 0 : index
    %c0_0 = arith.constant 0 : index
    %0 = vector.load %arg1[%c0, %c0_0] : memref<32x32xf32, #tpu.memory_space<vmem>>, vector<32x32xf32>
    %cst = arith.constant dense<0.000000e+00> : vector<32xf32>
    %1 = vector.multi_reduction <add>, %0, %cst [1] : vector<32x32xf32> to vector<32xf32>
    %2 = vector.shape_cast %1 : vector<32xf32> to vector<32x1xf32>
    %cst_1 = arith.constant 3.200000e+01 : f32
    %3 = vector.broadcast %cst_1 : f32 to vector<32x1xf32>
    %4 = arith.divf %2, %3 : vector<32x1xf32>
    %5 = vector.broadcast %4 : vector<32x1xf32> to vector<32x32xf32>
    %6 = arith.subf %0, %5 : vector<32x32xf32>
    %7 = arith.mulf %6, %6 : vector<32x32xf32>
    %cst_2 = arith.constant dense<0.000000e+00> : vector<32xf32>
    %8 = vector.multi_reduction <add>, %7, %cst_2 [1] : vector<32x32xf32> to vector<32xf32>
    %9 = vector.shape_cast %8 : vector<32xf32> to vector<32x1xf32>
    %cst_3 = arith.constant 3.200000e+01 : f32
    %10 = vector.broadcast %cst_3 : f32 to vector<32x1xf32>
    %11 = arith.divf %9, %10 : vector<32x1xf32>
    %12 = vector.broadcast %4 : vector<32x1xf32> to vector<32x32xf32>
    %13 = arith.subf %0, %12 : vector<32x32xf32>
    %cst_4 = arith.constant 9.99999997E-7 : f32
    %14 = vector.broadcast %cst_4 : f32 to vector<32x1xf32>
    %15 = arith.addf %11, %14 : vector<32x1xf32>
    %16 = math.rsqrt %15 : vector<32x1xf32>
    %17 = vector.broadcast %16 : vector<32x1xf32> to vector<32x32xf32>
    %18 = arith.mulf %13, %17 : vector<32x32xf32>
    %c0_5 = arith.constant 0 : index
    %c0_6 = arith.constant 0 : index
    %19 = vector.load %arg2[%c0_5, %c0_6] : memref<1x32xf32, #tpu.memory_space<vmem>>, vector<1x32xf32>
    %20 = vector.broadcast %19 : vector<1x32xf32> to vector<32x32xf32>
    %21 = arith.mulf %18, %20 : vector<32x32xf32>
    %c0_7 = arith.constant 0 : index
    %c0_8 = arith.constant 0 : index
    %22 = vector.load %arg3[%c0_7, %c0_8] : memref<1x32xf32, #tpu.memory_space<vmem>>, vector<1x32xf32>
    %23 = vector.broadcast %22 : vector<1x32xf32> to vector<32x32xf32>
    %24 = arith.addf %21, %23 : vector<32x32xf32>
    %c0_9 = arith.constant 0 : index
    %c0_10 = arith.constant 0 : index
    %25 = vector.load %arg4[%c0_9, %c0_10] : memref<32x32xf32, #tpu.memory_space<vmem>>, vector<32x32xf32>
    tpu.vector_store %arg4[%c0_9, %c0_10], %24 {strides = array<i32>} : memref<32x32xf32, #tpu.memory_space<vmem>>, vector<32x32xf32>,
    return
  }
  func.func @transform_0(%arg0: i32) -> (i32, i32) {
    %c0_i32 = arith.constant 0 : i32
    %c0_i32_0 = arith.constant 0 : i32
    return %arg0, %c0_i32 : i32, i32
  }
  func.func @transform_1(%arg0: i32) -> (i32, i32) {
    %c0_i32 = arith.constant 0 : i32
    %c0_i32_0 = arith.constant 0 : i32
    %c0_i32_1 = arith.constant 0 : i32
    return %c0_i32, %c0_i32_0 : i32, i32
  }
  func.func @transform_2(%arg0: i32) -> (i32, i32) {
    %c0_i32 = arith.constant 0 : i32
    %c0_i32_0 = arith.constant 0 : i32
    %c0_i32_1 = arith.constant 0 : i32
    return %c0_i32, %c0_i32_0 : i32, i32
  }
  func.func @transform_3(%arg0: i32) -> (i32, i32) {
    %c0_i32 = arith.constant 0 : i32
    %c0_i32_0 = arith.constant 0 : i32
    return %arg0, %c0_i32 : i32, i32
  }
}

</mosaic_0001>

<llo_original>
// kernel: _lambda_.15
$region0: #{_lambda_.15}
  #allocation0 [shape = 'u32[]', space=smem, size = 0x4, offset = 0x4, fixed_abs, tag = 'smem constant byte address 0x4 - core index']
  #allocation1 [shape = 'u32[144,128]{1,0:T(1,128)}', space=vmem, size = 0x12000, scoped, tag = 'internal scratch']
  #allocation2 [shape = 'f32[32,32]{1,0:T(8,128)}', space=vmem, size = 0x4000, scoped, tag = 'scratch operand']
  %s0 = inlined_call_operand.vmem [shape: bf16[32,192], index: 0, kind: input, shape index: {}]
  %s1 = inlined_call_operand.vmem [shape: bf16[192,32], index: 1, kind: input, shape index: {}]
  %s2 = inlined_call_operand.vmem [shape: f32[1,32], index: 2, kind: input, shape index: {}]
  %s3 = inlined_call_operand.vmem [shape: f32[32,32], index: 3, kind: output, shape index: {}]
  %s4 = sld [smem:[#allocation0]]
  $region30: #{_lambda_.15} parent=0
    _
  %s6 = ssub.s32 1, %s4
  %s7 = scalar_select 0, %s6, %s4
  // Predicated region
  $region2: #{_lambda_.15} parent=0 // pred_check
    _
  $region3: #{_lambda_.15} parent=0 // pred_check_branch
    %9 = sbr.rel (0) target = $region5
  $region4: #{_lambda_.15} parent=0 // pred_region
    _
  $region5: #{_lambda_.15} parent=0 // pred_fallthru
    _
  // Predicated region
  $region6: #{_lambda_.15} parent=0 // pred_check
    _
  $region7: #{_lambda_.15} parent=0 // pred_check_branch
    %11 = sbr.rel (0) target = $region9
  $region8: #{_lambda_.15} parent=0 // pred_region
    _
  $region9: #{_lambda_.15} parent=0 // pred_fallthru
    _
  // Predicated region
  $region10: #{_lambda_.15} parent=0 // pred_check
    _
  $region11: #{_lambda_.15} parent=0 // pred_check_branch
    %13 = sbr.rel (0) target = $region13
  $region12: #{_lambda_.15} parent=0 // pred_region
    _
  $region13: #{_lambda_.15} parent=0 // pred_fallthru
    _
  %p15 = scmp.eq.s32.totalorder 0, 0
  // Predicated region
  $region14: #{_lambda_.15} parent=0 // pred_check
    %p16 = pneg %p15
  $region15: #{_lambda_.15} parent=0 // pred_check_branch
    %18 = sbr.rel (%p16) target = $region17
  $region16: #{_lambda_.15} parent=0 // pred_region
    %vm19 = vcmask 261120
    %20 = vst.msk [vmem:[#allocation2] sm:$0xff] %vm19, 0.0
    %21 = vst.msk [vmem:[#allocation2 + $0x8] sm:$0xff] %vm19, 0.0
    %22 = vst.msk [vmem:[#allocation2 + $0x10] sm:$0xff] %vm19, 0.0
    %23 = vst.msk [vmem:[#allocation2 + $0x18] sm:$0xff] %vm19, 0.0
  $region17: #{_lambda_.15} parent=0 // pred_fallthru
    _
  %v24 = vld [vmem:[#allocation2] sm:$0xff]
  %v25 = vld [vmem:[#allocation2 + $0x8] sm:$0xff]
  %v26 = vld [vmem:[#allocation2 + $0x10] sm:$0xff]
  %v27 = vld [vmem:[#allocation2 + $0x18] sm:$0xff]
  %v28 = vld [vmem:[%s0] sm:$0xff]
  %v29 = vld [vmem:[%s0 + $0x8] sm:$0xff]
  %v30 = vld [vmem:[%s0 + $0x10] sm:$0xff]
  %v31 = vld [vmem:[%s0 + $0x18] sm:$0xff]
  %v32 = vld [vmem:[%s1] sm:$0xf]
  %v33 = vld [vmem:[%s1 + $0x4] sm:$0xf]
  %v34 = vld [vmem:[%s1 + $0x8] sm:$0xf]
  %v35 = vld [vmem:[%s1 + $0xc] sm:$0xf]
  %v36 = vld [vmem:[%s1 + $0x10] sm:$0xf]
  %v37 = vld [vmem:[%s1 + $0x14] sm:$0xf]
  %v38 = vld [vmem:[%s1 + $0x18] sm:$0xf]
  %v39 = vld [vmem:[%s1 + $0x1c] sm:$0xf]
  %v40 = vld [vmem:[%s1 + $0x20] sm:$0xf]
  %v41 = vld [vmem:[%s1 + $0x24] sm:$0xf]
  %v42 = vld [vmem:[%s1 + $0x28] sm:$0xf]
  %v43 = vld [vmem:[%s1 + $0x2c] sm:$0xf]
  %v44 = vld [vmem:[%s1 + $0x30] sm:$0xf]
  %v45 = vld [vmem:[%s1 + $0x34] sm:$0xf]
  %v46 = vld [vmem:[%s1 + $0x38] sm:$0xf]
  %v47 = vld [vmem:[%s1 + $0x3c] sm:$0xf]
  %v48 = vld [vmem:[%s1 + $0x40] sm:$0xf]
  %v49 = vld [vmem:[%s1 + $0x44] sm:$0xf]
  %v50 = vld [vmem:[%s1 + $0x48] sm:$0xf]
  %v51 = vld [vmem:[%s1 + $0x4c] sm:$0xf]
  %v52 = vld [vmem:[%s1 + $0x50] sm:$0xf]
  %v53 = vld [vmem:[%s1 + $0x54] sm:$0xf]
  %v54 = vld [vmem:[%s1 + $0x58] sm:$0xf]
  %v55 = vld [vmem:[%s1 + $0x5c] sm:$0xf]
  %v60 = vunpack.c.l.b16 %v28
  %v61 = vunpack.c.h.b16 %v28
  %v62 = vunpack.c.l.b16 %v29
  %v63 = vunpack.c.h.b16 %v29
  %v64 = vunpack.c.l.b16 %v30
  %v65 = vunpack.c.h.b16 %v30
  %v66 = vunpack.c.l.b16 %v31
  %v67 = vunpack.c.h.b16 %v31
  %v68 = vpack.c.b16 %v62, %v60
  %v69 = vpack.c.b16 %v63, %v61
  %v70 = vpack.c.b16 %v66, %v64
  %v71 = vpack.c.b16 %v67, %v65
  %v98 = vunpack.c.l.b16 %v32
  %v99 = vunpack.c.l.b16 %v33
  %v100 = vunpack.c.l.b16 %v34
  %v101 = vunpack.c.l.b16 %v35
  %v102 = vunpack.c.l.b16 %v36
  %v103 = vunpack.c.l.b16 %v37
  %v104 = vunpack.c.l.b16 %v38
  %v105 = vunpack.c.l.b16 %v39
  %v106 = vunpack.c.l.b16 %v40
  %v107 = vunpack.c.l.b16 %v41
  %v108 = vunpack.c.l.b16 %v42
  %v109 = vunpack.c.l.b16 %v43
  %v110 = vunpack.c.l.b16 %v44
  %v111 = vunpack.c.l.b16 %v45
  %v112 = vunpack.c.l.b16 %v46
  %v113 = vunpack.c.l.b16 %v47
  %v114 = vunpack.c.l.b16 %v48
  %v115 = vunpack.c.l.b16 %v49
  %v116 = vunpack.c.l.b16 %v50
  %v117 = vunpack.c.l.b16 %v51
  %v118 = vunpack.c.l.b16 %v52
  %v119 = vunpack.c.l.b16 %v53
  %v120 = vunpack.c.l.b16 %v54
  %v121 = vunpack.c.l.b16 %v55
  %v122 = vpack.c.b16 %v99, %v98
  %v123 = vpack.c.b16 %v101, %v100
  %v124 = vpack.c.b16 %v103, %v102
  %v125 = vpack.c.b16 %v105, %v104
  %v126 = vpack.c.b16 %v107, %v106
  %v127 = vpack.c.b16 %v109, %v108
  %v128 = vpack.c.b16 %v111, %v110
  %v129 = vpack.c.b16 %v113, %v112
  %v130 = vpack.c.b16 %v115, %v114
  %v131 = vpack.c.b16 %v117, %v116
  %v132 = vpack.c.b16 %v119, %v118
  %v133 = vpack.c.b16 %v121, %v120
  %vm146 = vcmask 523264
  %v148 = vsel %vm146, %v69, 0
  %v151 = vsel %vm146, %v71, 0
  %153 = vmatprep.subr.bf16.mxu0 0
  %154 = vmatpush1.bf16.msra.mxu0 %v122
  %155 = vmatprep.subr.bf16.mxu0 0
  %156 = vmatpush1.bf16.msra.mxu0 %v123
  %157 = vmatprep.subr.bf16.mxu0 0
  %158 = vmatpush1.bf16.msra.mxu0 %v124
  %159 = vmatprep.subr.bf16.mxu0 0
  %160 = vmatpush1.bf16.msra.mxu0 %v125
  %161 = vmatprep.subr.bf16.mxu0 0
  %162 = vmatpush1.bf16.msra.mxu0 %v126
  %163 = vmatprep.subr.bf16.mxu0 0
  %164 = vmatpush1.bf16.msra.mxu0 %v127
  %165 = vmatprep.subr.bf16.mxu0 0
  %166 = vmatpush1.bf16.msra.mxu0 %v128
  %167 = vmatprep.subr.bf16.mxu0 0
  %168 = vmatpush1.bf16.msra.mxu0 %v129
  %169 = vmatprep.subr.bf16.mxu0 0
  %170 = vmatpush1.bf16.msra.mxu0 %v130
  %171 = vmatprep.subr.bf16.mxu0 0
  %172 = vmatpush1.bf16.msra.mxu0 %v131
  %173 = vmatprep.subr.bf16.mxu0 0
  %174 = vmatpush1.bf16.msra.mxu0 %v132
  %175 = vmatprep.subr.bf16.mxu0 0
  %176 = vmatpush1.bf16.msra.mxu0 %v133
  %177 = vmatprep.subr.bf16.mxu0 0
  %178 = vmatpush1.bf16.msra.mxu0 0
  %179 = vmatprep.subr.bf16.mxu0 0
  %180 = vmatpush1.bf16.msra.mxu0 0
  %181 = vmatprep.subr.bf16.mxu0 0
  %182 = vmatpush1.bf16.msra.mxu0 0
  %183 = vmatprep.subr.bf16.mxu0 0
  %184 = vmatpush1.bf16.msra.mxu0 0
  %185 = vmatprep.mubr.bf16.mxu0 %v148
  %186 = vmatmul.mubr.bf16.gmra.mrb[0].mxu0 %v68
  %v187 = vpop.f32.mrb[0].mxu0
  %v188 = vadd.f32 0.0, %v187
  %v189 = vpop.f32.mrb[0].mxu0
  %v190 = vpop.f32.mrb[0].mxu0
  %v191 = vadd.f32 0.0, %v190
  %v192 = vpop.f32.mrb[0].mxu0
  %193 = vmatprep.mubr.bf16.mxu0 %v151
  %194 = vmatmul.mubr.bf16.gmra.mrb[0].mxu0 %v70
  %v195 = vpop.f32.mrb[0].mxu0
  %v196 = vadd.f32 0.0, %v195
  %v197 = vpop.f32.mrb[0].mxu0
  %v198 = vpop.f32.mrb[0].mxu0
  %v199 = vadd.f32 0.0, %v198
  %v200 = vpop.f32.mrb[0].mxu0
  %201 = vdwg.mxu0
  %v202 = vadd.f32 %v24, %v188
  %v203 = vadd.f32 %v25, %v191
  %v204 = vadd.f32 %v26, %v196
  %v205 = vadd.f32 %v27, %v199
  %vm206 = vcmask 261120
  %207 = vst.msk [vmem:[#allocation2] sm:$0xff] %vm206, %v202
  %208 = vst.msk [vmem:[#allocation2 + $0x8] sm:$0xff] %vm206, %v203
  %209 = vst.msk [vmem:[#allocation2 + $0x10] sm:$0xff] %vm206, %v204
  %210 = vst.msk [vmem:[#allocation2 + $0x18] sm:$0xff] %vm206, %v205
  // Predicated region
  $region18: #{_lambda_.15} parent=0 // pred_check
    %p211 = pneg %p15
  $region19: #{_lambda_.15} parent=0 // pred_check_branch
    %213 = sbr.rel (%p211) target = $region21
  $region20: #{_lambda_.15} parent=0 // pred_region
    %v214 = vld [vmem:[#allocation2] sm:$0xff]
    %v215 = vld [vmem:[#allocation2 + $0x8] sm:$0xff]
    %v216 = vld [vmem:[#allocation2 + $0x10] sm:$0xff]
    %v217 = vld [vmem:[#allocation2 + $0x18] sm:$0xff]
    %v218 = vld [vmem:[%s2] sm:$0x1]
    %v220 = vlaneseq
    %v221 = vshrl.u32 %v220, 7
    %v222 = vsub.s32 0, %v221
    %v223 = vrot.slane %v218, %v222
    %v225 = vadd.f32 %v214, %v223
    %v226 = vadd.f32 %v215, %v223
    %v227 = vadd.f32 %v216, %v223
    %v228 = vadd.f32 %v217, %v223
    %229 = vst.msk [vmem:[%s3] sm:$0xff] %vm206, %v225
    %230 = vst.msk [vmem:[%s3 + $0x8] sm:$0xff] %vm206, %v226
    %231 = vst.msk [vmem:[%s3 + $0x10] sm:$0xff] %vm206, %v227
    %232 = vst.msk [vmem:[%s3 + $0x18] sm:$0xff] %vm206, %v228
  $region21: #{_lambda_.15} parent=0 // pred_fallthru
    _
  // Predicated region
  $region22: #{_lambda_.15} parent=0 // pred_check
    _
  $region23: #{_lambda_.15} parent=0 // pred_check_branch
    %234 = sbr.rel (0) target = $region25
  $region24: #{_lambda_.15} parent=0 // pred_region
    _
  $region25: #{_lambda_.15} parent=0 // pred_fallthru
    _
  // Predicated region
  $region26: #{_lambda_.15} parent=0 // pred_check
    _
  $region27: #{_lambda_.15} parent=0 // pred_check_branch
    %236 = sbr.rel (0) target = $region29
  $region28: #{_lambda_.15} parent=0 // pred_region
    _
  $region29: #{_lambda_.15} parent=0 // pred_fallthru
    _

// kernel: _lambda_.16
$region0: #{_lambda_.16}
  #allocation0 [shape = 'u32[]', space=smem, size = 0x4, offset = 0x4, fixed_abs, tag = 'smem constant byte address 0x4 - core index']
  #allocation1 [shape = 'u32[144,128]{1,0:T(1,128)}', space=vmem, size = 0x12000, scoped, tag = 'internal scratch']
  %s0 = inlined_call_operand.vmem [shape: f32[32,32], index: 0, kind: input, shape index: {}]
  %s1 = inlined_call_operand.vmem [shape: f32[1,32], index: 1, kind: input, shape index: {}]
  %s2 = inlined_call_operand.vmem [shape: f32[1,32], index: 2, kind: input, shape index: {}]
  %s3 = inlined_call_operand.vmem [shape: bf16[32,96], index: 3, kind: input, shape index: {}]
  %s4 = inlined_call_operand.vmem [shape: f32[1,96], index: 4, kind: input, shape index: {}]
  %s5 = inlined_call_operand.vmem [shape: bf16[32,96], index: 5, kind: output, shape index: {}]
  %s6 = sld [smem:[#allocation0]]
  $region30: #{_lambda_.16} parent=0
    _
  %s8 = ssub.s32 1, %s6
  %s9 = scalar_select 0, %s8, %s6
  // Predicated region
  $region2: #{_lambda_.16} parent=0 // pred_check
    _
  $region3: #{_lambda_.16} parent=0 // pred_check_branch
    %11 = sbr.rel (0) target = $region5
  $region4: #{_lambda_.16} parent=0 // pred_region
    _
  $region5: #{_lambda_.16} parent=0 // pred_fallthru
    _
  // Predicated region
  $region6: #{_lambda_.16} parent=0 // pred_check
    _
  $region7: #{_lambda_.16} parent=0 // pred_check_branch
    %13 = sbr.rel (0) target = $region9
  $region8: #{_lambda_.16} parent=0 // pred_region
    _
  $region9: #{_lambda_.16} parent=0 // pred_fallthru
    _
  // Predicated region
  $region10: #{_lambda_.16} parent=0 // pred_check
    _
  $region11: #{_lambda_.16} parent=0 // pred_check_branch
    %15 = sbr.rel (0) target = $region13
  $region12: #{_lambda_.16} parent=0 // pred_region
    _
  $region13: #{_lambda_.16} parent=0 // pred_fallthru
    _
  // Predicated region
  $region14: #{_lambda_.16} parent=0 // pred_check
    _
  $region15: #{_lambda_.16} parent=0 // pred_check_branch
    %17 = sbr.rel (0) target = $region17
  $region16: #{_lambda_.16} parent=0 // pred_region
    _
  $region17: #{_lambda_.16} parent=0 // pred_fallthru
    _
  // Predicated region
  $region18: #{_lambda_.16} parent=0 // pred_check
    _
  $region19: #{_lambda_.16} parent=0 // pred_check_branch
    %19 = sbr.rel (0) target = $region21
  $region20: #{_lambda_.16} parent=0 // pred_region
    _
  $region21: #{_lambda_.16} parent=0 // pred_fallthru
    _
  %v21 = vld [vmem:[%s0] sm:$0xff]
  %v22 = vld [vmem:[%s0 + $0x8] sm:$0xff]
  %v23 = vld [vmem:[%s0 + $0x10] sm:$0xff]
  %v24 = vld [vmem:[%s0 + $0x18] sm:$0xff]
  %vm25 = vcmask 261120
  %v26 = vsel %vm25, %v21, 0.0
  %27 = vadd.xlane.f32.xlu0 %v26
  %v28 = vpop.xlane.xlu0 %27
  %v29 = vsel %vm25, %v22, 0.0
  %30 = vadd.xlane.f32.xlu0 %v29
  %v31 = vpop.xlane.xlu0 %30
  %v32 = vsel %vm25, %v23, 0.0
  %33 = vadd.xlane.f32.xlu0 %v32
  %v34 = vpop.xlane.xlu0 %33
  %v35 = vsel %vm25, %v24, 0.0
  %36 = vadd.xlane.f32.xlu0 %v35
  %v37 = vpop.xlane.xlu0 %36
  %v38 = vrcp.pop 32.0
  %v39 = vmul.f32 %v28, %v38
  %v40 = vmul.f32 %v31, %v38
  %v41 = vmul.f32 %v34, %v38
  %v42 = vmul.f32 %v37, %v38
  %v43 = vsub.f32 %v21, %v39
  %v44 = vsub.f32 %v22, %v40
  %v45 = vsub.f32 %v23, %v41
  %v46 = vsub.f32 %v24, %v42
  %v47 = vmul.f32 %v43, %v43
  %v48 = vmul.f32 %v44, %v44
  %v49 = vmul.f32 %v45, %v45
  %v50 = vmul.f32 %v46, %v46
  %v51 = vsel %vm25, %v47, 0.0
  %52 = vadd.xlane.f32.xlu0 %v51
  %v53 = vpop.xlane.xlu0 %52
  %v54 = vsel %vm25, %v48, 0.0
  %55 = vadd.xlane.f32.xlu0 %v54
  %v56 = vpop.xlane.xlu0 %55
  %v57 = vsel %vm25, %v49, 0.0
  %58 = vadd.xlane.f32.xlu0 %v57
  %v59 = vpop.xlane.xlu0 %58
  %v60 = vsel %vm25, %v50, 0.0
  %61 = vadd.xlane.f32.xlu0 %v60
  %v62 = vpop.xlane.xlu0 %61
  %v63 = vmul.f32 %v53, %v38
  %v64 = vmul.f32 %v56, %v38
  %v65 = vmul.f32 %v59, %v38
  %v66 = vmul.f32 %v62, %v38
  %v67 = vadd.f32 %v63, 1e-06
  %v68 = vadd.f32 %v64, 1e-06
  %v69 = vadd.f32 %v65, 1e-06
  %v70 = vadd.f32 %v66, 1e-06
  %v71 = vrsqrt.pop %v67
  %v72 = vrsqrt.pop %v68
  %v73 = vrsqrt.pop %v69
  %v74 = vrsqrt.pop %v70
  %v75 = vmul.f32 %v43, %v71
  %v76 = vmul.f32 %v44, %v72
  %v77 = vmul.f32 %v45, %v73
  %v78 = vmul.f32 %v46, %v74
  %v79 = vld [vmem:[%s1] sm:$0x1]
  %v81 = vlaneseq
  %v82 = vshrl.u32 %v81, 7
  %v83 = vsub.s32 0, %v82
  %v84 = vrot.slane %v79, %v83
  %v86 = vmul.f32 %v75, %v84
  %v87 = vmul.f32 %v76, %v84
  %v88 = vmul.f32 %v77, %v84
  %v89 = vmul.f32 %v78, %v84
  %v90 = vld [vmem:[%s2] sm:$0x1]
  %v92 = vlaneseq
  %v93 = vshrl.u32 %v92, 7
  %v94 = vsub.s32 0, %v93
  %v95 = vrot.slane %v90, %v94
  %v97 = vadd.f32 %v86, %v95
  %v98 = vadd.f32 %v87, %v95
  %v99 = vadd.f32 %v88, %v95
  %v100 = vadd.f32 %v89, %v95
  %v101 = vpack.c.bf16 %v98, %v97
  %v102 = vpack.c.bf16 %v100, %v99
  %v103 = vld [vmem:[%s3] sm:$0xf]
  %v104 = vld [vmem:[%s3 + $0x4] sm:$0xf]
  %v105 = vld [vmem:[%s3 + $0x8] sm:$0xf]
  %v106 = vld [vmem:[%s3 + $0xc] sm:$0xf]
  %v107 = vld [vmem:[%s4] sm:$0x1]
  %v109 = vlaneseq
  %v110 = vshrl.u32 %v109, 7
  %v111 = vsub.s32 0, %v110
  %v112 = vrot.slane %v107, %v111
  %v118 = vunpack.c.l.b16 %v103
  %v119 = vunpack.c.l.b16 %v104
  %v120 = vunpack.c.l.b16 %v105
  %v121 = vunpack.c.l.b16 %v106
  %v122 = vpack.c.b16 %v119, %v118
  %v123 = vpack.c.b16 %v121, %v120
  %v127 = vsel %vm25, %v101, 0
  %v130 = vsel %vm25, %v102, 0
  %132 = vmatprep.subr.bf16.mxu0 0
  %133 = vmatpush1.bf16.msra.mxu0 %v122
  %134 = vmatprep.subr.bf16.mxu0 0
  %135 = vmatpush1.bf16.msra.mxu0 %v123
  %136 = vmatprep.subr.bf16.mxu0 0
  %137 = vmatpush1.bf16.msra.mxu0 0
  %138 = vmatprep.subr.bf16.mxu0 0
  %139 = vmatpush1.bf16.msra.mxu0 0
  %140 = vmatprep.subr.bf16.mxu0 0
  %141 = vmatpush1.bf16.msra.mxu0 0
  %142 = vmatprep.subr.bf16.mxu0 0
  %143 = vmatpush1.bf16.msra.mxu0 0
  %144 = vmatprep.subr.bf16.mxu0 0
  %145 = vmatpush1.bf16.msra.mxu0 0
  %146 = vmatprep.subr.bf16.mxu0 0
  %147 = vmatpush1.bf16.msra.mxu0 0
  %148 = vmatprep.subr.bf16.mxu0 0
  %149 = vmatpush1.bf16.msra.mxu0 0
  %150 = vmatprep.subr.bf16.mxu0 0
  %151 = vmatpush1.bf16.msra.mxu0 0
  %152 = vmatprep.subr.bf16.mxu0 0
  %153 = vmatpush1.bf16.msra.mxu0 0
  %154 = vmatprep.subr.bf16.mxu0 0
  %155 = vmatpush1.bf16.msra.mxu0 0
  %156 = vmatprep.subr.bf16.mxu0 0
  %157 = vmatpush1.bf16.msra.mxu0 0
  %158 = vmatprep.subr.bf16.mxu0 0
  %159 = vmatpush1.bf16.msra.mxu0 0
  %160 = vmatprep.subr.bf16.mxu0 0
  %161 = vmatpush1.bf16.msra.mxu0 0
  %162 = vmatprep.subr.bf16.mxu0 0
  %163 = vmatpush1.bf16.msra.mxu0 0
  %164 = vmatprep.mubr.bf16.mxu0 0
  %165 = vmatmul.mubr.bf16.gmra.mrb[0].mxu0 %v127
  %v166 = vpop.f32.mrb[0].mxu0
  %v167 = vadd.f32 %v112, %v166
  %v168 = vpop.f32.mrb[0].mxu0
  %v169 = vpop.f32.mrb[0].mxu0
  %v170 = vadd.f32 %v112, %v169
  %v171 = vpop.f32.mrb[0].mxu0
  %172 = vmatprep.mubr.bf16.mxu0 0
  %173 = vmatmul.mubr.bf16.gmra.mrb[0].mxu0 %v130
  %v174 = vpop.f32.mrb[0].mxu0
  %v175 = vadd.f32 %v112, %v174
  %v176 = vpop.f32.mrb[0].mxu0
  %v177 = vpop.f32.mrb[0].mxu0
  %v178 = vadd.f32 %v112, %v177
  %v179 = vpop.f32.mrb[0].mxu0
  %180 = vdwg.mxu0
  %v181 = vpack.c.bf16 %v170, %v167
  %v182 = vpack.c.bf16 %v178, %v175
  %v185 = vunpack.c.l.b16 %v181
  %v186 = vunpack.c.h.b16 %v181
  %v187 = vunpack.c.l.b16 %v182
  %v188 = vunpack.c.h.b16 %v182
  %v189 = vpack.c.b16 %v185, %v185
  %v190 = vpack.c.b16 %v186, %v186
  %v191 = vpack.c.b16 %v187, %v187
  %v192 = vpack.c.b16 %v188, %v188
  %vm197 = vcmask 781312
  %198 = vst.msk [vmem:[%s5] sm:$0xf] %vm197, %v189
  %199 = vst.msk [vmem:[%s5 + $0x4] sm:$0xf] %vm197, %v190
  %200 = vst.msk [vmem:[%s5 + $0x8] sm:$0xf] %vm197, %v191
  %201 = vst.msk [vmem:[%s5 + $0xc] sm:$0xf] %vm197, %v192
  // Predicated region
  $region22: #{_lambda_.16} parent=0 // pred_check
    _
  $region23: #{_lambda_.16} parent=0 // pred_check_branch
    %203 = sbr.rel (0) target = $region25
  $region24: #{_lambda_.16} parent=0 // pred_region
    _
  $region25: #{_lambda_.16} parent=0 // pred_fallthru
    _
  // Predicated region
  $region26: #{_lambda_.16} parent=0 // pred_check
    _
  $region27: #{_lambda_.16} parent=0 // pred_check_branch
    %205 = sbr.rel (0) target = $region29
  $region28: #{_lambda_.16} parent=0 // pred_region
    _
  $region29: #{_lambda_.16} parent=0 // pred_fallthru
    _

// kernel: _lambda_.19
$region0: #{_lambda_.19}
  #allocation0 [shape = 'u32[]', space=smem, size = 0x4, offset = 0x4, fixed_abs, tag = 'smem constant byte address 0x4 - core index']
  #allocation1 [shape = 'u32[144,128]{1,0:T(1,128)}', space=vmem, size = 0x12000, scoped, tag = 'internal scratch']
  %s0 = inlined_call_operand.vmem [shape: f32[32,32], index: 0, kind: input, shape index: {}]
  %s1 = inlined_call_operand.vmem [shape: f32[1,32], index: 1, kind: input, shape index: {}]
  %s2 = inlined_call_operand.vmem [shape: f32[1,32], index: 2, kind: input, shape index: {}]
  %s3 = inlined_call_operand.vmem [shape: bf16[32,128], index: 3, kind: input, shape index: {}]
  %s4 = inlined_call_operand.vmem [shape: f32[1,128], index: 4, kind: input, shape index: {}]
  %s5 = inlined_call_operand.vmem [shape: bf16[32,128], index: 5, kind: output, shape index: {}]
  %s6 = sld [smem:[#allocation0]]
  $region30: #{_lambda_.19} parent=0
    _
  %s8 = ssub.s32 1, %s6
  %s9 = scalar_select 0, %s8, %s6
  // Predicated region
  $region2: #{_lambda_.19} parent=0 // pred_check
    _
  $region3: #{_lambda_.19} parent=0 // pred_check_branch
    %11 = sbr.rel (0) target = $region5
  $region4: #{_lambda_.19} parent=0 // pred_region
    _
  $region5: #{_lambda_.19} parent=0 // pred_fallthru
    _
  // Predicated region
  $region6: #{_lambda_.19} parent=0 // pred_check
    _
  $region7: #{_lambda_.19} parent=0 // pred_check_branch
    %13 = sbr.rel (0) target = $region9
  $region8: #{_lambda_.19} parent=0 // pred_region
    _
  $region9: #{_lambda_.19} parent=0 // pred_fallthru
    _
  // Predicated region
  $region10: #{_lambda_.19} parent=0 // pred_check
    _
  $region11: #{_lambda_.19} parent=0 // pred_check_branch
    %15 = sbr.rel (0) target = $region13
  $region12: #{_lambda_.19} parent=0 // pred_region
    _
  $region13: #{_lambda_.19} parent=0 // pred_fallthru
    _
  // Predicated region
  $region14: #{_lambda_.19} parent=0 // pred_check
    _
  $region15: #{_lambda_.19} parent=0 // pred_check_branch
    %17 = sbr.rel (0) target = $region17
  $region16: #{_lambda_.19} parent=0 // pred_region
    _
  $region17: #{_lambda_.19} parent=0 // pred_fallthru
    _
  // Predicated region
  $region18: #{_lambda_.19} parent=0 // pred_check
    _
  $region19: #{_lambda_.19} parent=0 // pred_check_branch
    %19 = sbr.rel (0) target = $region21
  $region20: #{_lambda_.19} parent=0 // pred_region
    _
  $region21: #{_lambda_.19} parent=0 // pred_fallthru
    _
  %v21 = vld [vmem:[%s0] sm:$0xff]
  %v22 = vld [vmem:[%s0 + $0x8] sm:$0xff]
  %v23 = vld [vmem:[%s0 + $0x10] sm:$0xff]
  %v24 = vld [vmem:[%s0 + $0x18] sm:$0xff]
  %vm25 = vcmask 261120
  %v26 = vsel %vm25, %v21, 0.0
  %27 = vadd.xlane.f32.xlu0 %v26
  %v28 = vpop.xlane.xlu0 %27
  %v29 = vsel %vm25, %v22, 0.0
  %30 = vadd.xlane.f32.xlu0 %v29
  %v31 = vpop.xlane.xlu0 %30
  %v32 = vsel %vm25, %v23, 0.0
  %33 = vadd.xlane.f32.xlu0 %v32
  %v34 = vpop.xlane.xlu0 %33
  %v35 = vsel %vm25, %v24, 0.0
  %36 = vadd.xlane.f32.xlu0 %v35
  %v37 = vpop.xlane.xlu0 %36
  %v38 = vrcp.pop 32.0
  %v39 = vmul.f32 %v28, %v38
  %v40 = vmul.f32 %v31, %v38
  %v41 = vmul.f32 %v34, %v38
  %v42 = vmul.f32 %v37, %v38
  %v43 = vsub.f32 %v21, %v39
  %v44 = vsub.f32 %v22, %v40
  %v45 = vsub.f32 %v23, %v41
  %v46 = vsub.f32 %v24, %v42
  %v47 = vmul.f32 %v43, %v43
  %v48 = vmul.f32 %v44, %v44
  %v49 = vmul.f32 %v45, %v45
  %v50 = vmul.f32 %v46, %v46
  %v51 = vsel %vm25, %v47, 0.0
  %52 = vadd.xlane.f32.xlu0 %v51
  %v53 = vpop.xlane.xlu0 %52
  %v54 = vsel %vm25, %v48, 0.0
  %55 = vadd.xlane.f32.xlu0 %v54
  %v56 = vpop.xlane.xlu0 %55
  %v57 = vsel %vm25, %v49, 0.0
  %58 = vadd.xlane.f32.xlu0 %v57
  %v59 = vpop.xlane.xlu0 %58
  %v60 = vsel %vm25, %v50, 0.0
  %61 = vadd.xlane.f32.xlu0 %v60
  %v62 = vpop.xlane.xlu0 %61
  %v63 = vmul.f32 %v53, %v38
  %v64 = vmul.f32 %v56, %v38
  %v65 = vmul.f32 %v59, %v38
  %v66 = vmul.f32 %v62, %v38
  %v67 = vadd.f32 %v63, 1e-06
  %v68 = vadd.f32 %v64, 1e-06
  %v69 = vadd.f32 %v65, 1e-06
  %v70 = vadd.f32 %v66, 1e-06
  %v71 = vrsqrt.pop %v67
  %v72 = vrsqrt.pop %v68
  %v73 = vrsqrt.pop %v69
  %v74 = vrsqrt.pop %v70
  %v75 = vmul.f32 %v43, %v71
  %v76 = vmul.f32 %v44, %v72
  %v77 = vmul.f32 %v45, %v73
  %v78 = vmul.f32 %v46, %v74
  %v79 = vld [vmem:[%s1] sm:$0x1]
  %v81 = vlaneseq
  %v82 = vshrl.u32 %v81, 7
  %v83 = vsub.s32 0, %v82
  %v84 = vrot.slane %v79, %v83
  %v86 = vmul.f32 %v75, %v84
  %v87 = vmul.f32 %v76, %v84
  %v88 = vmul.f32 %v77, %v84
  %v89 = vmul.f32 %v78, %v84
  %v90 = vld [vmem:[%s2] sm:$0x1]
  %v92 = vlaneseq
  %v93 = vshrl.u32 %v92, 7
  %v94 = vsub.s32 0, %v93
  %v95 = vrot.slane %v90, %v94
  %v97 = vadd.f32 %v86, %v95
  %v98 = vadd.f32 %v87, %v95
  %v99 = vadd.f32 %v88, %v95
  %v100 = vadd.f32 %v89, %v95
  %v101 = vpack.c.bf16 %v98, %v97
  %v102 = vpack.c.bf16 %v100, %v99
  %v103 = vld [vmem:[%s3] sm:$0xf]
  %v104 = vld [vmem:[%s3 + $0x4] sm:$0xf]
  %v105 = vld [vmem:[%s3 + $0x8] sm:$0xf]
  %v106 = vld [vmem:[%s3 + $0xc] sm:$0xf]
  %v107 = vld [vmem:[%s4] sm:$0x1]
  %v109 = vlaneseq
  %v110 = vshrl.u32 %v109, 7
  %v111 = vsub.s32 0, %v110
  %v112 = vrot.slane %v107, %v111
  %v118 = vunpack.c.l.b16 %v103
  %v119 = vunpack.c.l.b16 %v104
  %v120 = vunpack.c.l.b16 %v105
  %v121 = vunpack.c.l.b16 %v106
  %v122 = vpack.c.b16 %v119, %v118
  %v123 = vpack.c.b16 %v121, %v120
  %v127 = vsel %vm25, %v101, 0
  %v130 = vsel %vm25, %v102, 0
  %132 = vmatprep.subr.bf16.mxu0 0
  %133 = vmatpush1.bf16.msra.mxu0 %v122
  %134 = vmatprep.subr.bf16.mxu0 0
  %135 = vmatpush1.bf16.msra.mxu0 %v123
  %136 = vmatprep.subr.bf16.mxu0 0
  %137 = vmatpush1.bf16.msra.mxu0 0
  %138 = vmatprep.subr.bf16.mxu0 0
  %139 = vmatpush1.bf16.msra.mxu0 0
  %140 = vmatprep.subr.bf16.mxu0 0
  %141 = vmatpush1.bf16.msra.mxu0 0
  %142 = vmatprep.subr.bf16.mxu0 0
  %143 = vmatpush1.bf16.msra.mxu0 0
  %144 = vmatprep.subr.bf16.mxu0 0
  %145 = vmatpush1.bf16.msra.mxu0 0
  %146 = vmatprep.subr.bf16.mxu0 0
  %147 = vmatpush1.bf16.msra.mxu0 0
  %148 = vmatprep.subr.bf16.mxu0 0
  %149 = vmatpush1.bf16.msra.mxu0 0
  %150 = vmatprep.subr.bf16.mxu0 0
  %151 = vmatpush1.bf16.msra.mxu0 0
  %152 = vmatprep.subr.bf16.mxu0 0
  %153 = vmatpush1.bf16.msra.mxu0 0
  %154 = vmatprep.subr.bf16.mxu0 0
  %155 = vmatpush1.bf16.msra.mxu0 0
  %156 = vmatprep.subr.bf16.mxu0 0
  %157 = vmatpush1.bf16.msra.mxu0 0
  %158 = vmatprep.subr.bf16.mxu0 0
  %159 = vmatpush1.bf16.msra.mxu0 0
  %160 = vmatprep.subr.bf16.mxu0 0
  %161 = vmatpush1.bf16.msra.mxu0 0
  %162 = vmatprep.subr.bf16.mxu0 0
  %163 = vmatpush1.bf16.msra.mxu0 0
  %164 = vmatprep.mubr.bf16.mxu0 0
  %165 = vmatmul.mubr.bf16.gmra.mrb[0].mxu0 %v127
  %v166 = vpop.f32.mrb[0].mxu0
  %v167 = vadd.f32 %v112, %v166
  %v168 = vpop.f32.mrb[0].mxu0
  %v169 = vpop.f32.mrb[0].mxu0
  %v170 = vadd.f32 %v112, %v169
  %v171 = vpop.f32.mrb[0].mxu0
  %172 = vmatprep.mubr.bf16.mxu0 0
  %173 = vmatmul.mubr.bf16.gmra.mrb[0].mxu0 %v130
  %v174 = vpop.f32.mrb[0].mxu0
  %v175 = vadd.f32 %v112, %v174
  %v176 = vpop.f32.mrb[0].mxu0
  %v177 = vpop.f32.mrb[0].mxu0
  %v178 = vadd.f32 %v112, %v177
  %v179 = vpop.f32.mrb[0].mxu0
  %180 = vdwg.mxu0
  %v181 = vmul.f32 %v167, 0.5
  %v182 = vmul.f32 %v170, 0.5
  %v183 = vmul.f32 %v175, 0.5
  %v184 = vmul.f32 %v178, 0.5
  %v185 = vmul.f32 %v167, 0.044715
  %v186 = vmul.f32 %v170, 0.044715
  %v187 = vmul.f32 %v175, 0.044715
  %v188 = vmul.f32 %v178, 0.044715
  %v189 = vmul.f32 %v185, %v167
  %v190 = vmul.f32 %v186, %v170
  %v191 = vmul.f32 %v187, %v175
  %v192 = vmul.f32 %v188, %v178
  %v193 = vmul.f32 %v189, %v167
  %v194 = vmul.f32 %v190, %v170
  %v195 = vmul.f32 %v191, %v175
  %v196 = vmul.f32 %v192, %v178
  %v197 = vadd.f32 %v167, %v193
  %v198 = vadd.f32 %v170, %v194
  %v199 = vadd.f32 %v175, %v195
  %v200 = vadd.f32 %v178, %v196
  %v201 = vmul.f32 %v197, 0.7978846
  %v202 = vmul.f32 %v198, 0.7978846
  %v203 = vmul.f32 %v199, 0.7978846
  %v204 = vmul.f32 %v200, 0.7978846
  %v205 = vtanh.pop %v201
  %v206 = vtanh.pop %v202
  %v207 = vtanh.pop %v203
  %v208 = vtanh.pop %v204
  %v209 = vadd.f32 %v205, 1.0
  %v210 = vadd.f32 %v206, 1.0
  %v211 = vadd.f32 %v207, 1.0
  %v212 = vadd.f32 %v208, 1.0
  %v213 = vmul.f32 %v181, %v209
  %v214 = vmul.f32 %v182, %v210
  %v215 = vmul.f32 %v183, %v211
  %v216 = vmul.f32 %v184, %v212
  %v217 = vpack.c.bf16 %v214, %v213
  %v218 = vpack.c.bf16 %v216, %v215
  %v221 = vunpack.c.l.b16 %v217
  %v222 = vunpack.c.h.b16 %v217
  %v223 = vunpack.c.l.b16 %v218
  %v224 = vunpack.c.h.b16 %v218
  %v225 = vpack.c.b16 %v221, %v221
  %v226 = vpack.c.b16 %v222, %v222
  %v227 = vpack.c.b16 %v223, %v223
  %v228 = vpack.c.b16 %v224, %v224
  %233 = vst [vmem:[%s5] sm:$0xf] %v225
  %234 = vst [vmem:[%s5 + $0x4] sm:$0xf] %v226
  %235 = vst [vmem:[%s5 + $0x8] sm:$0xf] %v227
  %236 = vst [vmem:[%s5 + $0xc] sm:$0xf] %v228
  // Predicated region
  $region22: #{_lambda_.19} parent=0 // pred_check
    _
  $region23: #{_lambda_.19} parent=0 // pred_check_branch
    %238 = sbr.rel (0) target = $region25
  $region24: #{_lambda_.19} parent=0 // pred_region
    _
  $region25: #{_lambda_.19} parent=0 // pred_fallthru
    _
  // Predicated region
  $region26: #{_lambda_.19} parent=0 // pred_check
    _
  $region27: #{_lambda_.19} parent=0 // pred_check_branch
    %240 = sbr.rel (0) target = $region29
  $region28: #{_lambda_.19} parent=0 // pred_region
    _
  $region29: #{_lambda_.19} parent=0 // pred_fallthru
    _

// kernel: _lambda_.18
$region0: #{_lambda_.18}
  #allocation0 [shape = 'u32[]', space=smem, size = 0x4, offset = 0x4, fixed_abs, tag = 'smem constant byte address 0x4 - core index']
  #allocation1 [shape = 'u32[144,128]{1,0:T(1,128)}', space=vmem, size = 0x12000, scoped, tag = 'internal scratch']
  #allocation2 [shape = 'f32[32,32]{1,0:T(8,128)}', space=vmem, size = 0x4000, scoped, tag = 'scratch operand']
  %s0 = inlined_call_operand.vmem [shape: bf16[32,32], index: 0, kind: input, shape index: {}]
  %s1 = inlined_call_operand.vmem [shape: bf16[32,32], index: 1, kind: input, shape index: {}]
  %s2 = inlined_call_operand.vmem [shape: f32[1,32], index: 2, kind: input, shape index: {}]
  %s3 = inlined_call_operand.vmem [shape: f32[32,32], index: 3, kind: output, shape index: {}]
  %s4 = sld [smem:[#allocation0]]
  $region30: #{_lambda_.18} parent=0
    _
  %s6 = ssub.s32 1, %s4
  %s7 = scalar_select 0, %s6, %s4
  // Predicated region
  $region2: #{_lambda_.18} parent=0 // pred_check
    _
  $region3: #{_lambda_.18} parent=0 // pred_check_branch
    %9 = sbr.rel (0) target = $region5
  $region4: #{_lambda_.18} parent=0 // pred_region
    _
  $region5: #{_lambda_.18} parent=0 // pred_fallthru
    _
  // Predicated region
  $region6: #{_lambda_.18} parent=0 // pred_check
    _
  $region7: #{_lambda_.18} parent=0 // pred_check_branch
    %11 = sbr.rel (0) target = $region9
  $region8: #{_lambda_.18} parent=0 // pred_region
    _
  $region9: #{_lambda_.18} parent=0 // pred_fallthru
    _
  // Predicated region
  $region10: #{_lambda_.18} parent=0 // pred_check
    _
  $region11: #{_lambda_.18} parent=0 // pred_check_branch
    %13 = sbr.rel (0) target = $region13
  $region12: #{_lambda_.18} parent=0 // pred_region
    _
  $region13: #{_lambda_.18} parent=0 // pred_fallthru
    _
  %p15 = scmp.eq.s32.totalorder 0, 0
  // Predicated region
  $region14: #{_lambda_.18} parent=0 // pred_check
    %p16 = pneg %p15
  $region15: #{_lambda_.18} parent=0 // pred_check_branch
    %18 = sbr.rel (%p16) target = $region17
  $region16: #{_lambda_.18} parent=0 // pred_region
    %vm19 = vcmask 261120
    %20 = vst.msk [vmem:[#allocation2] sm:$0xff] %vm19, 0.0
    %21 = vst.msk [vmem:[#allocation2 + $0x8] sm:$0xff] %vm19, 0.0
    %22 = vst.msk [vmem:[#allocation2 + $0x10] sm:$0xff] %vm19, 0.0
    %23 = vst.msk [vmem:[#allocation2 + $0x18] sm:$0xff] %vm19, 0.0
  $region17: #{_lambda_.18} parent=0 // pred_fallthru
    _
  %v24 = vld [vmem:[#allocation2] sm:$0xff]
  %v25 = vld [vmem:[#allocation2 + $0x8] sm:$0xff]
  %v26 = vld [vmem:[#allocation2 + $0x10] sm:$0xff]
  %v27 = vld [vmem:[#allocation2 + $0x18] sm:$0xff]
  %v28 = vld [vmem:[%s0] sm:$0xf]
  %v29 = vld [vmem:[%s0 + $0x4] sm:$0xf]
  %v30 = vld [vmem:[%s0 + $0x8] sm:$0xf]
  %v31 = vld [vmem:[%s0 + $0xc] sm:$0xf]
  %v32 = vld [vmem:[%s1] sm:$0xf]
  %v33 = vld [vmem:[%s1 + $0x4] sm:$0xf]
  %v34 = vld [vmem:[%s1 + $0x8] sm:$0xf]
  %v35 = vld [vmem:[%s1 + $0xc] sm:$0xf]
  %v40 = vunpack.c.l.b16 %v28
  %v41 = vunpack.c.l.b16 %v29
  %v42 = vunpack.c.l.b16 %v30
  %v43 = vunpack.c.l.b16 %v31
  %v44 = vpack.c.b16 %v41, %v40
  %v45 = vpack.c.b16 %v43, %v42
  %v50 = vunpack.c.l.b16 %v32
  %v51 = vunpack.c.l.b16 %v33
  %v52 = vunpack.c.l.b16 %v34
  %v53 = vunpack.c.l.b16 %v35
  %v54 = vpack.c.b16 %v51, %v50
  %v55 = vpack.c.b16 %v53, %v52
  %vm58 = vcmask 261120
  %v60 = vsel %vm58, %v44, 0
  %v63 = vsel %vm58, %v45, 0
  %65 = vmatprep.subr.bf16.mxu0 0
  %66 = vmatpush1.bf16.msra.mxu0 %v54
  %67 = vmatprep.subr.bf16.mxu0 0
  %68 = vmatpush1.bf16.msra.mxu0 %v55
  %69 = vmatprep.subr.bf16.mxu0 0
  %70 = vmatpush1.bf16.msra.mxu0 0
  %71 = vmatprep.subr.bf16.mxu0 0
  %72 = vmatpush1.bf16.msra.mxu0 0
  %73 = vmatprep.subr.bf16.mxu0 0
  %74 = vmatpush1.bf16.msra.mxu0 0
  %75 = vmatprep.subr.bf16.mxu0 0
  %76 = vmatpush1.bf16.msra.mxu0 0
  %77 = vmatprep.subr.bf16.mxu0 0
  %78 = vmatpush1.bf16.msra.mxu0 0
  %79 = vmatprep.subr.bf16.mxu0 0
  %80 = vmatpush1.bf16.msra.mxu0 0
  %81 = vmatprep.subr.bf16.mxu0 0
  %82 = vmatpush1.bf16.msra.mxu0 0
  %83 = vmatprep.subr.bf16.mxu0 0
  %84 = vmatpush1.bf16.msra.mxu0 0
  %85 = vmatprep.subr.bf16.mxu0 0
  %86 = vmatpush1.bf16.msra.mxu0 0
  %87 = vmatprep.subr.bf16.mxu0 0
  %88 = vmatpush1.bf16.msra.mxu0 0
  %89 = vmatprep.subr.bf16.mxu0 0
  %90 = vmatpush1.bf16.msra.mxu0 0
  %91 = vmatprep.subr.bf16.mxu0 0
  %92 = vmatpush1.bf16.msra.mxu0 0
  %93 = vmatprep.subr.bf16.mxu0 0
  %94 = vmatpush1.bf16.msra.mxu0 0
  %95 = vmatprep.subr.bf16.mxu0 0
  %96 = vmatpush1.bf16.msra.mxu0 0
  %97 = vmatprep.mubr.bf16.mxu0 0
  %98 = vmatmul.mubr.bf16.gmra.mrb[0].mxu0 %v60
  %v99 = vpop.f32.mrb[0].mxu0
  %v100 = vadd.f32 0.0, %v99
  %v101 = vpop.f32.mrb[0].mxu0
  %v102 = vpop.f32.mrb[0].mxu0
  %v103 = vadd.f32 0.0, %v102
  %v104 = vpop.f32.mrb[0].mxu0
  %105 = vmatprep.mubr.bf16.mxu0 0
  %106 = vmatmul.mubr.bf16.gmra.mrb[0].mxu0 %v63
  %v107 = vpop.f32.mrb[0].mxu0
  %v108 = vadd.f32 0.0, %v107
  %v109 = vpop.f32.mrb[0].mxu0
  %v110 = vpop.f32.mrb[0].mxu0
  %v111 = vadd.f32 0.0, %v110
  %v112 = vpop.f32.mrb[0].mxu0
  %113 = vdwg.mxu0
  %v114 = vadd.f32 %v24, %v100
  %v115 = vadd.f32 %v25, %v103
  %v116 = vadd.f32 %v26, %v108
  %v117 = vadd.f32 %v27, %v111
  %118 = vst.msk [vmem:[#allocation2] sm:$0xff] %vm58, %v114
  %119 = vst.msk [vmem:[#allocation2 + $0x8] sm:$0xff] %vm58, %v115
  %120 = vst.msk [vmem:[#allocation2 + $0x10] sm:$0xff] %vm58, %v116
  %121 = vst.msk [vmem:[#allocation2 + $0x18] sm:$0xff] %vm58, %v117
  // Predicated region
  $region18: #{_lambda_.18} parent=0 // pred_check
    %p122 = pneg %p15
  $region19: #{_lambda_.18} parent=0 // pred_check_branch
    %124 = sbr.rel (%p122) target = $region21
  $region20: #{_lambda_.18} parent=0 // pred_region
    %v125 = vld [vmem:[#allocation2] sm:$0xff]
    %v126 = vld [vmem:[#allocation2 + $0x8] sm:$0xff]
    %v127 = vld [vmem:[#allocation2 + $0x10] sm:$0xff]
    %v128 = vld [vmem:[#allocation2 + $0x18] sm:$0xff]
    %v129 = vld [vmem:[%s2] sm:$0x1]
    %v131 = vlaneseq
    %v132 = vshrl.u32 %v131, 7
    %v133 = vsub.s32 0, %v132
    %v134 = vrot.slane %v129, %v133
    %v136 = vadd.f32 %v125, %v134
    %v137 = vadd.f32 %v126, %v134
    %v138 = vadd.f32 %v127, %v134
    %v139 = vadd.f32 %v128, %v134
    %140 = vst.msk [vmem:[%s3] sm:$0xff] %vm58, %v136
    %141 = vst.msk [vmem:[%s3 + $0x8] sm:$0xff] %vm58, %v137
    %142 = vst.msk [vmem:[%s3 + $0x10] sm:$0xff] %vm58, %v138
    %143 = vst.msk [vmem:[%s3 + $0x18] sm:$0xff] %vm58, %v139
  $region21: #{_lambda_.18} parent=0 // pred_fallthru
    _
  // Predicated region
  $region22: #{_lambda_.18} parent=0 // pred_check
    _
  $region23: #{_lambda_.18} parent=0 // pred_check_branch
    %145 = sbr.rel (0) target = $region25
  $region24: #{_lambda_.18} parent=0 // pred_region
    _
  $region25: #{_lambda_.18} parent=0 // pred_fallthru
    _
  // Predicated region
  $region26: #{_lambda_.18} parent=0 // pred_check
    _
  $region27: #{_lambda_.18} parent=0 // pred_check_branch
    %147 = sbr.rel (0) target = $region29
  $region28: #{_lambda_.18} parent=0 // pred_region
    _
  $region29: #{_lambda_.18} parent=0 // pred_fallthru
    _

// kernel: _lambda_.17
$region0: #{_lambda_.17}
  #allocation0 [shape = 'u32[]', space=smem, size = 0x4, offset = 0x4, fixed_abs, tag = 'smem constant byte address 0x4 - core index']
  #allocation1 [shape = 'u32[144,128]{1,0:T(1,128)}', space=vmem, size = 0x12000, scoped, tag = 'internal scratch']
  %s0 = inlined_call_operand.vmem [shape: bf16[8,4,4,8], index: 0, kind: input, shape index: {}]
  %s1 = inlined_call_operand.vmem [shape: bf16[8,4,4,8], index: 1, kind: input, shape index: {}]
  %s2 = inlined_call_operand.vmem [shape: bf16[8,4,4,8], index: 2, kind: input, shape index: {}]
  %s3 = inlined_call_operand.vmem [shape: bf16[8,4,4,8], index: 3, kind: output, shape index: {}]
  %s4 = sld [smem:[#allocation0]]
  $region45: #{_lambda_.17} parent=0
    _
  %s6 = ssub.s32 1, %s4
  %s7 = scalar_select 0, %s6, %s4
  loop: start=0, step=1, limit=10
  $region2: #{_lambda_.17} parent=0 // loop_pre_header
    _
  $region3: #{_lambda_.17} parent=0 // loop_header
    %s9 = sphi 0, %s13
    %p10 = scmp.ge.s32.totalorder %s9, 10
    %s19 = sphi 0, %s21
    %s22 = sphi 0, %s19
    %s23 = sphi 0, %s22
    %s39 = sphi 0, %s23
    %s45 = sphi 0, %s47
    %s48 = sphi 0, %s45
    %s49 = sphi 0, %s48
    %s65 = sphi 0, %s49
    %s71 = sphi 0, %s73
    %s74 = sphi 0, %s71
    %s75 = sphi 0, %s74
    %s91 = sphi 0, %s75
    %s97 = sphi 0, %s99
    %s100 = sphi 0, %s97
    %s101 = sphi 0, %s100
    %s117 = sphi 0, %s101
  $region4: #{_lambda_.17} parent=0 // loop_header_branch
    %12 = sbr.rel (%p10) target = $region8
  $region5: #{_lambda_.17} parent=0 // loop_body
    %s14 = ssub.s32 %s9, 1
    %s15 = ssub.s32 %s9, 2
    %s16 = sadd.s32 %s9, 1
    %s17 = ssub.s32 %s9, %s16
    %p18 = scmp.eq.s32.totalorder %s17, 0
    %s20 = sadd.s32 %s19, 1
    %s21 = scalar_select %p18, %s19, %s20
    %p24 = pneg %p18
    %p25 = scmp.eq.s32.totalorder %s9, 7
    %p26 = por %p24, %p25
    %p27 = scmp.ne.s32.totalorder %s19, %s22
    %p28 = scmp.eq.s32.totalorder %s9, 0
    %p29 = por %p27, %p28
    %p30 = scmp.ne.s32.totalorder %s19, %s22
    %p31 = scmp.eq.s32.totalorder %s14, 7
    %p32 = por %p30, %p31
    %p33 = scmp.ne.s32.totalorder %s22, %s23
    %p34 = scmp.eq.s32.totalorder %s14, 0
    %p35 = por %p33, %p34
    %p36 = scmp.ne.s32.totalorder %s22, %s23
    %p37 = scmp.eq.s32.totalorder %s15, 7
    %p38 = por %p36, %p37
    %p40 = scmp.ne.s32.totalorder %s23, %s39
    %p41 = scmp.eq.s32.totalorder %s15, 0
    %p42 = por %p40, %p41
    %s43 = ssub.s32 %s9, %s16
    %p44 = scmp.eq.s32.totalorder %s43, 0
    %s46 = sadd.s32 %s45, 1
    %s47 = scalar_select %p44, %s45, %s46
    %p50 = pneg %p44
    %p51 = scmp.eq.s32.totalorder %s9, 7
    %p52 = por %p50, %p51
    %p53 = scmp.ne.s32.totalorder %s45, %s48
    %p54 = scmp.eq.s32.totalorder %s9, 0
    %p55 = por %p53, %p54
    %p56 = scmp.ne.s32.totalorder %s45, %s48
    %p57 = scmp.eq.s32.totalorder %s14, 7
    %p58 = por %p56, %p57
    %p59 = scmp.ne.s32.totalorder %s48, %s49
    %p60 = scmp.eq.s32.totalorder %s14, 0
    %p61 = por %p59, %p60
    %p62 = scmp.ne.s32.totalorder %s48, %s49
    %p63 = scmp.eq.s32.totalorder %s15, 7
    %p64 = por %p62, %p63
    %p66 = scmp.ne.s32.totalorder %s49, %s65
    %p67 = scmp.eq.s32.totalorder %s15, 0
    %p68 = por %p66, %p67
    %s69 = ssub.s32 %s9, %s16
    %p70 = scmp.eq.s32.totalorder %s69, 0
    %s72 = sadd.s32 %s71, 1
    %s73 = scalar_select %p70, %s71, %s72
    %p76 = pneg %p70
    %p77 = scmp.eq.s32.totalorder %s9, 7
    %p78 = por %p76, %p77
    %p79 = scmp.ne.s32.totalorder %s71, %s74
    %p80 = scmp.eq.s32.totalorder %s9, 0
    %p81 = por %p79, %p80
    %p82 = scmp.ne.s32.totalorder %s71, %s74
    %p83 = scmp.eq.s32.totalorder %s14, 7
    %p84 = por %p82, %p83
    %p85 = scmp.ne.s32.totalorder %s74, %s75
    %p86 = scmp.eq.s32.totalorder %s14, 0
    %p87 = por %p85, %p86
    %p88 = scmp.ne.s32.totalorder %s74, %s75
    %p89 = scmp.eq.s32.totalorder %s15, 7
    %p90 = por %p88, %p89
    %p92 = scmp.ne.s32.totalorder %s75, %s91
    %p93 = scmp.eq.s32.totalorder %s15, 0
    %p94 = por %p92, %p93
    %s95 = ssub.s32 %s9, %s16
    %p96 = scmp.eq.s32.totalorder %s95, 0
    %s98 = sadd.s32 %s97, 1
    %s99 = scalar_select %p96, %s97, %s98
    %p102 = pneg %p96
    %p103 = scmp.eq.s32.totalorder %s9, 7
    %p104 = por %p102, %p103
    %p105 = scmp.ne.s32.totalorder %s97, %s100
    %p106 = scmp.eq.s32.totalorder %s9, 0
    %p107 = por %p105, %p106
    %p108 = scmp.ne.s32.totalorder %s97, %s100
    %p109 = scmp.eq.s32.totalorder %s14, 7
    %p110 = por %p108, %p109
    %p111 = scmp.ne.s32.totalorder %s100, %s101
    %p112 = scmp.eq.s32.totalorder %s14, 0
    %p113 = por %p111, %p112
    %p114 = scmp.ne.s32.totalorder %s100, %s101
    %p115 = scmp.eq.s32.totalorder %s15, 7
    %p116 = por %p114, %p115
    %p118 = scmp.ne.s32.totalorder %s101, %s117
    %p119 = scmp.eq.s32.totalorder %s15, 0
    %p120 = por %p118, %p119
    %p121 = scmp.le.s32.totalorder 1, %s9
    %p122 = scmp.lt.s32.totalorder %s9, 9
    %p123 = pnand %p121, %p122
    %p124 = pneg %p123
    // Predicated region
    $region9: #{_lambda_.17} parent=5 // pred_check
      _
    $region10: #{_lambda_.17} parent=5 // pred_check_branch
      %126 = sbr.rel (%p123) target = $region12
    $region11: #{_lambda_.17} parent=5 // pred_region
      %s127 = ssub.s32 %s9, 1
    $region12: #{_lambda_.17} parent=5 // pred_fallthru
      _
    %p128 = scmp.lt.s32.totalorder %s9, 8
    // Predicated region
    $region13: #{_lambda_.17} parent=5 // pred_check
      %p129 = pneg %p128
    $region14: #{_lambda_.17} parent=5 // pred_check_branch
      %131 = sbr.rel (%p129) target = $region16
    $region15: #{_lambda_.17} parent=5 // pred_region
      // Predicated region
      $region17: #{_lambda_.17} parent=15 // pred_check
        %p132 = pneg %p29
      $region18: #{_lambda_.17} parent=15 // pred_check_branch
        %134 = sbr.rel (%p132) target = $region20
      $region19: #{_lambda_.17} parent=15 // pred_region
        %p135 = scmp.lt.s32.totalorder %s9, 7
        %s136 = scalar_select %p135, %s9, 7
        %s137 = smul.addr %s136, 4
        %s138 = smul.addr %s137, 2
        %s139 = scalar_lea.vmem %s0, %s138
      $region20: #{_lambda_.17} parent=15 // pred_fallthru
        _
      // Predicated region
      $region21: #{_lambda_.17} parent=15 // pred_check
        %p140 = pneg %p55
      $region22: #{_lambda_.17} parent=15 // pred_check_branch
        %142 = sbr.rel (%p140) target = $region24
      $region23: #{_lambda_.17} parent=15 // pred_region
        %p143 = scmp.lt.s32.totalorder %s9, 7
        %s144 = scalar_select %p143, %s9, 7
        %s145 = smul.addr %s144, 4
        %s146 = smul.addr %s145, 2
        %s147 = scalar_lea.vmem %s1, %s146
      $region24: #{_lambda_.17} parent=15 // pred_fallthru
        _
      // Predicated region
      $region25: #{_lambda_.17} parent=15 // pred_check
        %p148 = pneg %p81
      $region26: #{_lambda_.17} parent=15 // pred_check_branch
        %150 = sbr.rel (%p148) target = $region28
      $region27: #{_lambda_.17} parent=15 // pred_region
        %p151 = scmp.lt.s32.totalorder %s9, 7
        %s152 = scalar_select %p151, %s9, 7
        %s153 = smul.addr %s152, 4
        %s154 = smul.addr %s153, 2
        %s155 = scalar_lea.vmem %s2, %s154
      $region28: #{_lambda_.17} parent=15 // pred_fallthru
        _
    $region16: #{_lambda_.17} parent=5 // pred_fallthru
      _
    %p156 = scmp.le.s32.totalorder 1, %s9
    %p157 = scmp.lt.s32.totalorder %s9, 9
    %p158 = pnand %p156, %p157
    %p159 = pneg %p158
    // Predicated region
    $region29: #{_lambda_.17} parent=5 // pred_check
      _
    $region30: #{_lambda_.17} parent=5 // pred_check_branch
      %161 = sbr.rel (%p158) target = $region32
    $region31: #{_lambda_.17} parent=5 // pred_region
      %s162 = ssub.s32 %s9, 1
      %p163 = scmp.lt.s32.totalorder %s14, 7
      %s164 = scalar_select %p163, %s14, 7
      %s165 = smul.addr %s164, 4
      %s166 = smul.addr %s165, 2
      %s167 = scalar_lea.vmem %s0, %s166
      %p168 = pneg %p35
      %p169 = pneg %p32
      %p170 = scmp.lt.s32.totalorder %s14, 7
      %s171 = scalar_select %p170, %s14, 7
      %s172 = smul.addr %s171, 4
      %s173 = smul.addr %s172, 2
      %s174 = scalar_lea.vmem %s1, %s173
      %p175 = pneg %p61
      %p176 = pneg %p58
      %p177 = scmp.lt.s32.totalorder %s14, 7
      %s178 = scalar_select %p177, %s14, 7
      %s179 = smul.addr %s178, 4
      %s180 = smul.addr %s179, 2
      %s181 = scalar_lea.vmem %s2, %s180
      %p182 = pneg %p87
      %p183 = pneg %p84
      %p184 = pneg %p113
      %p185 = pneg %p110
      %p186 = scmp.lt.s32.totalorder %s14, 7
      %s187 = scalar_select %p186, %s14, 7
      %s188 = smul.addr %s187, 4
      %s189 = smul.addr %s188, 2
      %s190 = scalar_lea.vmem %s3, %s189
      %p191 = scmp.lt.s32.totalorder %s14, 7
      %s192 = scalar_select %p191, %s14, 7
      %s193 = smul.addr %s192, 4
      %s194 = smul.addr %s193, 2
      %s195 = scalar_lea.vmem %s0, %s194
      %p196 = scmp.lt.s32.totalorder %s14, 7
      %s197 = scalar_select %p196, %s14, 7
      %s198 = smul.addr %s197, 4
      %s199 = smul.addr %s198, 2
      %s200 = scalar_lea.vmem %s1, %s199
      %p201 = scmp.lt.s32.totalorder %s14, 7
      %s202 = scalar_select %p201, %s14, 7
      %s203 = smul.addr %s202, 4
      %s204 = smul.addr %s203, 2
      %s205 = scalar_lea.vmem %s2, %s204
      %p206 = scmp.lt.s32.totalorder %s14, 7
      %s207 = scalar_select %p206, %s14, 7
      %s208 = smul.addr %s207, 4
      %s209 = smul.addr %s208, 2
      %s210 = scalar_lea.vmem %s3, %s209
      %v212 = vld [vmem:[%s195] sm:$0x3]
      %v213 = vld [vmem:[%s195 + $0x2] sm:$0x3]
      %v214 = vld [vmem:[%s195 + $0x4] sm:$0x3]
      %v215 = vld [vmem:[%s195 + $0x6] sm:$0x3]
      %v216 = vld [vmem:[%s200] sm:$0x3]
      %v217 = vld [vmem:[%s200 + $0x2] sm:$0x3]
      %v218 = vld [vmem:[%s200 + $0x4] sm:$0x3]
      %v219 = vld [vmem:[%s200 + $0x6] sm:$0x3]
      %v220 = vld [vmem:[%s205] sm:$0x3]
      %v221 = vld [vmem:[%s205 + $0x2] sm:$0x3]
      %v222 = vld [vmem:[%s205 + $0x4] sm:$0x3]
      %v223 = vld [vmem:[%s205 + $0x6] sm:$0x3]
      %vm224 = vcmask 64512
      %v226 = vsel %vm224, %v212, 0
      %v229 = vsel %vm224, %v216, 0
      %231 = vmatprep.subr.bf16.mxu0 0
      %232 = vmatpush1.bf16.xpose.msra.mxu0 %v229
      %233 = vmatprep.subr.bf16.mxu0 0
      %234 = vmatpush1.bf16.xpose.msra.mxu0 0
      %235 = vmatprep.subr.bf16.mxu0 0
      %236 = vmatpush1.bf16.xpose.msra.mxu0 0
      %237 = vmatprep.subr.bf16.mxu0 0
      %238 = vmatpush1.bf16.xpose.msra.mxu0 0
      %239 = vmatprep.subr.bf16.mxu0 0
      %240 = vmatpush1.bf16.xpose.msra.mxu0 0
      %241 = vmatprep.subr.bf16.mxu0 0
      %242 = vmatpush1.bf16.xpose.msra.mxu0 0
      %243 = vmatprep.subr.bf16.mxu0 0
      %244 = vmatpush1.bf16.xpose.msra.mxu0 0
      %245 = vmatprep.subr.bf16.mxu0 0
      %246 = vmatpush1.bf16.xpose.msra.mxu0 0
      %247 = vmatprep.subr.bf16.mxu0 0
      %248 = vmatpush1.bf16.xpose.msra.mxu0 0
      %249 = vmatprep.subr.bf16.mxu0 0
      %250 = vmatpush1.bf16.xpose.msra.mxu0 0
      %251 = vmatprep.subr.bf16.mxu0 0
      %252 = vmatpush1.bf16.xpose.msra.mxu0 0
      %253 = vmatprep.subr.bf16.mxu0 0
      %254 = vmatpush1.bf16.xpose.msra.mxu0 0
      %255 = vmatprep.subr.bf16.mxu0 0
      %256 = vmatpush1.bf16.xpose.msra.mxu0 0
      %257 = vmatprep.subr.bf16.mxu0 0
      %258 = vmatpush1.bf16.xpose.msra.mxu0 0
      %259 = vmatprep.subr.bf16.mxu0 0
      %260 = vmatpush1.bf16.xpose.msra.mxu0 0
      %261 = vmatprep.subr.bf16.mxu0 0
      %262 = vmatpush1.bf16.xpose.msra.mxu0 0
      %263 = vmatprep.mubr.bf16.mxu0 0
      %264 = vmatmul.mubr.bf16.gmra.mrb[0].mxu0 %v226
      %v265 = vpop.f32.mrb[0].mxu0
      %v266 = vadd.f32 0.0, %v265
      %v267 = vpop.f32.mrb[0].mxu0
      %v268 = vpop.f32.mrb[0].mxu0
      %v269 = vpop.f32.mrb[0].mxu0
      %270 = vdwg.mxu0
      %v272 = vsel %vm224, %v213, 0
      %v275 = vsel %vm224, %v217, 0
      %277 = vmatprep.subr.bf16.mxu0 0
      %278 = vmatpush1.bf16.xpose.msra.mxu0 %v275
      %279 = vmatprep.subr.bf16.mxu0 0
      %280 = vmatpush1.bf16.xpose.msra.mxu0 0
      %281 = vmatprep.subr.bf16.mxu0 0
      %282 = vmatpush1.bf16.xpose.msra.mxu0 0
      %283 = vmatprep.subr.bf16.mxu0 0
      %284 = vmatpush1.bf16.xpose.msra.mxu0 0
      %285 = vmatprep.subr.bf16.mxu0 0
      %286 = vmatpush1.bf16.xpose.msra.mxu0 0
      %287 = vmatprep.subr.bf16.mxu0 0
      %288 = vmatpush1.bf16.xpose.msra.mxu0 0
      %289 = vmatprep.subr.bf16.mxu0 0
      %290 = vmatpush1.bf16.xpose.msra.mxu0 0
      %291 = vmatprep.subr.bf16.mxu0 0
      %292 = vmatpush1.bf16.xpose.msra.mxu0 0
      %293 = vmatprep.subr.bf16.mxu0 0
      %294 = vmatpush1.bf16.xpose.msra.mxu0 0
      %295 = vmatprep.subr.bf16.mxu0 0
      %296 = vmatpush1.bf16.xpose.msra.mxu0 0
      %297 = vmatprep.subr.bf16.mxu0 0
      %298 = vmatpush1.bf16.xpose.msra.mxu0 0
      %299 = vmatprep.subr.bf16.mxu0 0
      %300 = vmatpush1.bf16.xpose.msra.mxu0 0
      %301 = vmatprep.subr.bf16.mxu0 0
      %302 = vmatpush1.bf16.xpose.msra.mxu0 0
      %303 = vmatprep.subr.bf16.mxu0 0
      %304 = vmatpush1.bf16.xpose.msra.mxu0 0
      %305 = vmatprep.subr.bf16.mxu0 0
      %306 = vmatpush1.bf16.xpose.msra.mxu0 0
      %307 = vmatprep.subr.bf16.mxu0 0
      %308 = vmatpush1.bf16.xpose.msra.mxu0 0
      %309 = vmatprep.mubr.bf16.mxu0 0
      %310 = vmatmul.mubr.bf16.gmra.mrb[0].mxu0 %v272
      %v311 = vpop.f32.mrb[0].mxu0
      %v312 = vadd.f32 0.0, %v311
      %v313 = vpop.f32.mrb[0].mxu0
      %v314 = vpop.f32.mrb[0].mxu0
      %v315 = vpop.f32.mrb[0].mxu0
      %316 = vdwg.mxu0
      %v318 = vsel %vm224, %v214, 0
      %v321 = vsel %vm224, %v218, 0
      %323 = vmatprep.subr.bf16.mxu0 0
      %324 = vmatpush1.bf16.xpose.msra.mxu0 %v321
      %325 = vmatprep.subr.bf16.mxu0 0
      %326 = vmatpush1.bf16.xpose.msra.mxu0 0
      %327 = vmatprep.subr.bf16.mxu0 0
      %328 = vmatpush1.bf16.xpose.msra.mxu0 0
      %329 = vmatprep.subr.bf16.mxu0 0
      %330 = vmatpush1.bf16.xpose.msra.mxu0 0
      %331 = vmatprep.subr.bf16.mxu0 0
      %332 = vmatpush1.bf16.xpose.msra.mxu0 0
      %333 = vmatprep.subr.bf16.mxu0 0
      %334 = vmatpush1.bf16.xpose.msra.mxu0 0
      %335 = vmatprep.subr.bf16.mxu0 0
      %336 = vmatpush1.bf16.xpose.msra.mxu0 0
      %337 = vmatprep.subr.bf16.mxu0 0
      %338 = vmatpush1.bf16.xpose.msra.mxu0 0
      %339 = vmatprep.subr.bf16.mxu0 0
      %340 = vmatpush1.bf16.xpose.msra.mxu0 0
      %341 = vmatprep.subr.bf16.mxu0 0
      %342 = vmatpush1.bf16.xpose.msra.mxu0 0
      %343 = vmatprep.subr.bf16.mxu0 0
      %344 = vmatpush1.bf16.xpose.msra.mxu0 0
      %345 = vmatprep.subr.bf16.mxu0 0
      %346 = vmatpush1.bf16.xpose.msra.mxu0 0
      %347 = vmatprep.subr.bf16.mxu0 0
      %348 = vmatpush1.bf16.xpose.msra.mxu0 0
      %349 = vmatprep.subr.bf16.mxu0 0
      %350 = vmatpush1.bf16.xpose.msra.mxu0 0
      %351 = vmatprep.subr.bf16.mxu0 0
      %352 = vmatpush1.bf16.xpose.msra.mxu0 0
      %353 = vmatprep.subr.bf16.mxu0 0
      %354 = vmatpush1.bf16.xpose.msra.mxu0 0
      %355 = vmatprep.mubr.bf16.mxu0 0
      %356 = vmatmul.mubr.bf16.gmra.mrb[0].mxu0 %v318
      %v357 = vpop.f32.mrb[0].mxu0
      %v358 = vadd.f32 0.0, %v357
      %v359 = vpop.f32.mrb[0].mxu0
      %v360 = vpop.f32.mrb[0].mxu0
      %v361 = vpop.f32.mrb[0].mxu0
      %362 = vdwg.mxu0
      %v364 = vsel %vm224, %v215, 0
      %v367 = vsel %vm224, %v219, 0
      %369 = vmatprep.subr.bf16.mxu0 0
      %370 = vmatpush1.bf16.xpose.msra.mxu0 %v367
      %371 = vmatprep.subr.bf16.mxu0 0
      %372 = vmatpush1.bf16.xpose.msra.mxu0 0
      %373 = vmatprep.subr.bf16.mxu0 0
      %374 = vmatpush1.bf16.xpose.msra.mxu0 0
      %375 = vmatprep.subr.bf16.mxu0 0
      %376 = vmatpush1.bf16.xpose.msra.mxu0 0
      %377 = vmatprep.subr.bf16.mxu0 0
      %378 = vmatpush1.bf16.xpose.msra.mxu0 0
      %379 = vmatprep.subr.bf16.mxu0 0
      %380 = vmatpush1.bf16.xpose.msra.mxu0 0
      %381 = vmatprep.subr.bf16.mxu0 0
      %382 = vmatpush1.bf16.xpose.msra.mxu0 0
      %383 = vmatprep.subr.bf16.mxu0 0
      %384 = vmatpush1.bf16.xpose.msra.mxu0 0
      %385 = vmatprep.subr.bf16.mxu0 0
      %386 = vmatpush1.bf16.xpose.msra.mxu0 0
      %387 = vmatprep.subr.bf16.mxu0 0
      %388 = vmatpush1.bf16.xpose.msra.mxu0 0
      %389 = vmatprep.subr.bf16.mxu0 0
      %390 = vmatpush1.bf16.xpose.msra.mxu0 0
      %391 = vmatprep.subr.bf16.mxu0 0
      %392 = vmatpush1.bf16.xpose.msra.mxu0 0
      %393 = vmatprep.subr.bf16.mxu0 0
      %394 = vmatpush1.bf16.xpose.msra.mxu0 0
      %395 = vmatprep.subr.bf16.mxu0 0
      %396 = vmatpush1.bf16.xpose.msra.mxu0 0
      %397 = vmatprep.subr.bf16.mxu0 0
      %398 = vmatpush1.bf16.xpose.msra.mxu0 0
      %399 = vmatprep.subr.bf16.mxu0 0
      %400 = vmatpush1.bf16.xpose.msra.mxu0 0
      %401 = vmatprep.mubr.bf16.mxu0 0
      %402 = vmatmul.mubr.bf16.gmra.mrb[0].mxu0 %v364
      %v403 = vpop.f32.mrb[0].mxu0
      %v404 = vadd.f32 0.0, %v403
      %v405 = vpop.f32.mrb[0].mxu0
      %v406 = vpop.f32.mrb[0].mxu0
      %v407 = vpop.f32.mrb[0].mxu0
      %408 = vdwg.mxu0
      %v409 = vmul.f32 %v266, 0.35355338
      %v410 = vmul.f32 %v312, 0.35355338
      %v411 = vmul.f32 %v358, 0.35355338
      %v412 = vmul.f32 %v404, 0.35355338
      %vm413 = vcmask 27648
      %v414 = vsel %vm413, %v409, -inf
      %415 = vmax.xlane.f32.xlu0 %v414
      %v416 = vpop.xlane.xlu0 %415
      %v417 = vsel %vm413, %v410, -inf
      %418 = vmax.xlane.f32.xlu0 %v417
      %v419 = vpop.xlane.xlu0 %418
      %v420 = vsel %vm413, %v411, -inf
      %421 = vmax.xlane.f32.xlu0 %v420
      %v422 = vpop.xlane.xlu0 %421
      %v423 = vsel %vm413, %v412, -inf
      %424 = vmax.xlane.f32.xlu0 %v423
      %v425 = vpop.xlane.xlu0 %424
      %v426 = vsub.f32 %v409, %v416
      %v427 = vsub.f32 %v410, %v419
      %v428 = vsub.f32 %v411, %v422
      %v429 = vsub.f32 %v412, %v425
      %v430 = vmul.f32 %v426, 1.442695
      %v431 = vpow.pop %v430
      %v432 = vmul.f32 %v427, 1.442695
      %v433 = vpow.pop %v432
      %v434 = vmul.f32 %v428, 1.442695
      %v435 = vpow.pop %v434
      %v436 = vmul.f32 %v429, 1.442695
      %v437 = vpow.pop %v436
      %v438 = vsel %vm413, %v431, 0.0
      %439 = vadd.xlane.f32.xlu0 %v438
      %v440 = vpop.xlane.xlu0 %439
      %v441 = vsel %vm413, %v433, 0.0
      %442 = vadd.xlane.f32.xlu0 %v441
      %v443 = vpop.xlane.xlu0 %442
      %v444 = vsel %vm413, %v435, 0.0
      %445 = vadd.xlane.f32.xlu0 %v444
      %v446 = vpop.xlane.xlu0 %445
      %v447 = vsel %vm413, %v437, 0.0
      %448 = vadd.xlane.f32.xlu0 %v447
      %v449 = vpop.xlane.xlu0 %448
      %v450 = vrcp.pop %v440
      %v451 = vrcp.pop %v443
      %v452 = vrcp.pop %v446
      %v453 = vrcp.pop %v449
      %v454 = vmul.f32 %v431, %v450
      %v455 = vmul.f32 %v433, %v451
      %v456 = vmul.f32 %v435, %v452
      %v457 = vmul.f32 %v437, %v453
      %v458 = vpack.c.bf16 %v454, %v454
      %v459 = vpack.c.bf16 %v455, %v455
      %v460 = vpack.c.bf16 %v456, %v456
      %v461 = vpack.c.bf16 %v457, %v457
      %vm462 = vcmask 31744
      %v464 = vsel %vm462, %v458, 0
      %vm466 = vcmask 1041408
      %v468 = vsel %vm466, %v220, 0
      %470 = vmatprep.subr.bf16.mxu0 0
      %471 = vmatpush1.bf16.msra.mxu0 %v468
      %472 = vmatprep.subr.bf16.mxu0 0
      %473 = vmatpush1.bf16.msra.mxu0 0
      %474 = vmatprep.subr.bf16.mxu0 0
      %475 = vmatpush1.bf16.msra.mxu0 0
      %476 = vmatprep.subr.bf16.mxu0 0
      %477 = vmatpush1.bf16.msra.mxu0 0
      %478 = vmatprep.subr.bf16.mxu0 0
      %479 = vmatpush1.bf16.msra.mxu0 0
      %480 = vmatprep.subr.bf16.mxu0 0
      %481 = vmatpush1.bf16.msra.mxu0 0
      %482 = vmatprep.subr.bf16.mxu0 0
      %483 = vmatpush1.bf16.msra.mxu0 0
      %484 = vmatprep.subr.bf16.mxu0 0
      %485 = vmatpush1.bf16.msra.mxu0 0
      %486 = vmatprep.subr.bf16.mxu0 0
      %487 = vmatpush1.bf16.msra.mxu0 0
      %488 = vmatprep.subr.bf16.mxu0 0
      %489 = vmatpush1.bf16.msra.mxu0 0
      %490 = vmatprep.subr.bf16.mxu0 0
      %491 = vmatpush1.bf16.msra.mxu0 0
      %492 = vmatprep.subr.bf16.mxu0 0
      %493 = vmatpush1.bf16.msra.mxu0 0
      %494 = vmatprep.subr.bf16.mxu0 0
      %495 = vmatpush1.bf16.msra.mxu0 0
      %496 = vmatprep.subr.bf16.mxu0 0
      %497 = vmatpush1.bf16.msra.mxu0 0
      %498 = vmatprep.subr.bf16.mxu0 0
      %499 = vmatpush1.bf16.msra.mxu0 0
      %500 = vmatprep.subr.bf16.mxu0 0
      %501 = vmatpush1.bf16.msra.mxu0 0
      %502 = vmatprep.mubr.bf16.mxu0 0
      %503 = vmatmul.mubr.bf16.gmra.mrb[0].mxu0 %v464
      %v504 = vpop.f32.mrb[0].mxu0
      %v505 = vadd.f32 0.0, %v504
      %v506 = vpop.f32.mrb[0].mxu0
      %v507 = vpop.f32.mrb[0].mxu0
      %v508 = vpop.f32.mrb[0].mxu0
      %509 = vdwg.mxu0
      %v511 = vsel %vm462, %v459, 0
      %v514 = vsel %vm466, %v221, 0
      %516 = vmatprep.subr.bf16.mxu0 0
      %517 = vmatpush1.bf16.msra.mxu0 %v514
      %518 = vmatprep.subr.bf16.mxu0 0
      %519 = vmatpush1.bf16.msra.mxu0 0
      %520 = vmatprep.subr.bf16.mxu0 0
      %521 = vmatpush1.bf16.msra.mxu0 0
      %522 = vmatprep.subr.bf16.mxu0 0
      %523 = vmatpush1.bf16.msra.mxu0 0
      %524 = vmatprep.subr.bf16.mxu0 0
      %525 = vmatpush1.bf16.msra.mxu0 0
      %526 = vmatprep.subr.bf16.mxu0 0
      %527 = vmatpush1.bf16.msra.mxu0 0
      %528 = vmatprep.subr.bf16.mxu0 0
      %529 = vmatpush1.bf16.msra.mxu0 0
      %530 = vmatprep.subr.bf16.mxu0 0
      %531 = vmatpush1.bf16.msra.mxu0 0
      %532 = vmatprep.subr.bf16.mxu0 0
      %533 = vmatpush1.bf16.msra.mxu0 0
      %534 = vmatprep.subr.bf16.mxu0 0
      %535 = vmatpush1.bf16.msra.mxu0 0
      %536 = vmatprep.subr.bf16.mxu0 0
      %537 = vmatpush1.bf16.msra.mxu0 0
      %538 = vmatprep.subr.bf16.mxu0 0
      %539 = vmatpush1.bf16.msra.mxu0 0
      %540 = vmatprep.subr.bf16.mxu0 0
      %541 = vmatpush1.bf16.msra.mxu0 0
      %542 = vmatprep.subr.bf16.mxu0 0
      %543 = vmatpush1.bf16.msra.mxu0 0
      %544 = vmatprep.subr.bf16.mxu0 0
      %545 = vmatpush1.bf16.msra.mxu0 0
      %546 = vmatprep.subr.bf16.mxu0 0
      %547 = vmatpush1.bf16.msra.mxu0 0
      %548 = vmatprep.mubr.bf16.mxu0 0
      %549 = vmatmul.mubr.bf16.gmra.mrb[0].mxu0 %v511
      %v550 = vpop.f32.mrb[0].mxu0
      %v551 = vadd.f32 0.0, %v550
      %v552 = vpop.f32.mrb[0].mxu0
      %v553 = vpop.f32.mrb[0].mxu0
      %v554 = vpop.f32.mrb[0].mxu0
      %555 = vdwg.mxu0
      %v557 = vsel %vm462, %v460, 0
      %v560 = vsel %vm466, %v222, 0
      %562 = vmatprep.subr.bf16.mxu0 0
      %563 = vmatpush1.bf16.msra.mxu0 %v560
      %564 = vmatprep.subr.bf16.mxu0 0
      %565 = vmatpush1.bf16.msra.mxu0 0
      %566 = vmatprep.subr.bf16.mxu0 0
      %567 = vmatpush1.bf16.msra.mxu0 0
      %568 = vmatprep.subr.bf16.mxu0 0
      %569 = vmatpush1.bf16.msra.mxu0 0
      %570 = vmatprep.subr.bf16.mxu0 0
      %571 = vmatpush1.bf16.msra.mxu0 0
      %572 = vmatprep.subr.bf16.mxu0 0
      %573 = vmatpush1.bf16.msra.mxu0 0
      %574 = vmatprep.subr.bf16.mxu0 0
      %575 = vmatpush1.bf16.msra.mxu0 0
      %576 = vmatprep.subr.bf16.mxu0 0
      %577 = vmatpush1.bf16.msra.mxu0 0
      %578 = vmatprep.subr.bf16.mxu0 0
      %579 = vmatpush1.bf16.msra.mxu0 0
      %580 = vmatprep.subr.bf16.mxu0 0
      %581 = vmatpush1.bf16.msra.mxu0 0
      %582 = vmatprep.subr.bf16.mxu0 0
      %583 = vmatpush1.bf16.msra.mxu0 0
      %584 = vmatprep.subr.bf16.mxu0 0
      %585 = vmatpush1.bf16.msra.mxu0 0
      %586 = vmatprep.subr.bf16.mxu0 0
      %587 = vmatpush1.bf16.msra.mxu0 0
      %588 = vmatprep.subr.bf16.mxu0 0
      %589 = vmatpush1.bf16.msra.mxu0 0
      %590 = vmatprep.subr.bf16.mxu0 0
      %591 = vmatpush1.bf16.msra.mxu0 0
      %592 = vmatprep.subr.bf16.mxu0 0
      %593 = vmatpush1.bf16.msra.mxu0 0
      %594 = vmatprep.mubr.bf16.mxu0 0
      %595 = vmatmul.mubr.bf16.gmra.mrb[0].mxu0 %v557
      %v596 = vpop.f32.mrb[0].mxu0
      %v597 = vadd.f32 0.0, %v596
      %v598 = vpop.f32.mrb[0].mxu0
      %v599 = vpop.f32.mrb[0].mxu0
      %v600 = vpop.f32.mrb[0].mxu0
      %601 = vdwg.mxu0
      %v603 = vsel %vm462, %v461, 0
      %v606 = vsel %vm466, %v223, 0
      %608 = vmatprep.subr.bf16.mxu0 0
      %609 = vmatpush1.bf16.msra.mxu0 %v606
      %610 = vmatprep.subr.bf16.mxu0 0
      %611 = vmatpush1.bf16.msra.mxu0 0
      %612 = vmatprep.subr.bf16.mxu0 0
      %613 = vmatpush1.bf16.msra.mxu0 0
      %614 = vmatprep.subr.bf16.mxu0 0
      %615 = vmatpush1.bf16.msra.mxu0 0
      %616 = vmatprep.subr.bf16.mxu0 0
      %617 = vmatpush1.bf16.msra.mxu0 0
      %618 = vmatprep.subr.bf16.mxu0 0
      %619 = vmatpush1.bf16.msra.mxu0 0
      %620 = vmatprep.subr.bf16.mxu0 0
      %621 = vmatpush1.bf16.msra.mxu0 0
      %622 = vmatprep.subr.bf16.mxu0 0
      %623 = vmatpush1.bf16.msra.mxu0 0
      %624 = vmatprep.subr.bf16.mxu0 0
      %625 = vmatpush1.bf16.msra.mxu0 0
      %626 = vmatprep.subr.bf16.mxu0 0
      %627 = vmatpush1.bf16.msra.mxu0 0
      %628 = vmatprep.subr.bf16.mxu0 0
      %629 = vmatpush1.bf16.msra.mxu0 0
      %630 = vmatprep.subr.bf16.mxu0 0
      %631 = vmatpush1.bf16.msra.mxu0 0
      %632 = vmatprep.subr.bf16.mxu0 0
      %633 = vmatpush1.bf16.msra.mxu0 0
      %634 = vmatprep.subr.bf16.mxu0 0
      %635 = vmatpush1.bf16.msra.mxu0 0
      %636 = vmatprep.subr.bf16.mxu0 0
      %637 = vmatpush1.bf16.msra.mxu0 0
      %638 = vmatprep.subr.bf16.mxu0 0
      %639 = vmatpush1.bf16.msra.mxu0 0
      %640 = vmatprep.mubr.bf16.mxu0 0
      %641 = vmatmul.mubr.bf16.gmra.mrb[0].mxu0 %v603
      %v642 = vpop.f32.mrb[0].mxu0
      %v643 = vadd.f32 0.0, %v642
      %v644 = vpop.f32.mrb[0].mxu0
      %v645 = vpop.f32.mrb[0].mxu0
      %v646 = vpop.f32.mrb[0].mxu0
      %647 = vdwg.mxu0
      %v648 = vpack.c.bf16 %v505, %v505
      %v649 = vpack.c.bf16 %v551, %v551
      %v650 = vpack.c.bf16 %v597, %v597
      %v651 = vpack.c.bf16 %v643, %v643
      %vm652 = vcmask 58368
      %653 = vst.msk [vmem:[%s210] sm:$0x3] %vm652, %v648
      %654 = vst.msk [vmem:[%s210 + $0x2] sm:$0x3] %vm652, %v649
      %655 = vst.msk [vmem:[%s210 + $0x4] sm:$0x3] %vm652, %v650
      %656 = vst.msk [vmem:[%s210 + $0x6] sm:$0x3] %vm652, %v651
      %p657 = scmp.lt.s32.totalorder %s14, 7
      %s658 = scalar_select %p657, %s14, 7
      %s659 = smul.addr %s658, 4
      %s660 = smul.addr %s659, 2
      %s661 = scalar_lea.vmem %s3, %s660
      // Predicated region
      $region33: #{_lambda_.17} parent=31 // pred_check
        %p662 = pneg %p110
      $region34: #{_lambda_.17} parent=31 // pred_check_branch
        %664 = sbr.rel (%p662) target = $region36
      $region35: #{_lambda_.17} parent=31 // pred_region
        _
      $region36: #{_lambda_.17} parent=31 // pred_fallthru
        _
    $region32: #{_lambda_.17} parent=5 // pred_fallthru
      _
    %p665 = scmp.le.s32.totalorder 2, %s9
    // Predicated region
    $region37: #{_lambda_.17} parent=5 // pred_check
      %p666 = pneg %p665
    $region38: #{_lambda_.17} parent=5 // pred_check_branch
      %668 = sbr.rel (%p666) target = $region40
    $region39: #{_lambda_.17} parent=5 // pred_region
      %s669 = ssub.s32 %s9, 2
      // Predicated region
      $region41: #{_lambda_.17} parent=39 // pred_check
        %p670 = pneg %p116
      $region42: #{_lambda_.17} parent=39 // pred_check_branch
        %672 = sbr.rel (%p670) target = $region44
      $region43: #{_lambda_.17} parent=39 // pred_region
        %p673 = scmp.lt.s32.totalorder %s15, 7
        %s674 = scalar_select %p673, %s15, 7
        %s675 = smul.addr %s674, 4
        %s676 = smul.addr %s675, 2
        %s677 = scalar_lea.vmem %s3, %s676
      $region44: #{_lambda_.17} parent=39 // pred_fallthru
        _
    $region40: #{_lambda_.17} parent=5 // pred_fallthru
      _
  $region6: #{_lambda_.17} parent=0 // loop_footer
    %s13 = sadd.s32 1, %s9
  $region7: #{_lambda_.17} parent=0 // loop_footer_branch
    %8 = sbr.rel target = $region3
  $region8: #{_lambda_.17} parent=0 // loop_exit
    _

// kernel: _lambda_.20
$region0: #{_lambda_.20}
  #allocation0 [shape = 'u32[]', space=smem, size = 0x4, offset = 0x4, fixed_abs, tag = 'smem constant byte address 0x4 - core index']
  #allocation1 [shape = 'u32[144,128]{1,0:T(1,128)}', space=vmem, size = 0x12000, scoped, tag = 'internal scratch']
  #allocation2 [shape = 'f32[32,32]{1,0:T(8,128)}', space=vmem, size = 0x4000, scoped, tag = 'scratch operand']
  %s0 = inlined_call_operand.vmem [shape: bf16[32,128], index: 0, kind: input, shape index: {}]
  %s1 = inlined_call_operand.vmem [shape: bf16[128,32], index: 1, kind: input, shape index: {}]
  %s2 = inlined_call_operand.vmem [shape: f32[1,32], index: 2, kind: input, shape index: {}]
  %s3 = inlined_call_operand.vmem [shape: f32[32,32], index: 3, kind: output, shape index: {}]
  %s4 = sld [smem:[#allocation0]]
  $region30: #{_lambda_.20} parent=0
    _
  %s6 = ssub.s32 1, %s4
  %s7 = scalar_select 0, %s6, %s4
  // Predicated region
  $region2: #{_lambda_.20} parent=0 // pred_check
    _
  $region3: #{_lambda_.20} parent=0 // pred_check_branch
    %9 = sbr.rel (0) target = $region5
  $region4: #{_lambda_.20} parent=0 // pred_region
    _
  $region5: #{_lambda_.20} parent=0 // pred_fallthru
    _
  // Predicated region
  $region6: #{_lambda_.20} parent=0 // pred_check
    _
  $region7: #{_lambda_.20} parent=0 // pred_check_branch
    %11 = sbr.rel (0) target = $region9
  $region8: #{_lambda_.20} parent=0 // pred_region
    _
  $region9: #{_lambda_.20} parent=0 // pred_fallthru
    _
  // Predicated region
  $region10: #{_lambda_.20} parent=0 // pred_check
    _
  $region11: #{_lambda_.20} parent=0 // pred_check_branch
    %13 = sbr.rel (0) target = $region13
  $region12: #{_lambda_.20} parent=0 // pred_region
    _
  $region13: #{_lambda_.20} parent=0 // pred_fallthru
    _
  %p15 = scmp.eq.s32.totalorder 0, 0
  // Predicated region
  $region14: #{_lambda_.20} parent=0 // pred_check
    %p16 = pneg %p15
  $region15: #{_lambda_.20} parent=0 // pred_check_branch
    %18 = sbr.rel (%p16) target = $region17
  $region16: #{_lambda_.20} parent=0 // pred_region
    %vm19 = vcmask 261120
    %20 = vst.msk [vmem:[#allocation2] sm:$0xff] %vm19, 0.0
    %21 = vst.msk [vmem:[#allocation2 + $0x8] sm:$0xff] %vm19, 0.0
    %22 = vst.msk [vmem:[#allocation2 + $0x10] sm:$0xff] %vm19, 0.0
    %23 = vst.msk [vmem:[#allocation2 + $0x18] sm:$0xff] %vm19, 0.0
  $region17: #{_lambda_.20} parent=0 // pred_fallthru
    _
  %v24 = vld [vmem:[#allocation2] sm:$0xff]
  %v25 = vld [vmem:[#allocation2 + $0x8] sm:$0xff]
  %v26 = vld [vmem:[#allocation2 + $0x10] sm:$0xff]
  %v27 = vld [vmem:[#allocation2 + $0x18] sm:$0xff]
  %v28 = vld [vmem:[%s0] sm:$0xf]
  %v29 = vld [vmem:[%s0 + $0x4] sm:$0xf]
  %v30 = vld [vmem:[%s0 + $0x8] sm:$0xf]
  %v31 = vld [vmem:[%s0 + $0xc] sm:$0xf]
  %v32 = vld [vmem:[%s1] sm:$0xf]
  %v33 = vld [vmem:[%s1 + $0x4] sm:$0xf]
  %v34 = vld [vmem:[%s1 + $0x8] sm:$0xf]
  %v35 = vld [vmem:[%s1 + $0xc] sm:$0xf]
  %v36 = vld [vmem:[%s1 + $0x10] sm:$0xf]
  %v37 = vld [vmem:[%s1 + $0x14] sm:$0xf]
  %v38 = vld [vmem:[%s1 + $0x18] sm:$0xf]
  %v39 = vld [vmem:[%s1 + $0x1c] sm:$0xf]
  %v40 = vld [vmem:[%s1 + $0x20] sm:$0xf]
  %v41 = vld [vmem:[%s1 + $0x24] sm:$0xf]
  %v42 = vld [vmem:[%s1 + $0x28] sm:$0xf]
  %v43 = vld [vmem:[%s1 + $0x2c] sm:$0xf]
  %v44 = vld [vmem:[%s1 + $0x30] sm:$0xf]
  %v45 = vld [vmem:[%s1 + $0x34] sm:$0xf]
  %v46 = vld [vmem:[%s1 + $0x38] sm:$0xf]
  %v47 = vld [vmem:[%s1 + $0x3c] sm:$0xf]
  %v52 = vunpack.c.l.b16 %v28
  %v53 = vunpack.c.l.b16 %v29
  %v54 = vunpack.c.l.b16 %v30
  %v55 = vunpack.c.l.b16 %v31
  %v56 = vpack.c.b16 %v53, %v52
  %v57 = vpack.c.b16 %v55, %v54
  %v76 = vunpack.c.l.b16 %v32
  %v77 = vunpack.c.l.b16 %v33
  %v78 = vunpack.c.l.b16 %v34
  %v79 = vunpack.c.l.b16 %v35
  %v80 = vunpack.c.l.b16 %v36
  %v81 = vunpack.c.l.b16 %v37
  %v82 = vunpack.c.l.b16 %v38
  %v83 = vunpack.c.l.b16 %v39
  %v84 = vunpack.c.l.b16 %v40
  %v85 = vunpack.c.l.b16 %v41
  %v86 = vunpack.c.l.b16 %v42
  %v87 = vunpack.c.l.b16 %v43
  %v88 = vunpack.c.l.b16 %v44
  %v89 = vunpack.c.l.b16 %v45
  %v90 = vunpack.c.l.b16 %v46
  %v91 = vunpack.c.l.b16 %v47
  %v92 = vpack.c.b16 %v77, %v76
  %v93 = vpack.c.b16 %v79, %v78
  %v94 = vpack.c.b16 %v81, %v80
  %v95 = vpack.c.b16 %v83, %v82
  %v96 = vpack.c.b16 %v85, %v84
  %v97 = vpack.c.b16 %v87, %v86
  %v98 = vpack.c.b16 %v89, %v88
  %v99 = vpack.c.b16 %v91, %v90
  %108 = vmatprep.subr.bf16.mxu0 0
  %109 = vmatpush1.bf16.msra.mxu0 %v92
  %110 = vmatprep.subr.bf16.mxu0 0
  %111 = vmatpush1.bf16.msra.mxu0 %v93
  %112 = vmatprep.subr.bf16.mxu0 0
  %113 = vmatpush1.bf16.msra.mxu0 %v94
  %114 = vmatprep.subr.bf16.mxu0 0
  %115 = vmatpush1.bf16.msra.mxu0 %v95
  %116 = vmatprep.subr.bf16.mxu0 0
  %117 = vmatpush1.bf16.msra.mxu0 %v96
  %118 = vmatprep.subr.bf16.mxu0 0
  %119 = vmatpush1.bf16.msra.mxu0 %v97
  %120 = vmatprep.subr.bf16.mxu0 0
  %121 = vmatpush1.bf16.msra.mxu0 %v98
  %122 = vmatprep.subr.bf16.mxu0 0
  %123 = vmatpush1.bf16.msra.mxu0 %v99
  %124 = vmatprep.subr.bf16.mxu0 0
  %125 = vmatpush1.bf16.msra.mxu0 0
  %126 = vmatprep.subr.bf16.mxu0 0
  %127 = vmatpush1.bf16.msra.mxu0 0
  %128 = vmatprep.subr.bf16.mxu0 0
  %129 = vmatpush1.bf16.msra.mxu0 0
  %130 = vmatprep.subr.bf16.mxu0 0
  %131 = vmatpush1.bf16.msra.mxu0 0
  %132 = vmatprep.subr.bf16.mxu0 0
  %133 = vmatpush1.bf16.msra.mxu0 0
  %134 = vmatprep.subr.bf16.mxu0 0
  %135 = vmatpush1.bf16.msra.mxu0 0
  %136 = vmatprep.subr.bf16.mxu0 0
  %137 = vmatpush1.bf16.msra.mxu0 0
  %138 = vmatprep.subr.bf16.mxu0 0
  %139 = vmatpush1.bf16.msra.mxu0 0
  %140 = vmatprep.mubr.bf16.mxu0 0
  %141 = vmatmul.mubr.bf16.gmra.mrb[0].mxu0 %v56
  %v142 = vpop.f32.mrb[0].mxu0
  %v143 = vadd.f32 0.0, %v142
  %v144 = vpop.f32.mrb[0].mxu0
  %v145 = vpop.f32.mrb[0].mxu0
  %v146 = vadd.f32 0.0, %v145
  %v147 = vpop.f32.mrb[0].mxu0
  %148 = vmatprep.mubr.bf16.mxu0 0
  %149 = vmatmul.mubr.bf16.gmra.mrb[0].mxu0 %v57
  %v150 = vpop.f32.mrb[0].mxu0
  %v151 = vadd.f32 0.0, %v150
  %v152 = vpop.f32.mrb[0].mxu0
  %v153 = vpop.f32.mrb[0].mxu0
  %v154 = vadd.f32 0.0, %v153
  %v155 = vpop.f32.mrb[0].mxu0
  %156 = vdwg.mxu0
  %v157 = vadd.f32 %v24, %v143
  %v158 = vadd.f32 %v25, %v146
  %v159 = vadd.f32 %v26, %v151
  %v160 = vadd.f32 %v27, %v154
  %vm161 = vcmask 261120
  %162 = vst.msk [vmem:[#allocation2] sm:$0xff] %vm161, %v157
  %163 = vst.msk [vmem:[#allocation2 + $0x8] sm:$0xff] %vm161, %v158
  %164 = vst.msk [vmem:[#allocation2 + $0x10] sm:$0xff] %vm161, %v159
  %165 = vst.msk [vmem:[#allocation2 + $0x18] sm:$0xff] %vm161, %v160
  // Predicated region
  $region18: #{_lambda_.20} parent=0 // pred_check
    %p166 = pneg %p15
  $region19: #{_lambda_.20} parent=0 // pred_check_branch
    %168 = sbr.rel (%p166) target = $region21
  $region20: #{_lambda_.20} parent=0 // pred_region
    %v169 = vld [vmem:[#allocation2] sm:$0xff]
    %v170 = vld [vmem:[#allocation2 + $0x8] sm:$0xff]
    %v171 = vld [vmem:[#allocation2 + $0x10] sm:$0xff]
    %v172 = vld [vmem:[#allocation2 + $0x18] sm:$0xff]
    %v173 = vld [vmem:[%s2] sm:$0x1]
    %v175 = vlaneseq
    %v176 = vshrl.u32 %v175, 7
    %v177 = vsub.s32 0, %v176
    %v178 = vrot.slane %v173, %v177
    %v180 = vadd.f32 %v169, %v178
    %v181 = vadd.f32 %v170, %v178
    %v182 = vadd.f32 %v171, %v178
    %v183 = vadd.f32 %v172, %v178
    %184 = vst.msk [vmem:[%s3] sm:$0xff] %vm161, %v180
    %185 = vst.msk [vmem:[%s3 + $0x8] sm:$0xff] %vm161, %v181
    %186 = vst.msk [vmem:[%s3 + $0x10] sm:$0xff] %vm161, %v182
    %187 = vst.msk [vmem:[%s3 + $0x18] sm:$0xff] %vm161, %v183
  $region21: #{_lambda_.20} parent=0 // pred_fallthru
    _
  // Predicated region
  $region22: #{_lambda_.20} parent=0 // pred_check
    _
  $region23: #{_lambda_.20} parent=0 // pred_check_branch
    %189 = sbr.rel (0) target = $region25
  $region24: #{_lambda_.20} parent=0 // pred_region
    _
  $region25: #{_lambda_.20} parent=0 // pred_fallthru
    _
  // Predicated region
  $region26: #{_lambda_.20} parent=0 // pred_check
    _
  $region27: #{_lambda_.20} parent=0 // pred_check_branch
    %191 = sbr.rel (0) target = $region29
  $region28: #{_lambda_.20} parent=0 // pred_region
    _
  $region29: #{_lambda_.20} parent=0 // pred_fallthru
    _

// kernel: _lambda_.27
$region0: #{_lambda_.27}
  #allocation0 [shape = 'u32[]', space=smem, size = 0x4, offset = 0x4, fixed_abs, tag = 'smem constant byte address 0x4 - core index']
  #allocation1 [shape = 'u32[144,128]{1,0:T(1,128)}', space=vmem, size = 0x12000, scoped, tag = 'internal scratch']
  %s0 = inlined_call_operand.vmem [shape: f32[32,32], index: 0, kind: input, shape index: {}]
  %s1 = inlined_call_operand.vmem [shape: f32[1,32], index: 1, kind: input, shape index: {}]
  %s2 = inlined_call_operand.vmem [shape: f32[1,32], index: 2, kind: input, shape index: {}]
  %s3 = inlined_call_operand.vmem [shape: f32[32,32], index: 3, kind: output, shape index: {}]
  %s4 = sld [smem:[#allocation0]]
  $region22: #{_lambda_.27} parent=0
    _
  %s6 = ssub.s32 1, %s4
  %s7 = scalar_select 0, %s6, %s4
  // Predicated region
  $region2: #{_lambda_.27} parent=0 // pred_check
    _
  $region3: #{_lambda_.27} parent=0 // pred_check_branch
    %9 = sbr.rel (0) target = $region5
  $region4: #{_lambda_.27} parent=0 // pred_region
    _
  $region5: #{_lambda_.27} parent=0 // pred_fallthru
    _
  // Predicated region
  $region6: #{_lambda_.27} parent=0 // pred_check
    _
  $region7: #{_lambda_.27} parent=0 // pred_check_branch
    %11 = sbr.rel (0) target = $region9
  $region8: #{_lambda_.27} parent=0 // pred_region
    _
  $region9: #{_lambda_.27} parent=0 // pred_fallthru
    _
  // Predicated region
  $region10: #{_lambda_.27} parent=0 // pred_check
    _
  $region11: #{_lambda_.27} parent=0 // pred_check_branch
    %13 = sbr.rel (0) target = $region13
  $region12: #{_lambda_.27} parent=0 // pred_region
    _
  $region13: #{_lambda_.27} parent=0 // pred_fallthru
    _
  %v14 = vld [vmem:[%s0] sm:$0xff]
  %v15 = vld [vmem:[%s0 + $0x8] sm:$0xff]
  %v16 = vld [vmem:[%s0 + $0x10] sm:$0xff]
  %v17 = vld [vmem:[%s0 + $0x18] sm:$0xff]
  %vm18 = vcmask 261120
  %v19 = vsel %vm18, %v14, 0.0
  %20 = vadd.xlane.f32.xlu0 %v19
  %v21 = vpop.xlane.xlu0 %20
  %v22 = vsel %vm18, %v15, 0.0
  %23 = vadd.xlane.f32.xlu0 %v22
  %v24 = vpop.xlane.xlu0 %23
  %v25 = vsel %vm18, %v16, 0.0
  %26 = vadd.xlane.f32.xlu0 %v25
  %v27 = vpop.xlane.xlu0 %26
  %v28 = vsel %vm18, %v17, 0.0
  %29 = vadd.xlane.f32.xlu0 %v28
  %v30 = vpop.xlane.xlu0 %29
  %v31 = vrcp.pop 32.0
  %v32 = vmul.f32 %v21, %v31
  %v33 = vmul.f32 %v24, %v31
  %v34 = vmul.f32 %v27, %v31
  %v35 = vmul.f32 %v30, %v31
  %v36 = vsub.f32 %v14, %v32
  %v37 = vsub.f32 %v15, %v33
  %v38 = vsub.f32 %v16, %v34
  %v39 = vsub.f32 %v17, %v35
  %v40 = vmul.f32 %v36, %v36
  %v41 = vmul.f32 %v37, %v37
  %v42 = vmul.f32 %v38, %v38
  %v43 = vmul.f32 %v39, %v39
  %v44 = vsel %vm18, %v40, 0.0
  %45 = vadd.xlane.f32.xlu0 %v44
  %v46 = vpop.xlane.xlu0 %45
  %v47 = vsel %vm18, %v41, 0.0
  %48 = vadd.xlane.f32.xlu0 %v47
  %v49 = vpop.xlane.xlu0 %48
  %v50 = vsel %vm18, %v42, 0.0
  %51 = vadd.xlane.f32.xlu0 %v50
  %v52 = vpop.xlane.xlu0 %51
  %v53 = vsel %vm18, %v43, 0.0
  %54 = vadd.xlane.f32.xlu0 %v53
  %v55 = vpop.xlane.xlu0 %54
  %v56 = vmul.f32 %v46, %v31
  %v57 = vmul.f32 %v49, %v31
  %v58 = vmul.f32 %v52, %v31
  %v59 = vmul.f32 %v55, %v31
  %v60 = vadd.f32 %v56, 1e-06
  %v61 = vadd.f32 %v57, 1e-06
  %v62 = vadd.f32 %v58, 1e-06
  %v63 = vadd.f32 %v59, 1e-06
  %v64 = vrsqrt.pop %v60
  %v65 = vrsqrt.pop %v61
  %v66 = vrsqrt.pop %v62
  %v67 = vrsqrt.pop %v63
  %v68 = vmul.f32 %v36, %v64
  %v69 = vmul.f32 %v37, %v65
  %v70 = vmul.f32 %v38, %v66
  %v71 = vmul.f32 %v39, %v67
  %v72 = vld [vmem:[%s1] sm:$0x1]
  %v74 = vlaneseq
  %v75 = vshrl.u32 %v74, 7
  %v76 = vsub.s32 0, %v75
  %v77 = vrot.slane %v72, %v76
  %v79 = vmul.f32 %v68, %v77
  %v80 = vmul.f32 %v69, %v77
  %v81 = vmul.f32 %v70, %v77
  %v82 = vmul.f32 %v71, %v77
  %v83 = vld [vmem:[%s2] sm:$0x1]
  %v85 = vlaneseq
  %v86 = vshrl.u32 %v85, 7
  %v87 = vsub.s32 0, %v86
  %v88 = vrot.slane %v83, %v87
  %v90 = vadd.f32 %v79, %v88
  %v91 = vadd.f32 %v80, %v88
  %v92 = vadd.f32 %v81, %v88
  %v93 = vadd.f32 %v82, %v88
  %94 = vst.msk [vmem:[%s3] sm:$0xff] %vm18, %v90
  %95 = vst.msk [vmem:[%s3 + $0x8] sm:$0xff] %vm18, %v91
  %96 = vst.msk [vmem:[%s3 + $0x10] sm:$0xff] %vm18, %v92
  %97 = vst.msk [vmem:[%s3 + $0x18] sm:$0xff] %vm18, %v93
  // Predicated region
  $region14: #{_lambda_.27} parent=0 // pred_check
    _
  $region15: #{_lambda_.27} parent=0 // pred_check_branch
    %99 = sbr.rel (0) target = $region17
  $region16: #{_lambda_.27} parent=0 // pred_region
    _
  $region17: #{_lambda_.27} parent=0 // pred_fallthru
    _
  // Predicated region
  $region18: #{_lambda_.27} parent=0 // pred_check
    _
  $region19: #{_lambda_.27} parent=0 // pred_check_branch
    %101 = sbr.rel (0) target = $region21
  $region20: #{_lambda_.27} parent=0 // pred_region
    _
  $region21: #{_lambda_.27} parent=0 // pred_fallthru
    _

// kernel: _lambda_.22
$region0: #{_lambda_.22}
  #allocation0 [shape = 'u32[]', space=smem, size = 0x4, offset = 0x4, fixed_abs, tag = 'smem constant byte address 0x4 - core index']
  #allocation1 [shape = 'u32[144,128]{1,0:T(1,128)}', space=vmem, size = 0x12000, scoped, tag = 'internal scratch']
  %s0 = inlined_call_operand.vmem [shape: bf16[2,4,16,8], index: 0, kind: input, shape index: {}]
  %s1 = inlined_call_operand.vmem [shape: bf16[2,4,16,8], index: 1, kind: input, shape index: {}]
  %s2 = inlined_call_operand.vmem [shape: bf16[2,4,16,8], index: 2, kind: input, shape index: {}]
  %s3 = inlined_call_operand.vmem [shape: bf16[2,4,16,8], index: 3, kind: output, shape index: {}]
  %s4 = sld [smem:[#allocation0]]
  $region45: #{_lambda_.22} parent=0
    _
  %s6 = ssub.s32 1, %s4
  %s7 = scalar_select 0, %s6, %s4
  loop: start=0, step=1, limit=4
  $region2: #{_lambda_.22} parent=0 // loop_pre_header
    _
  $region3: #{_lambda_.22} parent=0 // loop_header
    %s9 = sphi 0, %s13
    %p10 = scmp.ge.s32.totalorder %s9, 4
    %s19 = sphi 0, %s21
    %s22 = sphi 0, %s19
    %s23 = sphi 0, %s22
    %s39 = sphi 0, %s23
    %s45 = sphi 0, %s47
    %s48 = sphi 0, %s45
    %s49 = sphi 0, %s48
    %s65 = sphi 0, %s49
    %s71 = sphi 0, %s73
    %s74 = sphi 0, %s71
    %s75 = sphi 0, %s74
    %s91 = sphi 0, %s75
    %s97 = sphi 0, %s99
    %s100 = sphi 0, %s97
    %s101 = sphi 0, %s100
    %s117 = sphi 0, %s101
  $region4: #{_lambda_.22} parent=0 // loop_header_branch
    %12 = sbr.rel (%p10) target = $region8
  $region5: #{_lambda_.22} parent=0 // loop_body
    %s14 = ssub.s32 %s9, 1
    %s15 = ssub.s32 %s9, 2
    %s16 = sadd.s32 %s9, 1
    %s17 = ssub.s32 %s9, %s16
    %p18 = scmp.eq.s32.totalorder %s17, 0
    %s20 = sadd.s32 %s19, 1
    %s21 = scalar_select %p18, %s19, %s20
    %p24 = pneg %p18
    %p25 = scmp.eq.s32.totalorder %s9, 1
    %p26 = por %p24, %p25
    %p27 = scmp.ne.s32.totalorder %s19, %s22
    %p28 = scmp.eq.s32.totalorder %s9, 0
    %p29 = por %p27, %p28
    %p30 = scmp.ne.s32.totalorder %s19, %s22
    %p31 = scmp.eq.s32.totalorder %s14, 1
    %p32 = por %p30, %p31
    %p33 = scmp.ne.s32.totalorder %s22, %s23
    %p34 = scmp.eq.s32.totalorder %s14, 0
    %p35 = por %p33, %p34
    %p36 = scmp.ne.s32.totalorder %s22, %s23
    %p37 = scmp.eq.s32.totalorder %s15, 1
    %p38 = por %p36, %p37
    %p40 = scmp.ne.s32.totalorder %s23, %s39
    %p41 = scmp.eq.s32.totalorder %s15, 0
    %p42 = por %p40, %p41
    %s43 = ssub.s32 %s9, %s16
    %p44 = scmp.eq.s32.totalorder %s43, 0
    %s46 = sadd.s32 %s45, 1
    %s47 = scalar_select %p44, %s45, %s46
    %p50 = pneg %p44
    %p51 = scmp.eq.s32.totalorder %s9, 1
    %p52 = por %p50, %p51
    %p53 = scmp.ne.s32.totalorder %s45, %s48
    %p54 = scmp.eq.s32.totalorder %s9, 0
    %p55 = por %p53, %p54
    %p56 = scmp.ne.s32.totalorder %s45, %s48
    %p57 = scmp.eq.s32.totalorder %s14, 1
    %p58 = por %p56, %p57
    %p59 = scmp.ne.s32.totalorder %s48, %s49
    %p60 = scmp.eq.s32.totalorder %s14, 0
    %p61 = por %p59, %p60
    %p62 = scmp.ne.s32.totalorder %s48, %s49
    %p63 = scmp.eq.s32.totalorder %s15, 1
    %p64 = por %p62, %p63
    %p66 = scmp.ne.s32.totalorder %s49, %s65
    %p67 = scmp.eq.s32.totalorder %s15, 0
    %p68 = por %p66, %p67
    %s69 = ssub.s32 %s9, %s16
    %p70 = scmp.eq.s32.totalorder %s69, 0
    %s72 = sadd.s32 %s71, 1
    %s73 = scalar_select %p70, %s71, %s72
    %p76 = pneg %p70
    %p77 = scmp.eq.s32.totalorder %s9, 1
    %p78 = por %p76, %p77
    %p79 = scmp.ne.s32.totalorder %s71, %s74
    %p80 = scmp.eq.s32.totalorder %s9, 0
    %p81 = por %p79, %p80
    %p82 = scmp.ne.s32.totalorder %s71, %s74
    %p83 = scmp.eq.s32.totalorder %s14, 1
    %p84 = por %p82, %p83
    %p85 = scmp.ne.s32.totalorder %s74, %s75
    %p86 = scmp.eq.s32.totalorder %s14, 0
    %p87 = por %p85, %p86
    %p88 = scmp.ne.s32.totalorder %s74, %s75
    %p89 = scmp.eq.s32.totalorder %s15, 1
    %p90 = por %p88, %p89
    %p92 = scmp.ne.s32.totalorder %s75, %s91
    %p93 = scmp.eq.s32.totalorder %s15, 0
    %p94 = por %p92, %p93
    %s95 = ssub.s32 %s9, %s16
    %p96 = scmp.eq.s32.totalorder %s95, 0
    %s98 = sadd.s32 %s97, 1
    %s99 = scalar_select %p96, %s97, %s98
    %p102 = pneg %p96
    %p103 = scmp.eq.s32.totalorder %s9, 1
    %p104 = por %p102, %p103
    %p105 = scmp.ne.s32.totalorder %s97, %s100
    %p106 = scmp.eq.s32.totalorder %s9, 0
    %p107 = por %p105, %p106
    %p108 = scmp.ne.s32.totalorder %s97, %s100
    %p109 = scmp.eq.s32.totalorder %s14, 1
    %p110 = por %p108, %p109
    %p111 = scmp.ne.s32.totalorder %s100, %s101
    %p112 = scmp.eq.s32.totalorder %s14, 0
    %p113 = por %p111, %p112
    %p114 = scmp.ne.s32.totalorder %s100, %s101
    %p115 = scmp.eq.s32.totalorder %s15, 1
    %p116 = por %p114, %p115
    %p118 = scmp.ne.s32.totalorder %s101, %s117
    %p119 = scmp.eq.s32.totalorder %s15, 0
    %p120 = por %p118, %p119
    %p121 = scmp.le.s32.totalorder 1, %s9
    %p122 = scmp.lt.s32.totalorder %s9, 3
    %p123 = pnand %p121, %p122
    %p124 = pneg %p123
    // Predicated region
    $region9: #{_lambda_.22} parent=5 // pred_check
      _
    $region10: #{_lambda_.22} parent=5 // pred_check_branch
      %126 = sbr.rel (%p123) target = $region12
    $region11: #{_lambda_.22} parent=5 // pred_region
      %s127 = ssub.s32 %s9, 1
    $region12: #{_lambda_.22} parent=5 // pred_fallthru
      _
    %p128 = scmp.lt.s32.totalorder %s9, 2
    // Predicated region
    $region13: #{_lambda_.22} parent=5 // pred_check
      %p129 = pneg %p128
    $region14: #{_lambda_.22} parent=5 // pred_check_branch
      %131 = sbr.rel (%p129) target = $region16
    $region15: #{_lambda_.22} parent=5 // pred_region
      // Predicated region
      $region17: #{_lambda_.22} parent=15 // pred_check
        %p132 = pneg %p29
      $region18: #{_lambda_.22} parent=15 // pred_check_branch
        %134 = sbr.rel (%p132) target = $region20
      $region19: #{_lambda_.22} parent=15 // pred_region
        %p135 = scmp.lt.s32.totalorder %s9, 1
        %s136 = scalar_select %p135, %s9, 1
        %s137 = smul.addr %s136, 8
        %s138 = smul.addr %s137, 4
        %s139 = scalar_lea.vmem %s0, %s138
      $region20: #{_lambda_.22} parent=15 // pred_fallthru
        _
      // Predicated region
      $region21: #{_lambda_.22} parent=15 // pred_check
        %p140 = pneg %p55
      $region22: #{_lambda_.22} parent=15 // pred_check_branch
        %142 = sbr.rel (%p140) target = $region24
      $region23: #{_lambda_.22} parent=15 // pred_region
        %p143 = scmp.lt.s32.totalorder %s9, 1
        %s144 = scalar_select %p143, %s9, 1
        %s145 = smul.addr %s144, 8
        %s146 = smul.addr %s145, 4
        %s147 = scalar_lea.vmem %s1, %s146
      $region24: #{_lambda_.22} parent=15 // pred_fallthru
        _
      // Predicated region
      $region25: #{_lambda_.22} parent=15 // pred_check
        %p148 = pneg %p81
      $region26: #{_lambda_.22} parent=15 // pred_check_branch
        %150 = sbr.rel (%p148) target = $region28
      $region27: #{_lambda_.22} parent=15 // pred_region
        %p151 = scmp.lt.s32.totalorder %s9, 1
        %s152 = scalar_select %p151, %s9, 1
        %s153 = smul.addr %s152, 8
        %s154 = smul.addr %s153, 4
        %s155 = scalar_lea.vmem %s2, %s154
      $region28: #{_lambda_.22} parent=15 // pred_fallthru
        _
    $region16: #{_lambda_.22} parent=5 // pred_fallthru
      _
    %p156 = scmp.le.s32.totalorder 1, %s9
    %p157 = scmp.lt.s32.totalorder %s9, 3
    %p158 = pnand %p156, %p157
    %p159 = pneg %p158
    // Predicated region
    $region29: #{_lambda_.22} parent=5 // pred_check
      _
    $region30: #{_lambda_.22} parent=5 // pred_check_branch
      %161 = sbr.rel (%p158) target = $region32
    $region31: #{_lambda_.22} parent=5 // pred_region
      %s162 = ssub.s32 %s9, 1
      %p163 = scmp.lt.s32.totalorder %s14, 1
      %s164 = scalar_select %p163, %s14, 1
      %s165 = smul.addr %s164, 8
      %s166 = smul.addr %s165, 4
      %s167 = scalar_lea.vmem %s0, %s166
      %p168 = pneg %p35
      %p169 = pneg %p32
      %p170 = scmp.lt.s32.totalorder %s14, 1
      %s171 = scalar_select %p170, %s14, 1
      %s172 = smul.addr %s171, 8
      %s173 = smul.addr %s172, 4
      %s174 = scalar_lea.vmem %s1, %s173
      %p175 = pneg %p61
      %p176 = pneg %p58
      %p177 = scmp.lt.s32.totalorder %s14, 1
      %s178 = scalar_select %p177, %s14, 1
      %s179 = smul.addr %s178, 8
      %s180 = smul.addr %s179, 4
      %s181 = scalar_lea.vmem %s2, %s180
      %p182 = pneg %p87
      %p183 = pneg %p84
      %p184 = pneg %p113
      %p185 = pneg %p110
      %p186 = scmp.lt.s32.totalorder %s14, 1
      %s187 = scalar_select %p186, %s14, 1
      %s188 = smul.addr %s187, 8
      %s189 = smul.addr %s188, 4
      %s190 = scalar_lea.vmem %s3, %s189
      %p191 = scmp.lt.s32.totalorder %s14, 1
      %s192 = scalar_select %p191, %s14, 1
      %s193 = smul.addr %s192, 8
      %s194 = smul.addr %s193, 4
      %s195 = scalar_lea.vmem %s0, %s194
      %p196 = scmp.lt.s32.totalorder %s14, 1
      %s197 = scalar_select %p196, %s14, 1
      %s198 = smul.addr %s197, 8
      %s199 = smul.addr %s198, 4
      %s200 = scalar_lea.vmem %s1, %s199
      %p201 = scmp.lt.s32.totalorder %s14, 1
      %s202 = scalar_select %p201, %s14, 1
      %s203 = smul.addr %s202, 8
      %s204 = smul.addr %s203, 4
      %s205 = scalar_lea.vmem %s2, %s204
      %p206 = scmp.lt.s32.totalorder %s14, 1
      %s207 = scalar_select %p206, %s14, 1
      %s208 = smul.addr %s207, 8
      %s209 = smul.addr %s208, 4
      %s210 = scalar_lea.vmem %s3, %s209
      %v212 = vld [vmem:[%s195] sm:$0xf]
      %v213 = vld [vmem:[%s195 + $0x4] sm:$0xf]
      %v214 = vld [vmem:[%s195 + $0x8] sm:$0xf]
      %v215 = vld [vmem:[%s195 + $0xc] sm:$0xf]
      %v216 = vld [vmem:[%s195 + $0x10] sm:$0xf]
      %v217 = vld [vmem:[%s195 + $0x14] sm:$0xf]
      %v218 = vld [vmem:[%s195 + $0x18] sm:$0xf]
      %v219 = vld [vmem:[%s195 + $0x1c] sm:$0xf]
      %v220 = vld [vmem:[%s200] sm:$0xf]
      %v221 = vld [vmem:[%s200 + $0x4] sm:$0xf]
      %v222 = vld [vmem:[%s200 + $0x8] sm:$0xf]
      %v223 = vld [vmem:[%s200 + $0xc] sm:$0xf]
      %v224 = vld [vmem:[%s200 + $0x10] sm:$0xf]
      %v225 = vld [vmem:[%s200 + $0x14] sm:$0xf]
      %v226 = vld [vmem:[%s200 + $0x18] sm:$0xf]
      %v227 = vld [vmem:[%s200 + $0x1c] sm:$0xf]
      %v228 = vld [vmem:[%s205] sm:$0xf]
      %v229 = vld [vmem:[%s205 + $0x4] sm:$0xf]
      %v230 = vld [vmem:[%s205 + $0x8] sm:$0xf]
      %v231 = vld [vmem:[%s205 + $0xc] sm:$0xf]
      %v232 = vld [vmem:[%s205 + $0x10] sm:$0xf]
      %v233 = vld [vmem:[%s205 + $0x14] sm:$0xf]
      %v234 = vld [vmem:[%s205 + $0x18] sm:$0xf]
      %v235 = vld [vmem:[%s205 + $0x1c] sm:$0xf]
      %v238 = vunpack.c.l.b16 %v212
      %v239 = vunpack.c.l.b16 %v213
      %v240 = vpack.c.b16 %v239, %v238
      %v243 = vunpack.c.l.b16 %v220
      %v244 = vunpack.c.l.b16 %v221
      %v245 = vpack.c.b16 %v244, %v243
      %vm246 = vcmask 64512
      %v248 = vsel %vm246, %v240, 0
      %v251 = vsel %vm246, %v245, 0
      %253 = vmatprep.subr.bf16.mxu0 0
      %254 = vmatpush1.bf16.xpose.msra.mxu0 %v251
      %255 = vmatprep.subr.bf16.mxu0 0
      %256 = vmatpush1.bf16.xpose.msra.mxu0 0
      %257 = vmatprep.subr.bf16.mxu0 0
      %258 = vmatpush1.bf16.xpose.msra.mxu0 0
      %259 = vmatprep.subr.bf16.mxu0 0
      %260 = vmatpush1.bf16.xpose.msra.mxu0 0
      %261 = vmatprep.subr.bf16.mxu0 0
      %262 = vmatpush1.bf16.xpose.msra.mxu0 0
      %263 = vmatprep.subr.bf16.mxu0 0
      %264 = vmatpush1.bf16.xpose.msra.mxu0 0
      %265 = vmatprep.subr.bf16.mxu0 0
      %266 = vmatpush1.bf16.xpose.msra.mxu0 0
      %267 = vmatprep.subr.bf16.mxu0 0
      %268 = vmatpush1.bf16.xpose.msra.mxu0 0
      %269 = vmatprep.subr.bf16.mxu0 0
      %270 = vmatpush1.bf16.xpose.msra.mxu0 0
      %271 = vmatprep.subr.bf16.mxu0 0
      %272 = vmatpush1.bf16.xpose.msra.mxu0 0
      %273 = vmatprep.subr.bf16.mxu0 0
      %274 = vmatpush1.bf16.xpose.msra.mxu0 0
      %275 = vmatprep.subr.bf16.mxu0 0
      %276 = vmatpush1.bf16.xpose.msra.mxu0 0
      %277 = vmatprep.subr.bf16.mxu0 0
      %278 = vmatpush1.bf16.xpose.msra.mxu0 0
      %279 = vmatprep.subr.bf16.mxu0 0
      %280 = vmatpush1.bf16.xpose.msra.mxu0 0
      %281 = vmatprep.subr.bf16.mxu0 0
      %282 = vmatpush1.bf16.xpose.msra.mxu0 0
      %283 = vmatprep.subr.bf16.mxu0 0
      %284 = vmatpush1.bf16.xpose.msra.mxu0 0
      %285 = vmatprep.mubr.bf16.mxu0 0
      %286 = vmatmul.mubr.bf16.gmra.mrb[0].mxu0 %v248
      %v287 = vpop.f32.mrb[0].mxu0
      %v288 = vadd.f32 0.0, %v287
      %v289 = vpop.f32.mrb[0].mxu0
      %v290 = vpop.f32.mrb[0].mxu0
      %v291 = vadd.f32 0.0, %v290
      %v292 = vpop.f32.mrb[0].mxu0
      %293 = vdwg.mxu0
      %v296 = vunpack.c.l.b16 %v214
      %v297 = vunpack.c.l.b16 %v215
      %v298 = vpack.c.b16 %v297, %v296
      %v301 = vunpack.c.l.b16 %v222
      %v302 = vunpack.c.l.b16 %v223
      %v303 = vpack.c.b16 %v302, %v301
      %v305 = vsel %vm246, %v298, 0
      %v308 = vsel %vm246, %v303, 0
      %310 = vmatprep.subr.bf16.mxu0 0
      %311 = vmatpush1.bf16.xpose.msra.mxu0 %v308
      %312 = vmatprep.subr.bf16.mxu0 0
      %313 = vmatpush1.bf16.xpose.msra.mxu0 0
      %314 = vmatprep.subr.bf16.mxu0 0
      %315 = vmatpush1.bf16.xpose.msra.mxu0 0
      %316 = vmatprep.subr.bf16.mxu0 0
      %317 = vmatpush1.bf16.xpose.msra.mxu0 0
      %318 = vmatprep.subr.bf16.mxu0 0
      %319 = vmatpush1.bf16.xpose.msra.mxu0 0
      %320 = vmatprep.subr.bf16.mxu0 0
      %321 = vmatpush1.bf16.xpose.msra.mxu0 0
      %322 = vmatprep.subr.bf16.mxu0 0
      %323 = vmatpush1.bf16.xpose.msra.mxu0 0
      %324 = vmatprep.subr.bf16.mxu0 0
      %325 = vmatpush1.bf16.xpose.msra.mxu0 0
      %326 = vmatprep.subr.bf16.mxu0 0
      %327 = vmatpush1.bf16.xpose.msra.mxu0 0
      %328 = vmatprep.subr.bf16.mxu0 0
      %329 = vmatpush1.bf16.xpose.msra.mxu0 0
      %330 = vmatprep.subr.bf16.mxu0 0
      %331 = vmatpush1.bf16.xpose.msra.mxu0 0
      %332 = vmatprep.subr.bf16.mxu0 0
      %333 = vmatpush1.bf16.xpose.msra.mxu0 0
      %334 = vmatprep.subr.bf16.mxu0 0
      %335 = vmatpush1.bf16.xpose.msra.mxu0 0
      %336 = vmatprep.subr.bf16.mxu0 0
      %337 = vmatpush1.bf16.xpose.msra.mxu0 0
      %338 = vmatprep.subr.bf16.mxu0 0
      %339 = vmatpush1.bf16.xpose.msra.mxu0 0
      %340 = vmatprep.subr.bf16.mxu0 0
      %341 = vmatpush1.bf16.xpose.msra.mxu0 0
      %342 = vmatprep.mubr.bf16.mxu0 0
      %343 = vmatmul.mubr.bf16.gmra.mrb[0].mxu0 %v305
      %v344 = vpop.f32.mrb[0].mxu0
      %v345 = vadd.f32 0.0, %v344
      %v346 = vpop.f32.mrb[0].mxu0
      %v347 = vpop.f32.mrb[0].mxu0
      %v348 = vadd.f32 0.0, %v347
      %v349 = vpop.f32.mrb[0].mxu0
      %350 = vdwg.mxu0
      %v353 = vunpack.c.l.b16 %v216
      %v354 = vunpack.c.l.b16 %v217
      %v355 = vpack.c.b16 %v354, %v353
      %v358 = vunpack.c.l.b16 %v224
      %v359 = vunpack.c.l.b16 %v225
      %v360 = vpack.c.b16 %v359, %v358
      %v362 = vsel %vm246, %v355, 0
      %v365 = vsel %vm246, %v360, 0
      %367 = vmatprep.subr.bf16.mxu0 0
      %368 = vmatpush1.bf16.xpose.msra.mxu0 %v365
      %369 = vmatprep.subr.bf16.mxu0 0
      %370 = vmatpush1.bf16.xpose.msra.mxu0 0
      %371 = vmatprep.subr.bf16.mxu0 0
      %372 = vmatpush1.bf16.xpose.msra.mxu0 0
      %373 = vmatprep.subr.bf16.mxu0 0
      %374 = vmatpush1.bf16.xpose.msra.mxu0 0
      %375 = vmatprep.subr.bf16.mxu0 0
      %376 = vmatpush1.bf16.xpose.msra.mxu0 0
      %377 = vmatprep.subr.bf16.mxu0 0
      %378 = vmatpush1.bf16.xpose.msra.mxu0 0
      %379 = vmatprep.subr.bf16.mxu0 0
      %380 = vmatpush1.bf16.xpose.msra.mxu0 0
      %381 = vmatprep.subr.bf16.mxu0 0
      %382 = vmatpush1.bf16.xpose.msra.mxu0 0
      %383 = vmatprep.subr.bf16.mxu0 0
      %384 = vmatpush1.bf16.xpose.msra.mxu0 0
      %385 = vmatprep.subr.bf16.mxu0 0
      %386 = vmatpush1.bf16.xpose.msra.mxu0 0
      %387 = vmatprep.subr.bf16.mxu0 0
      %388 = vmatpush1.bf16.xpose.msra.mxu0 0
      %389 = vmatprep.subr.bf16.mxu0 0
      %390 = vmatpush1.bf16.xpose.msra.mxu0 0
      %391 = vmatprep.subr.bf16.mxu0 0
      %392 = vmatpush1.bf16.xpose.msra.mxu0 0
      %393 = vmatprep.subr.bf16.mxu0 0
      %394 = vmatpush1.bf16.xpose.msra.mxu0 0
      %395 = vmatprep.subr.bf16.mxu0 0
      %396 = vmatpush1.bf16.xpose.msra.mxu0 0
      %397 = vmatprep.subr.bf16.mxu0 0
      %398 = vmatpush1.bf16.xpose.msra.mxu0 0
      %399 = vmatprep.mubr.bf16.mxu0 0
      %400 = vmatmul.mubr.bf16.gmra.mrb[0].mxu0 %v362
      %v401 = vpop.f32.mrb[0].mxu0
      %v402 = vadd.f32 0.0, %v401
      %v403 = vpop.f32.mrb[0].mxu0
      %v404 = vpop.f32.mrb[0].mxu0
      %v405 = vadd.f32 0.0, %v404
      %v406 = vpop.f32.mrb[0].mxu0
      %407 = vdwg.mxu0
      %v410 = vunpack.c.l.b16 %v218
      %v411 = vunpack.c.l.b16 %v219
      %v412 = vpack.c.b16 %v411, %v410
      %v415 = vunpack.c.l.b16 %v226
      %v416 = vunpack.c.l.b16 %v227
      %v417 = vpack.c.b16 %v416, %v415
      %v419 = vsel %vm246, %v412, 0
      %v422 = vsel %vm246, %v417, 0
      %424 = vmatprep.subr.bf16.mxu0 0
      %425 = vmatpush1.bf16.xpose.msra.mxu0 %v422
      %426 = vmatprep.subr.bf16.mxu0 0
      %427 = vmatpush1.bf16.xpose.msra.mxu0 0
      %428 = vmatprep.subr.bf16.mxu0 0
      %429 = vmatpush1.bf16.xpose.msra.mxu0 0
      %430 = vmatprep.subr.bf16.mxu0 0
      %431 = vmatpush1.bf16.xpose.msra.mxu0 0
      %432 = vmatprep.subr.bf16.mxu0 0
      %433 = vmatpush1.bf16.xpose.msra.mxu0 0
      %434 = vmatprep.subr.bf16.mxu0 0
      %435 = vmatpush1.bf16.xpose.msra.mxu0 0
      %436 = vmatprep.subr.bf16.mxu0 0
      %437 = vmatpush1.bf16.xpose.msra.mxu0 0
      %438 = vmatprep.subr.bf16.mxu0 0
      %439 = vmatpush1.bf16.xpose.msra.mxu0 0
      %440 = vmatprep.subr.bf16.mxu0 0
      %441 = vmatpush1.bf16.xpose.msra.mxu0 0
      %442 = vmatprep.subr.bf16.mxu0 0
      %443 = vmatpush1.bf16.xpose.msra.mxu0 0
      %444 = vmatprep.subr.bf16.mxu0 0
      %445 = vmatpush1.bf16.xpose.msra.mxu0 0
      %446 = vmatprep.subr.bf16.mxu0 0
      %447 = vmatpush1.bf16.xpose.msra.mxu0 0
      %448 = vmatprep.subr.bf16.mxu0 0
      %449 = vmatpush1.bf16.xpose.msra.mxu0 0
      %450 = vmatprep.subr.bf16.mxu0 0
      %451 = vmatpush1.bf16.xpose.msra.mxu0 0
      %452 = vmatprep.subr.bf16.mxu0 0
      %453 = vmatpush1.bf16.xpose.msra.mxu0 0
      %454 = vmatprep.subr.bf16.mxu0 0
      %455 = vmatpush1.bf16.xpose.msra.mxu0 0
      %456 = vmatprep.mubr.bf16.mxu0 0
      %457 = vmatmul.mubr.bf16.gmra.mrb[0].mxu0 %v419
      %v458 = vpop.f32.mrb[0].mxu0
      %v459 = vadd.f32 0.0, %v458
      %v460 = vpop.f32.mrb[0].mxu0
      %v461 = vpop.f32.mrb[0].mxu0
      %v462 = vadd.f32 0.0, %v461
      %v463 = vpop.f32.mrb[0].mxu0
      %464 = vdwg.mxu0
      %v465 = vmul.f32 %v288, 0.35355338
      %v466 = vmul.f32 %v291, 0.35355338
      %v467 = vmul.f32 %v345, 0.35355338
      %v468 = vmul.f32 %v348, 0.35355338
      %v469 = vmul.f32 %v402, 0.35355338
      %v470 = vmul.f32 %v405, 0.35355338
      %v471 = vmul.f32 %v459, 0.35355338
      %v472 = vmul.f32 %v462, 0.35355338
      %vm473 = vcmask 130048
      %v474 = vsel %vm473, %v465, -inf
      %475 = vmax.xlane.f32.xlu0 %v474
      %v476 = vpop.xlane.xlu0 %475
      %v477 = vsel %vm473, %v466, -inf
      %478 = vmax.xlane.f32.xlu0 %v477
      %v479 = vpop.xlane.xlu0 %478
      %v480 = vsel %vm473, %v467, -inf
      %481 = vmax.xlane.f32.xlu0 %v480
      %v482 = vpop.xlane.xlu0 %481
      %v483 = vsel %vm473, %v468, -inf
      %484 = vmax.xlane.f32.xlu0 %v483
      %v485 = vpop.xlane.xlu0 %484
      %v486 = vsel %vm473, %v469, -inf
      %487 = vmax.xlane.f32.xlu0 %v486
      %v488 = vpop.xlane.xlu0 %487
      %v489 = vsel %vm473, %v470, -inf
      %490 = vmax.xlane.f32.xlu0 %v489
      %v491 = vpop.xlane.xlu0 %490
      %v492 = vsel %vm473, %v471, -inf
      %493 = vmax.xlane.f32.xlu0 %v492
      %v494 = vpop.xlane.xlu0 %493
      %v495 = vsel %vm473, %v472, -inf
      %496 = vmax.xlane.f32.xlu0 %v495
      %v497 = vpop.xlane.xlu0 %496
      %v498 = vsub.f32 %v465, %v476
      %v499 = vsub.f32 %v466, %v479
      %v500 = vsub.f32 %v467, %v482
      %v501 = vsub.f32 %v468, %v485
      %v502 = vsub.f32 %v469, %v488
      %v503 = vsub.f32 %v470, %v491
      %v504 = vsub.f32 %v471, %v494
      %v505 = vsub.f32 %v472, %v497
      %v506 = vmul.f32 %v498, 1.442695
      %v507 = vpow.pop %v506
      %v508 = vmul.f32 %v499, 1.442695
      %v509 = vpow.pop %v508
      %v510 = vmul.f32 %v500, 1.442695
      %v511 = vpow.pop %v510
      %v512 = vmul.f32 %v501, 1.442695
      %v513 = vpow.pop %v512
      %v514 = vmul.f32 %v502, 1.442695
      %v515 = vpow.pop %v514
      %v516 = vmul.f32 %v503, 1.442695
      %v517 = vpow.pop %v516
      %v518 = vmul.f32 %v504, 1.442695
      %v519 = vpow.pop %v518
      %v520 = vmul.f32 %v505, 1.442695
      %v521 = vpow.pop %v520
      %v522 = vsel %vm473, %v507, 0.0
      %523 = vadd.xlane.f32.xlu0 %v522
      %v524 = vpop.xlane.xlu0 %523
      %v525 = vsel %vm473, %v509, 0.0
      %526 = vadd.xlane.f32.xlu0 %v525
      %v527 = vpop.xlane.xlu0 %526
      %v528 = vsel %vm473, %v511, 0.0
      %529 = vadd.xlane.f32.xlu0 %v528
      %v530 = vpop.xlane.xlu0 %529
      %v531 = vsel %vm473, %v513, 0.0
      %532 = vadd.xlane.f32.xlu0 %v531
      %v533 = vpop.xlane.xlu0 %532
      %v534 = vsel %vm473, %v515, 0.0
      %535 = vadd.xlane.f32.xlu0 %v534
      %v536 = vpop.xlane.xlu0 %535
      %v537 = vsel %vm473, %v517, 0.0
      %538 = vadd.xlane.f32.xlu0 %v537
      %v539 = vpop.xlane.xlu0 %538
      %v540 = vsel %vm473, %v519, 0.0
      %541 = vadd.xlane.f32.xlu0 %v540
      %v542 = vpop.xlane.xlu0 %541
      %v543 = vsel %vm473, %v521, 0.0
      %544 = vadd.xlane.f32.xlu0 %v543
      %v545 = vpop.xlane.xlu0 %544
      %v546 = vrcp.pop %v524
      %v547 = vrcp.pop %v527
      %v548 = vrcp.pop %v530
      %v549 = vrcp.pop %v533
      %v550 = vrcp.pop %v536
      %v551 = vrcp.pop %v539
      %v552 = vrcp.pop %v542
      %v553 = vrcp.pop %v545
      %v554 = vmul.f32 %v507, %v546
      %v555 = vmul.f32 %v509, %v547
      %v556 = vmul.f32 %v511, %v548
      %v557 = vmul.f32 %v513, %v549
      %v558 = vmul.f32 %v515, %v550
      %v559 = vmul.f32 %v517, %v551
      %v560 = vmul.f32 %v519, %v552
      %v561 = vmul.f32 %v521, %v553
      %v562 = vpack.c.bf16 %v555, %v554
      %v563 = vpack.c.bf16 %v557, %v556
      %v564 = vpack.c.bf16 %v559, %v558
      %v565 = vpack.c.bf16 %v561, %v560
      %v568 = vunpack.c.l.b16 %v228
      %v569 = vunpack.c.l.b16 %v229
      %v570 = vpack.c.b16 %v569, %v568
      %v573 = vsel %vm473, %v562, 0
      %575 = vmatprep.subr.bf16.mxu0 0
      %576 = vmatpush1.bf16.msra.mxu0 %v570
      %577 = vmatprep.subr.bf16.mxu0 0
      %578 = vmatpush1.bf16.msra.mxu0 0
      %579 = vmatprep.subr.bf16.mxu0 0
      %580 = vmatpush1.bf16.msra.mxu0 0
      %581 = vmatprep.subr.bf16.mxu0 0
      %582 = vmatpush1.bf16.msra.mxu0 0
      %583 = vmatprep.subr.bf16.mxu0 0
      %584 = vmatpush1.bf16.msra.mxu0 0
      %585 = vmatprep.subr.bf16.mxu0 0
      %586 = vmatpush1.bf16.msra.mxu0 0
      %587 = vmatprep.subr.bf16.mxu0 0
      %588 = vmatpush1.bf16.msra.mxu0 0
      %589 = vmatprep.subr.bf16.mxu0 0
      %590 = vmatpush1.bf16.msra.mxu0 0
      %591 = vmatprep.subr.bf16.mxu0 0
      %592 = vmatpush1.bf16.msra.mxu0 0
      %593 = vmatprep.subr.bf16.mxu0 0
      %594 = vmatpush1.bf16.msra.mxu0 0
      %595 = vmatprep.subr.bf16.mxu0 0
      %596 = vmatpush1.bf16.msra.mxu0 0
      %597 = vmatprep.subr.bf16.mxu0 0
      %598 = vmatpush1.bf16.msra.mxu0 0
      %599 = vmatprep.subr.bf16.mxu0 0
      %600 = vmatpush1.bf16.msra.mxu0 0
      %601 = vmatprep.subr.bf16.mxu0 0
      %602 = vmatpush1.bf16.msra.mxu0 0
      %603 = vmatprep.subr.bf16.mxu0 0
      %604 = vmatpush1.bf16.msra.mxu0 0
      %605 = vmatprep.subr.bf16.mxu0 0
      %606 = vmatpush1.bf16.msra.mxu0 0
      %607 = vmatprep.mubr.bf16.mxu0 0
      %608 = vmatmul.mubr.bf16.gmra.mrb[0].mxu0 %v573
      %v609 = vpop.f32.mrb[0].mxu0
      %v610 = vadd.f32 0.0, %v609
      %v611 = vpop.f32.mrb[0].mxu0
      %v612 = vpop.f32.mrb[0].mxu0
      %v613 = vadd.f32 0.0, %v612
      %v614 = vpop.f32.mrb[0].mxu0
      %615 = vdwg.mxu0
      %v618 = vunpack.c.l.b16 %v230
      %v619 = vunpack.c.l.b16 %v231
      %v620 = vpack.c.b16 %v619, %v618
      %v623 = vsel %vm473, %v563, 0
      %625 = vmatprep.subr.bf16.mxu0 0
      %626 = vmatpush1.bf16.msra.mxu0 %v620
      %627 = vmatprep.subr.bf16.mxu0 0
      %628 = vmatpush1.bf16.msra.mxu0 0
      %629 = vmatprep.subr.bf16.mxu0 0
      %630 = vmatpush1.bf16.msra.mxu0 0
      %631 = vmatprep.subr.bf16.mxu0 0
      %632 = vmatpush1.bf16.msra.mxu0 0
      %633 = vmatprep.subr.bf16.mxu0 0
      %634 = vmatpush1.bf16.msra.mxu0 0
      %635 = vmatprep.subr.bf16.mxu0 0
      %636 = vmatpush1.bf16.msra.mxu0 0
      %637 = vmatprep.subr.bf16.mxu0 0
      %638 = vmatpush1.bf16.msra.mxu0 0
      %639 = vmatprep.subr.bf16.mxu0 0
      %640 = vmatpush1.bf16.msra.mxu0 0
      %641 = vmatprep.subr.bf16.mxu0 0
      %642 = vmatpush1.bf16.msra.mxu0 0
      %643 = vmatprep.subr.bf16.mxu0 0
      %644 = vmatpush1.bf16.msra.mxu0 0
      %645 = vmatprep.subr.bf16.mxu0 0
      %646 = vmatpush1.bf16.msra.mxu0 0
      %647 = vmatprep.subr.bf16.mxu0 0
      %648 = vmatpush1.bf16.msra.mxu0 0
      %649 = vmatprep.subr.bf16.mxu0 0
      %650 = vmatpush1.bf16.msra.mxu0 0
      %651 = vmatprep.subr.bf16.mxu0 0
      %652 = vmatpush1.bf16.msra.mxu0 0
      %653 = vmatprep.subr.bf16.mxu0 0
      %654 = vmatpush1.bf16.msra.mxu0 0
      %655 = vmatprep.subr.bf16.mxu0 0
      %656 = vmatpush1.bf16.msra.mxu0 0
      %657 = vmatprep.mubr.bf16.mxu0 0
      %658 = vmatmul.mubr.bf16.gmra.mrb[0].mxu0 %v623
      %v659 = vpop.f32.mrb[0].mxu0
      %v660 = vadd.f32 0.0, %v659
      %v661 = vpop.f32.mrb[0].mxu0
      %v662 = vpop.f32.mrb[0].mxu0
      %v663 = vadd.f32 0.0, %v662
      %v664 = vpop.f32.mrb[0].mxu0
      %665 = vdwg.mxu0
      %v668 = vunpack.c.l.b16 %v232
      %v669 = vunpack.c.l.b16 %v233
      %v670 = vpack.c.b16 %v669, %v668
      %v673 = vsel %vm473, %v564, 0
      %675 = vmatprep.subr.bf16.mxu0 0
      %676 = vmatpush1.bf16.msra.mxu0 %v670
      %677 = vmatprep.subr.bf16.mxu0 0
      %678 = vmatpush1.bf16.msra.mxu0 0
      %679 = vmatprep.subr.bf16.mxu0 0
      %680 = vmatpush1.bf16.msra.mxu0 0
      %681 = vmatprep.subr.bf16.mxu0 0
      %682 = vmatpush1.bf16.msra.mxu0 0
      %683 = vmatprep.subr.bf16.mxu0 0
      %684 = vmatpush1.bf16.msra.mxu0 0
      %685 = vmatprep.subr.bf16.mxu0 0
      %686 = vmatpush1.bf16.msra.mxu0 0
      %687 = vmatprep.subr.bf16.mxu0 0
      %688 = vmatpush1.bf16.msra.mxu0 0
      %689 = vmatprep.subr.bf16.mxu0 0
      %690 = vmatpush1.bf16.msra.mxu0 0
      %691 = vmatprep.subr.bf16.mxu0 0
      %692 = vmatpush1.bf16.msra.mxu0 0
      %693 = vmatprep.subr.bf16.mxu0 0
      %694 = vmatpush1.bf16.msra.mxu0 0
      %695 = vmatprep.subr.bf16.mxu0 0
      %696 = vmatpush1.bf16.msra.mxu0 0
      %697 = vmatprep.subr.bf16.mxu0 0
      %698 = vmatpush1.bf16.msra.mxu0 0
      %699 = vmatprep.subr.bf16.mxu0 0
      %700 = vmatpush1.bf16.msra.mxu0 0
      %701 = vmatprep.subr.bf16.mxu0 0
      %702 = vmatpush1.bf16.msra.mxu0 0
      %703 = vmatprep.subr.bf16.mxu0 0
      %704 = vmatpush1.bf16.msra.mxu0 0
      %705 = vmatprep.subr.bf16.mxu0 0
      %706 = vmatpush1.bf16.msra.mxu0 0
      %707 = vmatprep.mubr.bf16.mxu0 0
      %708 = vmatmul.mubr.bf16.gmra.mrb[0].mxu0 %v673
      %v709 = vpop.f32.mrb[0].mxu0
      %v710 = vadd.f32 0.0, %v709
      %v711 = vpop.f32.mrb[0].mxu0
      %v712 = vpop.f32.mrb[0].mxu0
      %v713 = vadd.f32 0.0, %v712
      %v714 = vpop.f32.mrb[0].mxu0
      %715 = vdwg.mxu0
      %v718 = vunpack.c.l.b16 %v234
      %v719 = vunpack.c.l.b16 %v235
      %v720 = vpack.c.b16 %v719, %v718
      %v723 = vsel %vm473, %v565, 0
      %725 = vmatprep.subr.bf16.mxu0 0
      %726 = vmatpush1.bf16.msra.mxu0 %v720
      %727 = vmatprep.subr.bf16.mxu0 0
      %728 = vmatpush1.bf16.msra.mxu0 0
      %729 = vmatprep.subr.bf16.mxu0 0
      %730 = vmatpush1.bf16.msra.mxu0 0
      %731 = vmatprep.subr.bf16.mxu0 0
      %732 = vmatpush1.bf16.msra.mxu0 0
      %733 = vmatprep.subr.bf16.mxu0 0
      %734 = vmatpush1.bf16.msra.mxu0 0
      %735 = vmatprep.subr.bf16.mxu0 0
      %736 = vmatpush1.bf16.msra.mxu0 0
      %737 = vmatprep.subr.bf16.mxu0 0
      %738 = vmatpush1.bf16.msra.mxu0 0
      %739 = vmatprep.subr.bf16.mxu0 0
      %740 = vmatpush1.bf16.msra.mxu0 0
      %741 = vmatprep.subr.bf16.mxu0 0
      %742 = vmatpush1.bf16.msra.mxu0 0
      %743 = vmatprep.subr.bf16.mxu0 0
      %744 = vmatpush1.bf16.msra.mxu0 0
      %745 = vmatprep.subr.bf16.mxu0 0
      %746 = vmatpush1.bf16.msra.mxu0 0
      %747 = vmatprep.subr.bf16.mxu0 0
      %748 = vmatpush1.bf16.msra.mxu0 0
      %749 = vmatprep.subr.bf16.mxu0 0
      %750 = vmatpush1.bf16.msra.mxu0 0
      %751 = vmatprep.subr.bf16.mxu0 0
      %752 = vmatpush1.bf16.msra.mxu0 0
      %753 = vmatprep.subr.bf16.mxu0 0
      %754 = vmatpush1.bf16.msra.mxu0 0
      %755 = vmatprep.subr.bf16.mxu0 0
      %756 = vmatpush1.bf16.msra.mxu0 0
      %757 = vmatprep.mubr.bf16.mxu0 0
      %758 = vmatmul.mubr.bf16.gmra.mrb[0].mxu0 %v723
      %v759 = vpop.f32.mrb[0].mxu0
      %v760 = vadd.f32 0.0, %v759
      %v761 = vpop.f32.mrb[0].mxu0
      %v762 = vpop.f32.mrb[0].mxu0
      %v763 = vadd.f32 0.0, %v762
      %v764 = vpop.f32.mrb[0].mxu0
      %765 = vdwg.mxu0
      %v766 = vpack.c.bf16 %v613, %v610
      %v767 = vpack.c.bf16 %v663, %v660
      %v768 = vpack.c.bf16 %v713, %v710
      %v769 = vpack.c.bf16 %v763, %v760
      %v774 = vunpack.c.l.b16 %v766
      %v775 = vunpack.c.h.b16 %v766
      %v776 = vunpack.c.l.b16 %v767
      %v777 = vunpack.c.h.b16 %v767
      %v778 = vunpack.c.l.b16 %v768
      %v779 = vunpack.c.h.b16 %v768
      %v780 = vunpack.c.l.b16 %v769
      %v781 = vunpack.c.h.b16 %v769
      %v782 = vpack.c.b16 %v774, %v774
      %v783 = vpack.c.b16 %v775, %v775
      %v784 = vpack.c.b16 %v776, %v776
      %v785 = vpack.c.b16 %v777, %v777
      %v786 = vpack.c.b16 %v778, %v778
      %v787 = vpack.c.b16 %v779, %v779
      %v788 = vpack.c.b16 %v780, %v780
      %v789 = vpack.c.b16 %v781, %v781
      %vm798 = vcmask 60416
      %799 = vst.msk [vmem:[%s210] sm:$0xf] %vm798, %v782
      %800 = vst.msk [vmem:[%s210 + $0x4] sm:$0xf] %vm798, %v783
      %801 = vst.msk [vmem:[%s210 + $0x8] sm:$0xf] %vm798, %v784
      %802 = vst.msk [vmem:[%s210 + $0xc] sm:$0xf] %vm798, %v785
      %803 = vst.msk [vmem:[%s210 + $0x10] sm:$0xf] %vm798, %v786
      %804 = vst.msk [vmem:[%s210 + $0x14] sm:$0xf] %vm798, %v787
      %805 = vst.msk [vmem:[%s210 + $0x18] sm:$0xf] %vm798, %v788
      %806 = vst.msk [vmem:[%s210 + $0x1c] sm:$0xf] %vm798, %v789
      %p807 = scmp.lt.s32.totalorder %s14, 1
      %s808 = scalar_select %p807, %s14, 1
      %s809 = smul.addr %s808, 8
      %s810 = smul.addr %s809, 4
      %s811 = scalar_lea.vmem %s3, %s810
      // Predicated region
      $region33: #{_lambda_.22} parent=31 // pred_check
        %p812 = pneg %p110
      $region34: #{_lambda_.22} parent=31 // pred_check_branch
        %814 = sbr.rel (%p812) target = $region36
      $region35: #{_lambda_.22} parent=31 // pred_region
        _
      $region36: #{_lambda_.22} parent=31 // pred_fallthru
        _
    $region32: #{_lambda_.22} parent=5 // pred_fallthru
      _
    %p815 = scmp.le.s32.totalorder 2, %s9
    // Predicated region
    $region37: #{_lambda_.22} parent=5 // pred_check
      %p816 = pneg %p815
    $region38: #{_lambda_.22} parent=5 // pred_check_branch
      %818 = sbr.rel (%p816) target = $region40
    $region39: #{_lambda_.22} parent=5 // pred_region
      %s819 = ssub.s32 %s9, 2
      // Predicated region
      $region41: #{_lambda_.22} parent=39 // pred_check
        %p820 = pneg %p116
      $region42: #{_lambda_.22} parent=39 // pred_check_branch
        %822 = sbr.rel (%p820) target = $region44
      $region43: #{_lambda_.22} parent=39 // pred_region
        %p823 = scmp.lt.s32.totalorder %s15, 1
        %s824 = scalar_select %p823, %s15, 1
        %s825 = smul.addr %s824, 8
        %s826 = smul.addr %s825, 4
        %s827 = scalar_lea.vmem %s3, %s826
      $region44: #{_lambda_.22} parent=39 // pred_fallthru
        _
    $region40: #{_lambda_.22} parent=5 // pred_fallthru
      _
  $region6: #{_lambda_.22} parent=0 // loop_footer
    %s13 = sadd.s32 1, %s9
  $region7: #{_lambda_.22} parent=0 // loop_footer_branch
    %8 = sbr.rel target = $region3
  $region8: #{_lambda_.22} parent=0 // loop_exit
    _

// kernel: _lambda_.29
$region0: #{_lambda_.29}
  #allocation0 [shape = 'u32[]', space=smem, size = 0x4, offset = 0x4, fixed_abs, tag = 'smem constant byte address 0x4 - core index']
  #allocation1 [shape = 'u32[144,128]{1,0:T(1,128)}', space=vmem, size = 0x12000, scoped, tag = 'internal scratch']
  %s0 = inlined_call_operand.vmem [shape: f32[32,32], index: 0, kind: input, shape index: {}]
  %s1 = inlined_call_operand.vmem [shape: f32[1,32], index: 1, kind: input, shape index: {}]
  %s2 = inlined_call_operand.vmem [shape: f32[1,32], index: 2, kind: input, shape index: {}]
  %s3 = inlined_call_operand.hbm [shape: f32[32,32], index: 3, kind: output, shape index: {}]
  %s4 = sld [smem:[#allocation0]]
  $region22: #{_lambda_.29} parent=0
    _
  %s6 = ssub.s32 1, %s4
  %s7 = scalar_select 0, %s6, %s4
  $region1: #{_lambda_.29} parent=0
    #allocation2 [shape = 'u8[16384]{0}', space=vmem, size = 0x4000, scoped, tag = 'output window, operand 0, single buffered']
    #allocation3 [shape = 's32[1]{0}', space=sflag, size = 0x4, scoped, tag = 'scoped memory for _lambda_.29']
    %8 = vsyncpa [#allocation3], 0
    // Predicated region
    $region2: #{_lambda_.29} parent=1 // pred_check
      _
    $region3: #{_lambda_.29} parent=1 // pred_check_branch
      %10 = sbr.rel (0) target = $region5
    $region4: #{_lambda_.29} parent=1 // pred_region
      _
    $region5: #{_lambda_.29} parent=1 // pred_fallthru
      _
    // Predicated region
    $region6: #{_lambda_.29} parent=1 // pred_check
      _
    $region7: #{_lambda_.29} parent=1 // pred_check_branch
      %12 = sbr.rel (0) target = $region9
    $region8: #{_lambda_.29} parent=1 // pred_region
      _
    $region9: #{_lambda_.29} parent=1 // pred_fallthru
      _
    // Predicated region
    $region10: #{_lambda_.29} parent=1 // pred_check
      _
    $region11: #{_lambda_.29} parent=1 // pred_check_branch
      %14 = sbr.rel (0) target = $region13
    $region12: #{_lambda_.29} parent=1 // pred_region
      _
    $region13: #{_lambda_.29} parent=1 // pred_fallthru
      _
    %v15 = vld [vmem:[%s0] sm:$0xff]
    %v16 = vld [vmem:[%s0 + $0x8] sm:$0xff]
    %v17 = vld [vmem:[%s0 + $0x10] sm:$0xff]
    %v18 = vld [vmem:[%s0 + $0x18] sm:$0xff]
    %vm19 = vcmask 261120
    %v20 = vsel %vm19, %v15, 0.0
    %21 = vadd.xlane.f32.xlu0 %v20
    %v22 = vpop.xlane.xlu0 %21
    %v23 = vsel %vm19, %v16, 0.0
    %24 = vadd.xlane.f32.xlu0 %v23
    %v25 = vpop.xlane.xlu0 %24
    %v26 = vsel %vm19, %v17, 0.0
    %27 = vadd.xlane.f32.xlu0 %v26
    %v28 = vpop.xlane.xlu0 %27
    %v29 = vsel %vm19, %v18, 0.0
    %30 = vadd.xlane.f32.xlu0 %v29
    %v31 = vpop.xlane.xlu0 %30
    %v32 = vrcp.pop 32.0
    %v33 = vmul.f32 %v22, %v32
    %v34 = vmul.f32 %v25, %v32
    %v35 = vmul.f32 %v28, %v32
    %v36 = vmul.f32 %v31, %v32
    %v37 = vsub.f32 %v15, %v33
    %v38 = vsub.f32 %v16, %v34
    %v39 = vsub.f32 %v17, %v35
    %v40 = vsub.f32 %v18, %v36
    %v41 = vmul.f32 %v37, %v37
    %v42 = vmul.f32 %v38, %v38
    %v43 = vmul.f32 %v39, %v39
    %v44 = vmul.f32 %v40, %v40
    %v45 = vsel %vm19, %v41, 0.0
    %46 = vadd.xlane.f32.xlu0 %v45
    %v47 = vpop.xlane.xlu0 %46
    %v48 = vsel %vm19, %v42, 0.0
    %49 = vadd.xlane.f32.xlu0 %v48
    %v50 = vpop.xlane.xlu0 %49
    %v51 = vsel %vm19, %v43, 0.0
    %52 = vadd.xlane.f32.xlu0 %v51
    %v53 = vpop.xlane.xlu0 %52
    %v54 = vsel %vm19, %v44, 0.0
    %55 = vadd.xlane.f32.xlu0 %v54
    %v56 = vpop.xlane.xlu0 %55
    %v57 = vmul.f32 %v47, %v32
    %v58 = vmul.f32 %v50, %v32
    %v59 = vmul.f32 %v53, %v32
    %v60 = vmul.f32 %v56, %v32
    %v61 = vadd.f32 %v57, 1e-06
    %v62 = vadd.f32 %v58, 1e-06
    %v63 = vadd.f32 %v59, 1e-06
    %v64 = vadd.f32 %v60, 1e-06
    %v65 = vrsqrt.pop %v61
    %v66 = vrsqrt.pop %v62
    %v67 = vrsqrt.pop %v63
    %v68 = vrsqrt.pop %v64
    %v69 = vmul.f32 %v37, %v65
    %v70 = vmul.f32 %v38, %v66
    %v71 = vmul.f32 %v39, %v67
    %v72 = vmul.f32 %v40, %v68
    %v73 = vld [vmem:[%s1] sm:$0x1]
    %v75 = vlaneseq
    %v76 = vshrl.u32 %v75, 7
    %v77 = vsub.s32 0, %v76
    %v78 = vrot.slane %v73, %v77
    %v80 = vmul.f32 %v69, %v78
    %v81 = vmul.f32 %v70, %v78
    %v82 = vmul.f32 %v71, %v78
    %v83 = vmul.f32 %v72, %v78
    %v84 = vld [vmem:[%s2] sm:$0x1]
    %v86 = vlaneseq
    %v87 = vshrl.u32 %v86, 7
    %v88 = vsub.s32 0, %v87
    %v89 = vrot.slane %v84, %v88
    %v91 = vadd.f32 %v80, %v89
    %v92 = vadd.f32 %v81, %v89
    %v93 = vadd.f32 %v82, %v89
    %v94 = vadd.f32 %v83, %v89
    %95 = vst.msk [vmem:[#allocation2] sm:$0xff] %vm19, %v91
    %96 = vst.msk [vmem:[#allocation2 + $0x8] sm:$0xff] %vm19, %v92
    %97 = vst.msk [vmem:[#allocation2 + $0x10] sm:$0xff] %vm19, %v93
    %98 = vst.msk [vmem:[#allocation2 + $0x18] sm:$0xff] %vm19, %v94
    // Predicated region
    $region14: #{_lambda_.29} parent=1 // pred_check
      _
    $region15: #{_lambda_.29} parent=1 // pred_check_branch
      %100 = sbr.rel (0) target = $region17
    $region16: #{_lambda_.29} parent=1 // pred_region
      %s102 = ssub.s32 512, 512
      %103 = vsyncadd [#allocation3], %s102
      %s104 = sshll.u32 [#allocation2], 4
      %s105 = int_to_ptr.vmem [resolvable:$true] %s104
      %110 = dma.vmem_to_hbm [thread:$0]  %s105, 512, %s3, [#allocation3], 128, 128, 8
    $region17: #{_lambda_.29} parent=1 // pred_fallthru
      _
    // Predicated region
    $region18: #{_lambda_.29} parent=1 // pred_check
      _
    $region19: #{_lambda_.29} parent=1 // pred_check_branch
      %112 = sbr.rel (0) target = $region21
    $region20: #{_lambda_.29} parent=1 // pred_region
      %113 = dma.done [#allocation3], 512
    $region21: #{_lambda_.29} parent=1 // pred_fallthru
      _
    %114 = vsyncpa [#allocation3], 1

// kernel: _lambda_.28
$region0: #{_lambda_.28}
  #allocation0 [shape = 'u32[]', space=smem, size = 0x4, offset = 0x4, fixed_abs, tag = 'smem constant byte address 0x4 - core index']
  #allocation1 [shape = 'u32[144,128]{1,0:T(1,128)}', space=vmem, size = 0x12000, scoped, tag = 'internal scratch']
  %s0 = inlined_call_operand.vmem [shape: bf16[2,6,6,32], index: 0, kind: input, shape index: {}]
  %s1 = inlined_call_operand.vmem [shape: bf16[3,3,32,32], index: 1, kind: input, shape index: {}]
  %s2 = inlined_call_operand.vmem [shape: f32[2,4,4,32], index: 2, kind: output, shape index: {}]
  %s3 = sld [smem:[#allocation0]]
  $region41: #{_lambda_.28} parent=0
    _
  %s5 = ssub.s32 1, %s3
  %s6 = scalar_select 0, %s5, %s3
  loop: start=0, step=1, limit=4
  $region2: #{_lambda_.28} parent=0 // loop_pre_header
    _
  $region3: #{_lambda_.28} parent=0 // loop_header
    %s8 = sphi 0, %s12
    %p9 = scmp.ge.s32.totalorder %s8, 4
    %s18 = sphi 0, %s20
    %s21 = sphi 0, %s18
    %s22 = sphi 0, %s21
    %s38 = sphi 0, %s22
    %s42 = sphi 0, %s42
    %s44 = sphi 0, %s42
    %s45 = sphi 0, %s44
    %s59 = sphi 0, %s45
    %s65 = sphi 0, %s67
    %s68 = sphi 0, %s65
    %s69 = sphi 0, %s68
    %s85 = sphi 0, %s69
  $region4: #{_lambda_.28} parent=0 // loop_header_branch
    %11 = sbr.rel (%p9) target = $region8
  $region5: #{_lambda_.28} parent=0 // loop_body
    %s13 = ssub.s32 %s8, 1
    %s14 = ssub.s32 %s8, 2
    %s15 = sadd.s32 %s8, 1
    %s16 = ssub.s32 %s8, %s15
    %p17 = scmp.eq.s32.totalorder %s16, 0
    %s19 = sadd.s32 %s18, 1
    %s20 = scalar_select %p17, %s18, %s19
    %p23 = pneg %p17
    %p24 = scmp.eq.s32.totalorder %s8, 1
    %p25 = por %p23, %p24
    %p26 = scmp.ne.s32.totalorder %s18, %s21
    %p27 = scmp.eq.s32.totalorder %s8, 0
    %p28 = por %p26, %p27
    %p29 = scmp.ne.s32.totalorder %s18, %s21
    %p30 = scmp.eq.s32.totalorder %s13, 1
    %p31 = por %p29, %p30
    %p32 = scmp.ne.s32.totalorder %s21, %s22
    %p33 = scmp.eq.s32.totalorder %s13, 0
    %p34 = por %p32, %p33
    %p35 = scmp.ne.s32.totalorder %s21, %s22
    %p36 = scmp.eq.s32.totalorder %s14, 1
    %p37 = por %p35, %p36
    %p39 = scmp.ne.s32.totalorder %s22, %s38
    %p40 = scmp.eq.s32.totalorder %s14, 0
    %p41 = por %p39, %p40
    %s43 = sadd.s32 %s42, 1
    %p46 = scmp.eq.s32.totalorder %s8, 1
    %p47 = scmp.ne.s32.totalorder %s42, %s44
    %p48 = scmp.eq.s32.totalorder %s8, 0
    %p49 = por %p47, %p48
    %p50 = scmp.ne.s32.totalorder %s42, %s44
    %p51 = scmp.eq.s32.totalorder %s13, 1
    %p52 = por %p50, %p51
    %p53 = scmp.ne.s32.totalorder %s44, %s45
    %p54 = scmp.eq.s32.totalorder %s13, 0
    %p55 = por %p53, %p54
    %p56 = scmp.ne.s32.totalorder %s44, %s45
    %p57 = scmp.eq.s32.totalorder %s14, 1
    %p58 = por %p56, %p57
    %p60 = scmp.ne.s32.totalorder %s45, %s59
    %p61 = scmp.eq.s32.totalorder %s14, 0
    %p62 = por %p60, %p61
    %s63 = ssub.s32 %s8, %s15
    %p64 = scmp.eq.s32.totalorder %s63, 0
    %s66 = sadd.s32 %s65, 1
    %s67 = scalar_select %p64, %s65, %s66
    %p70 = pneg %p64
    %p71 = scmp.eq.s32.totalorder %s8, 1
    %p72 = por %p70, %p71
    %p73 = scmp.ne.s32.totalorder %s65, %s68
    %p74 = scmp.eq.s32.totalorder %s8, 0
    %p75 = por %p73, %p74
    %p76 = scmp.ne.s32.totalorder %s65, %s68
    %p77 = scmp.eq.s32.totalorder %s13, 1
    %p78 = por %p76, %p77
    %p79 = scmp.ne.s32.totalorder %s68, %s69
    %p80 = scmp.eq.s32.totalorder %s13, 0
    %p81 = por %p79, %p80
    %p82 = scmp.ne.s32.totalorder %s68, %s69
    %p83 = scmp.eq.s32.totalorder %s14, 1
    %p84 = por %p82, %p83
    %p86 = scmp.ne.s32.totalorder %s69, %s85
    %p87 = scmp.eq.s32.totalorder %s14, 0
    %p88 = por %p86, %p87
    %p89 = scmp.le.s32.totalorder 1, %s8
    %p90 = scmp.lt.s32.totalorder %s8, 3
    %p91 = pnand %p89, %p90
    %p92 = pneg %p91
    // Predicated region
    $region9: #{_lambda_.28} parent=5 // pred_check
      _
    $region10: #{_lambda_.28} parent=5 // pred_check_branch
      %94 = sbr.rel (%p91) target = $region12
    $region11: #{_lambda_.28} parent=5 // pred_region
      %s95 = ssub.s32 %s8, 1
      // Predicated region
      $region13: #{_lambda_.28} parent=11 // pred_check
        %p96 = pneg %p55
      $region14: #{_lambda_.28} parent=11 // pred_check_branch
        %98 = sbr.rel (%p96) target = $region16
      $region15: #{_lambda_.28} parent=11 // pred_region
        _
      $region16: #{_lambda_.28} parent=11 // pred_fallthru
        _
    $region12: #{_lambda_.28} parent=5 // pred_fallthru
      _
    %p99 = scmp.lt.s32.totalorder %s8, 2
    // Predicated region
    $region17: #{_lambda_.28} parent=5 // pred_check
      %p100 = pneg %p99
    $region18: #{_lambda_.28} parent=5 // pred_check_branch
      %102 = sbr.rel (%p100) target = $region20
    $region19: #{_lambda_.28} parent=5 // pred_region
      // Predicated region
      $region21: #{_lambda_.28} parent=19 // pred_check
        %p103 = pneg %p28
      $region22: #{_lambda_.28} parent=19 // pred_check_branch
        %105 = sbr.rel (%p103) target = $region24
      $region23: #{_lambda_.28} parent=19 // pred_region
        %p106 = scmp.lt.s32.totalorder %s8, 1
        %s107 = scalar_select %p106, %s8, 1
        %s108 = smul.addr %s107, 6
        %s109 = smul.addr %s108, 4
        %s110 = scalar_lea.vmem %s0, %s109
      $region24: #{_lambda_.28} parent=19 // pred_fallthru
        _
    $region20: #{_lambda_.28} parent=5 // pred_fallthru
      _
    %p111 = scmp.le.s32.totalorder 1, %s8
    %p112 = scmp.lt.s32.totalorder %s8, 3
    %p113 = pnand %p111, %p112
    %p114 = pneg %p113
    // Predicated region
    $region25: #{_lambda_.28} parent=5 // pred_check
      _
    $region26: #{_lambda_.28} parent=5 // pred_check_branch
      %116 = sbr.rel (%p113) target = $region28
    $region27: #{_lambda_.28} parent=5 // pred_region
      %s117 = ssub.s32 %s8, 1
      %p118 = scmp.lt.s32.totalorder %s13, 1
      %s119 = scalar_select %p118, %s13, 1
      %s120 = smul.addr %s119, 6
      %s121 = smul.addr %s120, 4
      %s122 = scalar_lea.vmem %s0, %s121
      %p123 = pneg %p34
      %p124 = pneg %p31
      %p125 = pneg %p55
      %p126 = pneg %p52
      %p127 = pneg %p81
      %p128 = pneg %p78
      %p129 = scmp.lt.s32.totalorder %s13, 1
      %s130 = scalar_select %p129, %s13, 1
      %s131 = smul.addr %s130, 4
      %s132 = smul.addr %s131, 4
      %s133 = scalar_lea.vmem %s2, %s132
      %p134 = scmp.lt.s32.totalorder %s13, 1
      %s135 = scalar_select %p134, %s13, 1
      %s136 = smul.addr %s135, 6
      %s137 = smul.addr %s136, 4
      %s138 = scalar_lea.vmem %s0, %s137
      %p139 = scmp.lt.s32.totalorder %s13, 1
      %s140 = scalar_select %p139, %s13, 1
      %s141 = smul.addr %s140, 4
      %s142 = smul.addr %s141, 4
      %s143 = scalar_lea.vmem %s2, %s142
      %v145 = vld [vmem:[%s138] sm:$0x7]
      %v146 = vld [vmem:[%s138 + $0x4] sm:$0x7]
      %v147 = vld [vmem:[%s138 + $0x8] sm:$0x7]
      %v148 = vld [vmem:[%s138 + $0xc] sm:$0x7]
      %v149 = vld [vmem:[%s138 + $0x10] sm:$0x7]
      %v150 = vld [vmem:[%s138 + $0x14] sm:$0x7]
      %v151 = vld [vmem:[%s1] sm:$0xf]
      %v152 = vld [vmem:[%s1 + $0x4] sm:$0xf]
      %v153 = vld [vmem:[%s1 + $0x8] sm:$0xf]
      %v154 = vld [vmem:[%s1 + $0xc] sm:$0xf]
      %v160 = vunpack.c.l.s4 1983009808
      %v161 = vunpack.c.0.s8 %v160
      %v162 = vlaneseq
      %v163 = vshrl.u32 %v162, 7
      %v164 = vsub.s32 %v161, %v163
      %v165 = vrot.slane %v145, %v164
      %v166 = vcombine.high %v165, %v165
      %v168 = vunpack.c.l.s4 1983009808
      %v169 = vunpack.c.0.s8 %v168
      %v170 = vlaneseq
      %v171 = vshrl.u32 %v170, 7
      %v172 = vsub.s32 %v169, %v171
      %v173 = vrot.slane %v146, %v172
      %v174 = vcombine.high %v173, %v173
      %v176 = vunpack.c.l.s4 1983009808
      %v177 = vunpack.c.0.s8 %v176
      %v178 = vlaneseq
      %v179 = vshrl.u32 %v178, 7
      %v180 = vsub.s32 %v177, %v179
      %v181 = vrot.slane %v147, %v180
      %v182 = vcombine.high %v181, %v181
      %v184 = vunpack.c.l.s4 1983009808
      %v185 = vunpack.c.0.s8 %v184
      %v186 = vlaneseq
      %v187 = vshrl.u32 %v186, 7
      %v188 = vsub.s32 %v185, %v187
      %v189 = vrot.slane %v148, %v188
      %v190 = vcombine.high %v189, %v189
      %vm191 = vsmask.f32 1280
      %vm192 = vsmask.f32 3336
      %vm193 = vmor %vm191, %vm192
      %vm194 = vsmask.f32 5392
      %vm195 = vmor %vm193, %vm194
      %vm196 = vsmask.f32 7448
      %vm197 = vmor %vm195, %vm196
      %v199 = vshrl.u32 %v165, 16
      %v201 = vrot.slane %v199, 6
      %v202 = vshll.u32 %v165, 16
      %v204 = vrot.slane %v202, 7
      %v205 = vor.u32 %v201, %v204
      %v206 = vrot.slane %v205, 2
      %v208 = vshll.u32 %v166, 16
      %v210 = vrot.slane %v208, 7
      %v211 = vsel %vm197, %v206, %v210
      %v213 = vshrl.u32 %v173, 16
      %v215 = vrot.slane %v213, 6
      %v216 = vshll.u32 %v173, 16
      %v218 = vrot.slane %v216, 7
      %v219 = vor.u32 %v215, %v218
      %v220 = vrot.slane %v219, 2
      %v222 = vshll.u32 %v174, 16
      %v224 = vrot.slane %v222, 7
      %v225 = vsel %vm197, %v220, %v224
      %v227 = vshrl.u32 %v181, 16
      %v229 = vrot.slane %v227, 6
      %v230 = vshll.u32 %v181, 16
      %v232 = vrot.slane %v230, 7
      %v233 = vor.u32 %v229, %v232
      %v234 = vrot.slane %v233, 2
      %v236 = vshll.u32 %v182, 16
      %v238 = vrot.slane %v236, 7
      %v239 = vsel %vm197, %v234, %v238
      %v241 = vshrl.u32 %v189, 16
      %v243 = vrot.slane %v241, 6
      %v244 = vshll.u32 %v189, 16
      %v246 = vrot.slane %v244, 7
      %v247 = vor.u32 %v243, %v246
      %v248 = vrot.slane %v247, 2
      %v250 = vshll.u32 %v190, 16
      %v252 = vrot.slane %v250, 7
      %v253 = vsel %vm197, %v248, %v252
      %s254 = scalar_lea.vmem %s1, 16
      %v255 = vld [vmem:[%s254] sm:$0xf]
      %v256 = vld [vmem:[%s254 + $0x4] sm:$0xf]
      %v257 = vld [vmem:[%s254 + $0x8] sm:$0xf]
      %v258 = vld [vmem:[%s254 + $0xc] sm:$0xf]
      %v259 = vcombine.low %v211, %v225
      %v260 = vcombine.low %v239, %v253
      %v262 = vunpack.c.l.s4 1983009808
      %v263 = vunpack.c.0.s8 %v262
      %v264 = vlaneseq
      %v265 = vshrl.u32 %v264, 7
      %v266 = vsub.s32 %v263, %v265
      %v267 = vrot.slane %v259, %v266
      %v269 = vunpack.c.l.s4 1983009808
      %v270 = vunpack.c.0.s8 %v269
      %v271 = vlaneseq
      %v272 = vshrl.u32 %v271, 7
      %v273 = vsub.s32 %v270, %v272
      %v274 = vrot.slane %v260, %v273
      %v275 = vcombine.low %v267, %v274
      %v280 = vunpack.c.l.b16 %v255
      %v281 = vunpack.c.l.b16 %v256
      %v282 = vunpack.c.l.b16 %v257
      %v283 = vunpack.c.l.b16 %v258
      %v284 = vpack.c.b16 %v281, %v280
      %v285 = vpack.c.b16 %v283, %v282
      %vm288 = vcmask 261120
      %v290 = vsel %vm288, %v275, 0
      %292 = vmatprep.subr.bf16.mxu0 0
      %293 = vmatpush1.bf16.msra.mxu0 %v284
      %294 = vmatprep.subr.bf16.mxu0 0
      %295 = vmatpush1.bf16.msra.mxu0 %v285
      %296 = vmatprep.subr.bf16.mxu0 0
      %297 = vmatpush1.bf16.msra.mxu0 0
      %298 = vmatprep.subr.bf16.mxu0 0
      %299 = vmatpush1.bf16.msra.mxu0 0
      %300 = vmatprep.subr.bf16.mxu0 0
      %301 = vmatpush1.bf16.msra.mxu0 0
      %302 = vmatprep.subr.bf16.mxu0 0
      %303 = vmatpush1.bf16.msra.mxu0 0
      %304 = vmatprep.subr.bf16.mxu0 0
      %305 = vmatpush1.bf16.msra.mxu0 0
      %306 = vmatprep.subr.bf16.mxu0 0
      %307 = vmatpush1.bf16.msra.mxu0 0
      %308 = vmatprep.subr.bf16.mxu0 0
      %309 = vmatpush1.bf16.msra.mxu0 0
      %310 = vmatprep.subr.bf16.mxu0 0
      %311 = vmatpush1.bf16.msra.mxu0 0
      %312 = vmatprep.subr.bf16.mxu0 0
      %313 = vmatpush1.bf16.msra.mxu0 0
      %314 = vmatprep.subr.bf16.mxu0 0
      %315 = vmatpush1.bf16.msra.mxu0 0
      %316 = vmatprep.subr.bf16.mxu0 0
      %317 = vmatpush1.bf16.msra.mxu0 0
      %318 = vmatprep.subr.bf16.mxu0 0
      %319 = vmatpush1.bf16.msra.mxu0 0
      %320 = vmatprep.subr.bf16.mxu0 0
      %321 = vmatpush1.bf16.msra.mxu0 0
      %322 = vmatprep.subr.bf16.mxu0 0
      %323 = vmatpush1.bf16.msra.mxu0 0
      %324 = vmatprep.mubr.bf16.mxu0 0
      %325 = vmatmul.mubr.bf16.gmra.mrb[0].mxu0 %v290
      %v326 = vpop.f32.mrb[0].mxu0
      %v327 = vadd.f32 0.0, %v326
      %v328 = vpop.f32.mrb[0].mxu0
      %v329 = vpop.f32.mrb[0].mxu0
      %v330 = vadd.f32 0.0, %v329
      %v331 = vpop.f32.mrb[0].mxu0
      %332 = vdwg.mxu0
      %v333 = vcombine.low %v145, %v146
      %v334 = vcombine.low %v147, %v148
      %v336 = vunpack.c.l.s4 1983009808
      %v337 = vunpack.c.0.s8 %v336
      %v338 = vlaneseq
      %v339 = vshrl.u32 %v338, 7
      %v340 = vsub.s32 %v337, %v339
      %v341 = vrot.slane %v333, %v340
      %v343 = vunpack.c.l.s4 1983009808
      %v344 = vunpack.c.0.s8 %v343
      %v345 = vlaneseq
      %v346 = vshrl.u32 %v345, 7
      %v347 = vsub.s32 %v344, %v346
      %v348 = vrot.slane %v334, %v347
      %v349 = vcombine.low %v341, %v348
      %v354 = vunpack.c.l.b16 %v151
      %v355 = vunpack.c.l.b16 %v152
      %v356 = vunpack.c.l.b16 %v153
      %v357 = vunpack.c.l.b16 %v154
      %v358 = vpack.c.b16 %v355, %v354
      %v359 = vpack.c.b16 %v357, %v356
      %v363 = vsel %vm288, %v349, 0
      %365 = vmatprep.subr.bf16.mxu0 0
      %366 = vmatpush1.bf16.msra.mxu0 %v358
      %367 = vmatprep.subr.bf16.mxu0 0
      %368 = vmatpush1.bf16.msra.mxu0 %v359
      %369 = vmatprep.subr.bf16.mxu0 0
      %370 = vmatpush1.bf16.msra.mxu0 0
      %371 = vmatprep.subr.bf16.mxu0 0
      %372 = vmatpush1.bf16.msra.mxu0 0
      %373 = vmatprep.subr.bf16.mxu0 0
      %374 = vmatpush1.bf16.msra.mxu0 0
      %375 = vmatprep.subr.bf16.mxu0 0
      %376 = vmatpush1.bf16.msra.mxu0 0
      %377 = vmatprep.subr.bf16.mxu0 0
      %378 = vmatpush1.bf16.msra.mxu0 0
      %379 = vmatprep.subr.bf16.mxu0 0
      %380 = vmatpush1.bf16.msra.mxu0 0
      %381 = vmatprep.subr.bf16.mxu0 0
      %382 = vmatpush1.bf16.msra.mxu0 0
      %383 = vmatprep.subr.bf16.mxu0 0
      %384 = vmatpush1.bf16.msra.mxu0 0
      %385 = vmatprep.subr.bf16.mxu0 0
      %386 = vmatpush1.bf16.msra.mxu0 0
      %387 = vmatprep.subr.bf16.mxu0 0
      %388 = vmatpush1.bf16.msra.mxu0 0
      %389 = vmatprep.subr.bf16.mxu0 0
      %390 = vmatpush1.bf16.msra.mxu0 0
      %391 = vmatprep.subr.bf16.mxu0 0
      %392 = vmatpush1.bf16.msra.mxu0 0
      %393 = vmatprep.subr.bf16.mxu0 0
      %394 = vmatpush1.bf16.msra.mxu0 0
      %395 = vmatprep.subr.bf16.mxu0 0
      %396 = vmatpush1.bf16.msra.mxu0 0
      %397 = vmatprep.mubr.bf16.mxu0 0
      %398 = vmatmul.mubr.bf16.gmra.mrb[0].mxu0 %v363
      %v399 = vpop.f32.mrb[0].mxu0
      %v400 = vadd.f32 %v327, %v399
      %v401 = vpop.f32.mrb[0].mxu0
      %v402 = vpop.f32.mrb[0].mxu0
      %v403 = vadd.f32 %v330, %v402
      %v404 = vpop.f32.mrb[0].mxu0
      %405 = vdwg.mxu0
      %vm406 = vcmask 1040384
      %vm407 = vcmask 1042434
      %vm408 = vmor %vm406, %vm407
      %vm409 = vcmask 1044484
      %vm410 = vmor %vm408, %vm409
      %vm411 = vcmask 1046534
      %vm412 = vmor %vm410, %vm411
      %v413 = vrot.slane %v165, 7
      %v414 = vrot.slane %v413, 2
      %v415 = vrot.slane %v166, 7
      %v416 = vsel %vm412, %v414, %v415
      %v417 = vrot.slane %v173, 7
      %v418 = vrot.slane %v417, 2
      %v419 = vrot.slane %v174, 7
      %v420 = vsel %vm412, %v418, %v419
      %v421 = vrot.slane %v181, 7
      %v422 = vrot.slane %v421, 2
      %v423 = vrot.slane %v182, 7
      %v424 = vsel %vm412, %v422, %v423
      %v425 = vrot.slane %v189, 7
      %v426 = vrot.slane %v425, 2
      %v427 = vrot.slane %v190, 7
      %v428 = vsel %vm412, %v426, %v427
      %s429 = scalar_lea.vmem %s1, 32
      %v430 = vld [vmem:[%s429] sm:$0xf]
      %v431 = vld [vmem:[%s429 + $0x4] sm:$0xf]
      %v432 = vld [vmem:[%s429 + $0x8] sm:$0xf]
      %v433 = vld [vmem:[%s429 + $0xc] sm:$0xf]
      %v434 = vcombine.low %v416, %v420
      %v435 = vcombine.low %v424, %v428
      %v437 = vunpack.c.l.s4 1983009808
      %v438 = vunpack.c.0.s8 %v437
      %v439 = vlaneseq
      %v440 = vshrl.u32 %v439, 7
      %v441 = vsub.s32 %v438, %v440
      %v442 = vrot.slane %v434, %v441
      %v444 = vunpack.c.l.s4 1983009808
      %v445 = vunpack.c.0.s8 %v444
      %v446 = vlaneseq
      %v447 = vshrl.u32 %v446, 7
      %v448 = vsub.s32 %v445, %v447
      %v449 = vrot.slane %v435, %v448
      %v450 = vcombine.low %v442, %v449
      %v455 = vunpack.c.l.b16 %v430
      %v456 = vunpack.c.l.b16 %v431
      %v457 = vunpack.c.l.b16 %v432
      %v458 = vunpack.c.l.b16 %v433
      %v459 = vpack.c.b16 %v456, %v455
      %v460 = vpack.c.b16 %v458, %v457
      %v464 = vsel %vm288, %v450, 0
      %466 = vmatprep.subr.bf16.mxu0 0
      %467 = vmatpush1.bf16.msra.mxu0 %v459
      %468 = vmatprep.subr.bf16.mxu0 0
      %469 = vmatpush1.bf16.msra.mxu0 %v460
      %470 = vmatprep.subr.bf16.mxu0 0
      %471 = vmatpush1.bf16.msra.mxu0 0
      %472 = vmatprep.subr.bf16.mxu0 0
      %473 = vmatpush1.bf16.msra.mxu0 0
      %474 = vmatprep.subr.bf16.mxu0 0
      %475 = vmatpush1.bf16.msra.mxu0 0
      %476 = vmatprep.subr.bf16.mxu0 0
      %477 = vmatpush1.bf16.msra.mxu0 0
      %478 = vmatprep.subr.bf16.mxu0 0
      %479 = vmatpush1.bf16.msra.mxu0 0
      %480 = vmatprep.subr.bf16.mxu0 0
      %481 = vmatpush1.bf16.msra.mxu0 0
      %482 = vmatprep.subr.bf16.mxu0 0
      %483 = vmatpush1.bf16.msra.mxu0 0
      %484 = vmatprep.subr.bf16.mxu0 0
      %485 = vmatpush1.bf16.msra.mxu0 0
      %486 = vmatprep.subr.bf16.mxu0 0
      %487 = vmatpush1.bf16.msra.mxu0 0
      %488 = vmatprep.subr.bf16.mxu0 0
      %489 = vmatpush1.bf16.msra.mxu0 0
      %490 = vmatprep.subr.bf16.mxu0 0
      %491 = vmatpush1.bf16.msra.mxu0 0
      %492 = vmatprep.subr.bf16.mxu0 0
      %493 = vmatpush1.bf16.msra.mxu0 0
      %494 = vmatprep.subr.bf16.mxu0 0
      %495 = vmatpush1.bf16.msra.mxu0 0
      %496 = vmatprep.subr.bf16.mxu0 0
      %497 = vmatpush1.bf16.msra.mxu0 0
      %498 = vmatprep.mubr.bf16.mxu0 0
      %499 = vmatmul.mubr.bf16.gmra.mrb[0].mxu0 %v464
      %v500 = vpop.f32.mrb[0].mxu0
      %v501 = vadd.f32 0.0, %v500
      %v502 = vpop.f32.mrb[0].mxu0
      %v503 = vpop.f32.mrb[0].mxu0
      %v504 = vadd.f32 0.0, %v503
      %v505 = vpop.f32.mrb[0].mxu0
      %506 = vdwg.mxu0
      %v507 = vadd.f32 %v400, %v501
      %v508 = vadd.f32 %v403, %v504
      %s509 = scalar_lea.vmem %s1, 48
      %v510 = vld [vmem:[%s509] sm:$0xf]
      %v511 = vld [vmem:[%s509 + $0x4] sm:$0xf]
      %v512 = vld [vmem:[%s509 + $0x8] sm:$0xf]
      %v513 = vld [vmem:[%s509 + $0xc] sm:$0xf]
      %v515 = vcombine.low %v146, %v147
      %v516 = vcombine.low %v148, %v149
      %v518 = vunpack.c.l.s4 1983009808
      %v519 = vunpack.c.0.s8 %v518
      %v520 = vlaneseq
      %v521 = vshrl.u32 %v520, 7
      %v522 = vsub.s32 %v519, %v521
      %v523 = vrot.slane %v515, %v522
      %v525 = vunpack.c.l.s4 1983009808
      %v526 = vunpack.c.0.s8 %v525
      %v527 = vlaneseq
      %v528 = vshrl.u32 %v527, 7
      %v529 = vsub.s32 %v526, %v528
      %v530 = vrot.slane %v516, %v529
      %v531 = vcombine.low %v523, %v530
      %v536 = vunpack.c.l.b16 %v510
      %v537 = vunpack.c.l.b16 %v511
      %v538 = vunpack.c.l.b16 %v512
      %v539 = vunpack.c.l.b16 %v513
      %v540 = vpack.c.b16 %v537, %v536
      %v541 = vpack.c.b16 %v539, %v538
      %v545 = vsel %vm288, %v531, 0
      %547 = vmatprep.subr.bf16.mxu0 0
      %548 = vmatpush1.bf16.msra.mxu0 %v540
      %549 = vmatprep.subr.bf16.mxu0 0
      %550 = vmatpush1.bf16.msra.mxu0 %v541
      %551 = vmatprep.subr.bf16.mxu0 0
      %552 = vmatpush1.bf16.msra.mxu0 0
      %553 = vmatprep.subr.bf16.mxu0 0
      %554 = vmatpush1.bf16.msra.mxu0 0
      %555 = vmatprep.subr.bf16.mxu0 0
      %556 = vmatpush1.bf16.msra.mxu0 0
      %557 = vmatprep.subr.bf16.mxu0 0
      %558 = vmatpush1.bf16.msra.mxu0 0
      %559 = vmatprep.subr.bf16.mxu0 0
      %560 = vmatpush1.bf16.msra.mxu0 0
      %561 = vmatprep.subr.bf16.mxu0 0
      %562 = vmatpush1.bf16.msra.mxu0 0
      %563 = vmatprep.subr.bf16.mxu0 0
      %564 = vmatpush1.bf16.msra.mxu0 0
      %565 = vmatprep.subr.bf16.mxu0 0
      %566 = vmatpush1.bf16.msra.mxu0 0
      %567 = vmatprep.subr.bf16.mxu0 0
      %568 = vmatpush1.bf16.msra.mxu0 0
      %569 = vmatprep.subr.bf16.mxu0 0
      %570 = vmatpush1.bf16.msra.mxu0 0
      %571 = vmatprep.subr.bf16.mxu0 0
      %572 = vmatpush1.bf16.msra.mxu0 0
      %573 = vmatprep.subr.bf16.mxu0 0
      %574 = vmatpush1.bf16.msra.mxu0 0
      %575 = vmatprep.subr.bf16.mxu0 0
      %576 = vmatpush1.bf16.msra.mxu0 0
      %577 = vmatprep.subr.bf16.mxu0 0
      %578 = vmatpush1.bf16.msra.mxu0 0
      %579 = vmatprep.mubr.bf16.mxu0 0
      %580 = vmatmul.mubr.bf16.gmra.mrb[0].mxu0 %v545
      %v581 = vpop.f32.mrb[0].mxu0
      %v582 = vadd.f32 0.0, %v581
      %v583 = vpop.f32.mrb[0].mxu0
      %v584 = vpop.f32.mrb[0].mxu0
      %v585 = vadd.f32 0.0, %v584
      %v586 = vpop.f32.mrb[0].mxu0
      %587 = vdwg.mxu0
      %v588 = vadd.f32 %v507, %v582
      %v589 = vadd.f32 %v508, %v585
      %v591 = vunpack.c.l.s4 1983009808
      %v592 = vunpack.c.0.s8 %v591
      %v593 = vlaneseq
      %v594 = vshrl.u32 %v593, 7
      %v595 = vsub.s32 %v592, %v594
      %v596 = vrot.slane %v149, %v595
      %v597 = vcombine.high %v596, %v596
      %v599 = vshrl.u32 %v596, 16
      %v601 = vrot.slane %v599, 6
      %v602 = vshll.u32 %v596, 16
      %v604 = vrot.slane %v602, 7
      %v605 = vor.u32 %v601, %v604
      %v606 = vrot.slane %v605, 2
      %v608 = vshll.u32 %v597, 16
      %v610 = vrot.slane %v608, 7
      %v611 = vsel %vm197, %v606, %v610
      %s612 = scalar_lea.vmem %s1, 64
      %v613 = vld [vmem:[%s612] sm:$0xf]
      %v614 = vld [vmem:[%s612 + $0x4] sm:$0xf]
      %v615 = vld [vmem:[%s612 + $0x8] sm:$0xf]
      %v616 = vld [vmem:[%s612 + $0xc] sm:$0xf]
      %v617 = vcombine.low %v225, %v239
      %v618 = vcombine.low %v253, %v611
      %v620 = vunpack.c.l.s4 1983009808
      %v621 = vunpack.c.0.s8 %v620
      %v622 = vlaneseq
      %v623 = vshrl.u32 %v622, 7
      %v624 = vsub.s32 %v621, %v623
      %v625 = vrot.slane %v617, %v624
      %v627 = vunpack.c.l.s4 1983009808
      %v628 = vunpack.c.0.s8 %v627
      %v629 = vlaneseq
      %v630 = vshrl.u32 %v629, 7
      %v631 = vsub.s32 %v628, %v630
      %v632 = vrot.slane %v618, %v631
      %v633 = vcombine.low %v625, %v632
      %v638 = vunpack.c.l.b16 %v613
      %v639 = vunpack.c.l.b16 %v614
      %v640 = vunpack.c.l.b16 %v615
      %v641 = vunpack.c.l.b16 %v616
      %v642 = vpack.c.b16 %v639, %v638
      %v643 = vpack.c.b16 %v641, %v640
      %v647 = vsel %vm288, %v633, 0
      %649 = vmatprep.subr.bf16.mxu0 0
      %650 = vmatpush1.bf16.msra.mxu0 %v642
      %651 = vmatprep.subr.bf16.mxu0 0
      %652 = vmatpush1.bf16.msra.mxu0 %v643
      %653 = vmatprep.subr.bf16.mxu0 0
      %654 = vmatpush1.bf16.msra.mxu0 0
      %655 = vmatprep.subr.bf16.mxu0 0
      %656 = vmatpush1.bf16.msra.mxu0 0
      %657 = vmatprep.subr.bf16.mxu0 0
      %658 = vmatpush1.bf16.msra.mxu0 0
      %659 = vmatprep.subr.bf16.mxu0 0
      %660 = vmatpush1.bf16.msra.mxu0 0
      %661 = vmatprep.subr.bf16.mxu0 0
      %662 = vmatpush1.bf16.msra.mxu0 0
      %663 = vmatprep.subr.bf16.mxu0 0
      %664 = vmatpush1.bf16.msra.mxu0 0
      %665 = vmatprep.subr.bf16.mxu0 0
      %666 = vmatpush1.bf16.msra.mxu0 0
      %667 = vmatprep.subr.bf16.mxu0 0
      %668 = vmatpush1.bf16.msra.mxu0 0
      %669 = vmatprep.subr.bf16.mxu0 0
      %670 = vmatpush1.bf16.msra.mxu0 0
      %671 = vmatprep.subr.bf16.mxu0 0
      %672 = vmatpush1.bf16.msra.mxu0 0
      %673 = vmatprep.subr.bf16.mxu0 0
      %674 = vmatpush1.bf16.msra.mxu0 0
      %675 = vmatprep.subr.bf16.mxu0 0
      %676 = vmatpush1.bf16.msra.mxu0 0
      %677 = vmatprep.subr.bf16.mxu0 0
      %678 = vmatpush1.bf16.msra.mxu0 0
      %679 = vmatprep.subr.bf16.mxu0 0
      %680 = vmatpush1.bf16.msra.mxu0 0
      %681 = vmatprep.mubr.bf16.mxu0 0
      %682 = vmatmul.mubr.bf16.gmra.mrb[0].mxu0 %v647
      %v683 = vpop.f32.mrb[0].mxu0
      %v684 = vadd.f32 0.0, %v683
      %v685 = vpop.f32.mrb[0].mxu0
      %v686 = vpop.f32.mrb[0].mxu0
      %v687 = vadd.f32 0.0, %v686
      %v688 = vpop.f32.mrb[0].mxu0
      %689 = vdwg.mxu0
      %v690 = vadd.f32 %v588, %v684
      %v691 = vadd.f32 %v589, %v687
      %v692 = vrot.slane %v596, 7
      %v693 = vrot.slane %v692, 2
      %v694 = vrot.slane %v597, 7
      %v695 = vsel %vm412, %v693, %v694
      %s696 = scalar_lea.vmem %s1, 80
      %v697 = vld [vmem:[%s696] sm:$0xf]
      %v698 = vld [vmem:[%s696 + $0x4] sm:$0xf]
      %v699 = vld [vmem:[%s696 + $0x8] sm:$0xf]
      %v700 = vld [vmem:[%s696 + $0xc] sm:$0xf]
      %v701 = vcombine.low %v420, %v424
      %v702 = vcombine.low %v428, %v695
      %v704 = vunpack.c.l.s4 1983009808
      %v705 = vunpack.c.0.s8 %v704
      %v706 = vlaneseq
      %v707 = vshrl.u32 %v706, 7
      %v708 = vsub.s32 %v705, %v707
      %v709 = vrot.slane %v701, %v708
      %v711 = vunpack.c.l.s4 1983009808
      %v712 = vunpack.c.0.s8 %v711
      %v713 = vlaneseq
      %v714 = vshrl.u32 %v713, 7
      %v715 = vsub.s32 %v712, %v714
      %v716 = vrot.slane %v702, %v715
      %v717 = vcombine.low %v709, %v716
      %v722 = vunpack.c.l.b16 %v697
      %v723 = vunpack.c.l.b16 %v698
      %v724 = vunpack.c.l.b16 %v699
      %v725 = vunpack.c.l.b16 %v700
      %v726 = vpack.c.b16 %v723, %v722
      %v727 = vpack.c.b16 %v725, %v724
      %v731 = vsel %vm288, %v717, 0
      %733 = vmatprep.subr.bf16.mxu0 0
      %734 = vmatpush1.bf16.msra.mxu0 %v726
      %735 = vmatprep.subr.bf16.mxu0 0
      %736 = vmatpush1.bf16.msra.mxu0 %v727
      %737 = vmatprep.subr.bf16.mxu0 0
      %738 = vmatpush1.bf16.msra.mxu0 0
      %739 = vmatprep.subr.bf16.mxu0 0
      %740 = vmatpush1.bf16.msra.mxu0 0
      %741 = vmatprep.subr.bf16.mxu0 0
      %742 = vmatpush1.bf16.msra.mxu0 0
      %743 = vmatprep.subr.bf16.mxu0 0
      %744 = vmatpush1.bf16.msra.mxu0 0
      %745 = vmatprep.subr.bf16.mxu0 0
      %746 = vmatpush1.bf16.msra.mxu0 0
      %747 = vmatprep.subr.bf16.mxu0 0
      %748 = vmatpush1.bf16.msra.mxu0 0
      %749 = vmatprep.subr.bf16.mxu0 0
      %750 = vmatpush1.bf16.msra.mxu0 0
      %751 = vmatprep.subr.bf16.mxu0 0
      %752 = vmatpush1.bf16.msra.mxu0 0
      %753 = vmatprep.subr.bf16.mxu0 0
      %754 = vmatpush1.bf16.msra.mxu0 0
      %755 = vmatprep.subr.bf16.mxu0 0
      %756 = vmatpush1.bf16.msra.mxu0 0
      %757 = vmatprep.subr.bf16.mxu0 0
      %758 = vmatpush1.bf16.msra.mxu0 0
      %759 = vmatprep.subr.bf16.mxu0 0
      %760 = vmatpush1.bf16.msra.mxu0 0
      %761 = vmatprep.subr.bf16.mxu0 0
      %762 = vmatpush1.bf16.msra.mxu0 0
      %763 = vmatprep.subr.bf16.mxu0 0
      %764 = vmatpush1.bf16.msra.mxu0 0
      %765 = vmatprep.mubr.bf16.mxu0 0
      %766 = vmatmul.mubr.bf16.gmra.mrb[0].mxu0 %v731
      %v767 = vpop.f32.mrb[0].mxu0
      %v768 = vadd.f32 0.0, %v767
      %v769 = vpop.f32.mrb[0].mxu0
      %v770 = vpop.f32.mrb[0].mxu0
      %v771 = vadd.f32 0.0, %v770
      %v772 = vpop.f32.mrb[0].mxu0
      %773 = vdwg.mxu0
      %v774 = vadd.f32 %v690, %v768
      %v775 = vadd.f32 %v691, %v771
      %s776 = scalar_lea.vmem %s1, 96
      %v777 = vld [vmem:[%s776] sm:$0xf]
      %v778 = vld [vmem:[%s776 + $0x4] sm:$0xf]
      %v779 = vld [vmem:[%s776 + $0x8] sm:$0xf]
      %v780 = vld [vmem:[%s776 + $0xc] sm:$0xf]
      %v782 = vcombine.low %v149, %v150
      %v784 = vunpack.c.l.s4 1983009808
      %v785 = vunpack.c.0.s8 %v784
      %v786 = vlaneseq
      %v787 = vshrl.u32 %v786, 7
      %v788 = vsub.s32 %v785, %v787
      %v789 = vrot.slane %v782, %v788
      %v790 = vcombine.low %v348, %v789
      %v795 = vunpack.c.l.b16 %v777
      %v796 = vunpack.c.l.b16 %v778
      %v797 = vunpack.c.l.b16 %v779
      %v798 = vunpack.c.l.b16 %v780
      %v799 = vpack.c.b16 %v796, %v795
      %v800 = vpack.c.b16 %v798, %v797
      %v804 = vsel %vm288, %v790, 0
      %806 = vmatprep.subr.bf16.mxu0 0
      %807 = vmatpush1.bf16.msra.mxu0 %v799
      %808 = vmatprep.subr.bf16.mxu0 0
      %809 = vmatpush1.bf16.msra.mxu0 %v800
      %810 = vmatprep.subr.bf16.mxu0 0
      %811 = vmatpush1.bf16.msra.mxu0 0
      %812 = vmatprep.subr.bf16.mxu0 0
      %813 = vmatpush1.bf16.msra.mxu0 0
      %814 = vmatprep.subr.bf16.mxu0 0
      %815 = vmatpush1.bf16.msra.mxu0 0
      %816 = vmatprep.subr.bf16.mxu0 0
      %817 = vmatpush1.bf16.msra.mxu0 0
      %818 = vmatprep.subr.bf16.mxu0 0
      %819 = vmatpush1.bf16.msra.mxu0 0
      %820 = vmatprep.subr.bf16.mxu0 0
      %821 = vmatpush1.bf16.msra.mxu0 0
      %822 = vmatprep.subr.bf16.mxu0 0
      %823 = vmatpush1.bf16.msra.mxu0 0
      %824 = vmatprep.subr.bf16.mxu0 0
      %825 = vmatpush1.bf16.msra.mxu0 0
      %826 = vmatprep.subr.bf16.mxu0 0
      %827 = vmatpush1.bf16.msra.mxu0 0
      %828 = vmatprep.subr.bf16.mxu0 0
      %829 = vmatpush1.bf16.msra.mxu0 0
      %830 = vmatprep.subr.bf16.mxu0 0
      %831 = vmatpush1.bf16.msra.mxu0 0
      %832 = vmatprep.subr.bf16.mxu0 0
      %833 = vmatpush1.bf16.msra.mxu0 0
      %834 = vmatprep.subr.bf16.mxu0 0
      %835 = vmatpush1.bf16.msra.mxu0 0
      %836 = vmatprep.subr.bf16.mxu0 0
      %837 = vmatpush1.bf16.msra.mxu0 0
      %838 = vmatprep.mubr.bf16.mxu0 0
      %839 = vmatmul.mubr.bf16.gmra.mrb[0].mxu0 %v804
      %v840 = vpop.f32.mrb[0].mxu0
      %v841 = vadd.f32 0.0, %v840
      %v842 = vpop.f32.mrb[0].mxu0
      %v843 = vpop.f32.mrb[0].mxu0
      %v844 = vadd.f32 0.0, %v843
      %v845 = vpop.f32.mrb[0].mxu0
      %846 = vdwg.mxu0
      %v847 = vadd.f32 %v774, %v841
      %v848 = vadd.f32 %v775, %v844
      %v850 = vunpack.c.l.s4 1983009808
      %v851 = vunpack.c.0.s8 %v850
      %v852 = vlaneseq
      %v853 = vshrl.u32 %v852, 7
      %v854 = vsub.s32 %v851, %v853
      %v855 = vrot.slane %v150, %v854
      %v856 = vcombine.high %v855, %v855
      %v858 = vshrl.u32 %v855, 16
      %v860 = vrot.slane %v858, 6
      %v861 = vshll.u32 %v855, 16
      %v863 = vrot.slane %v861, 7
      %v864 = vor.u32 %v860, %v863
      %v865 = vrot.slane %v864, 2
      %v867 = vshll.u32 %v856, 16
      %v869 = vrot.slane %v867, 7
      %v870 = vsel %vm197, %v865, %v869
      %s871 = scalar_lea.vmem %s1, 112
      %v872 = vld [vmem:[%s871] sm:$0xf]
      %v873 = vld [vmem:[%s871 + $0x4] sm:$0xf]
      %v874 = vld [vmem:[%s871 + $0x8] sm:$0xf]
      %v875 = vld [vmem:[%s871 + $0xc] sm:$0xf]
      %v876 = vcombine.low %v611, %v870
      %v878 = vunpack.c.l.s4 1983009808
      %v879 = vunpack.c.0.s8 %v878
      %v880 = vlaneseq
      %v881 = vshrl.u32 %v880, 7
      %v882 = vsub.s32 %v879, %v881
      %v883 = vrot.slane %v876, %v882
      %v884 = vcombine.low %v274, %v883
      %v889 = vunpack.c.l.b16 %v872
      %v890 = vunpack.c.l.b16 %v873
      %v891 = vunpack.c.l.b16 %v874
      %v892 = vunpack.c.l.b16 %v875
      %v893 = vpack.c.b16 %v890, %v889
      %v894 = vpack.c.b16 %v892, %v891
      %v898 = vsel %vm288, %v884, 0
      %900 = vmatprep.subr.bf16.mxu0 0
      %901 = vmatpush1.bf16.msra.mxu0 %v893
      %902 = vmatprep.subr.bf16.mxu0 0
      %903 = vmatpush1.bf16.msra.mxu0 %v894
      %904 = vmatprep.subr.bf16.mxu0 0
      %905 = vmatpush1.bf16.msra.mxu0 0
      %906 = vmatprep.subr.bf16.mxu0 0
      %907 = vmatpush1.bf16.msra.mxu0 0
      %908 = vmatprep.subr.bf16.mxu0 0
      %909 = vmatpush1.bf16.msra.mxu0 0
      %910 = vmatprep.subr.bf16.mxu0 0
      %911 = vmatpush1.bf16.msra.mxu0 0
      %912 = vmatprep.subr.bf16.mxu0 0
      %913 = vmatpush1.bf16.msra.mxu0 0
      %914 = vmatprep.subr.bf16.mxu0 0
      %915 = vmatpush1.bf16.msra.mxu0 0
      %916 = vmatprep.subr.bf16.mxu0 0
      %917 = vmatpush1.bf16.msra.mxu0 0
      %918 = vmatprep.subr.bf16.mxu0 0
      %919 = vmatpush1.bf16.msra.mxu0 0
      %920 = vmatprep.subr.bf16.mxu0 0
      %921 = vmatpush1.bf16.msra.mxu0 0
      %922 = vmatprep.subr.bf16.mxu0 0
      %923 = vmatpush1.bf16.msra.mxu0 0
      %924 = vmatprep.subr.bf16.mxu0 0
      %925 = vmatpush1.bf16.msra.mxu0 0
      %926 = vmatprep.subr.bf16.mxu0 0
      %927 = vmatpush1.bf16.msra.mxu0 0
      %928 = vmatprep.subr.bf16.mxu0 0
      %929 = vmatpush1.bf16.msra.mxu0 0
      %930 = vmatprep.subr.bf16.mxu0 0
      %931 = vmatpush1.bf16.msra.mxu0 0
      %932 = vmatprep.mubr.bf16.mxu0 0
      %933 = vmatmul.mubr.bf16.gmra.mrb[0].mxu0 %v898
      %v934 = vpop.f32.mrb[0].mxu0
      %v935 = vadd.f32 0.0, %v934
      %v936 = vpop.f32.mrb[0].mxu0
      %v937 = vpop.f32.mrb[0].mxu0
      %v938 = vadd.f32 0.0, %v937
      %v939 = vpop.f32.mrb[0].mxu0
      %940 = vdwg.mxu0
      %v941 = vadd.f32 %v847, %v935
      %v942 = vadd.f32 %v848, %v938
      %v943 = vrot.slane %v855, 7
      %v944 = vrot.slane %v943, 2
      %v945 = vrot.slane %v856, 7
      %v946 = vsel %vm412, %v944, %v945
      %s947 = scalar_lea.vmem %s1, 128
      %v948 = vld [vmem:[%s947] sm:$0xf]
      %v949 = vld [vmem:[%s947 + $0x4] sm:$0xf]
      %v950 = vld [vmem:[%s947 + $0x8] sm:$0xf]
      %v951 = vld [vmem:[%s947 + $0xc] sm:$0xf]
      %v952 = vcombine.low %v695, %v946
      %v954 = vunpack.c.l.s4 1983009808
      %v955 = vunpack.c.0.s8 %v954
      %v956 = vlaneseq
      %v957 = vshrl.u32 %v956, 7
      %v958 = vsub.s32 %v955, %v957
      %v959 = vrot.slane %v952, %v958
      %v960 = vcombine.low %v449, %v959
      %v965 = vunpack.c.l.b16 %v948
      %v966 = vunpack.c.l.b16 %v949
      %v967 = vunpack.c.l.b16 %v950
      %v968 = vunpack.c.l.b16 %v951
      %v969 = vpack.c.b16 %v966, %v965
      %v970 = vpack.c.b16 %v968, %v967
      %v974 = vsel %vm288, %v960, 0
      %976 = vmatprep.subr.bf16.mxu0 0
      %977 = vmatpush1.bf16.msra.mxu0 %v969
      %978 = vmatprep.subr.bf16.mxu0 0
      %979 = vmatpush1.bf16.msra.mxu0 %v970
      %980 = vmatprep.subr.bf16.mxu0 0
      %981 = vmatpush1.bf16.msra.mxu0 0
      %982 = vmatprep.subr.bf16.mxu0 0
      %983 = vmatpush1.bf16.msra.mxu0 0
      %984 = vmatprep.subr.bf16.mxu0 0
      %985 = vmatpush1.bf16.msra.mxu0 0
      %986 = vmatprep.subr.bf16.mxu0 0
      %987 = vmatpush1.bf16.msra.mxu0 0
      %988 = vmatprep.subr.bf16.mxu0 0
      %989 = vmatpush1.bf16.msra.mxu0 0
      %990 = vmatprep.subr.bf16.mxu0 0
      %991 = vmatpush1.bf16.msra.mxu0 0
      %992 = vmatprep.subr.bf16.mxu0 0
      %993 = vmatpush1.bf16.msra.mxu0 0
      %994 = vmatprep.subr.bf16.mxu0 0
      %995 = vmatpush1.bf16.msra.mxu0 0
      %996 = vmatprep.subr.bf16.mxu0 0
      %997 = vmatpush1.bf16.msra.mxu0 0
      %998 = vmatprep.subr.bf16.mxu0 0
      %999 = vmatpush1.bf16.msra.mxu0 0
      %1000 = vmatprep.subr.bf16.mxu0 0
      %1001 = vmatpush1.bf16.msra.mxu0 0
      %1002 = vmatprep.subr.bf16.mxu0 0
      %1003 = vmatpush1.bf16.msra.mxu0 0
      %1004 = vmatprep.subr.bf16.mxu0 0
      %1005 = vmatpush1.bf16.msra.mxu0 0
      %1006 = vmatprep.subr.bf16.mxu0 0
      %1007 = vmatpush1.bf16.msra.mxu0 0
      %1008 = vmatprep.mubr.bf16.mxu0 0
      %1009 = vmatmul.mubr.bf16.gmra.mrb[0].mxu0 %v974
      %v1010 = vpop.f32.mrb[0].mxu0
      %v1011 = vadd.f32 0.0, %v1010
      %v1012 = vpop.f32.mrb[0].mxu0
      %v1013 = vpop.f32.mrb[0].mxu0
      %v1014 = vadd.f32 0.0, %v1013
      %v1015 = vpop.f32.mrb[0].mxu0
      %1016 = vdwg.mxu0
      %v1017 = vadd.f32 %v941, %v1011
      %v1018 = vadd.f32 %v942, %v1014
      %v1021 = vcombine.high %v1017, %v1017
      %v1022 = vcombine.high %v1018, %v1018
      %vm1025 = vcmask 257024
      %1026 = vst.msk [vmem:[%s143] sm:$0xf] %vm1025, %v1017
      %1027 = vst.msk [vmem:[%s143 + $0x4] sm:$0xf] %vm1025, %v1021
      %1028 = vst.msk [vmem:[%s143 + $0x8] sm:$0xf] %vm1025, %v1018
      %1029 = vst.msk [vmem:[%s143 + $0xc] sm:$0xf] %vm1025, %v1022
      %p1030 = scmp.lt.s32.totalorder %s13, 1
      %s1031 = scalar_select %p1030, %s13, 1
      %s1032 = smul.addr %s1031, 4
      %s1033 = smul.addr %s1032, 4
      %s1034 = scalar_lea.vmem %s2, %s1033
      // Predicated region
      $region29: #{_lambda_.28} parent=27 // pred_check
        %p1035 = pneg %p78
      $region30: #{_lambda_.28} parent=27 // pred_check_branch
        %1037 = sbr.rel (%p1035) target = $region32
      $region31: #{_lambda_.28} parent=27 // pred_region
        _
      $region32: #{_lambda_.28} parent=27 // pred_fallthru
        _
    $region28: #{_lambda_.28} parent=5 // pred_fallthru
      _
    %p1038 = scmp.le.s32.totalorder 2, %s8
    // Predicated region
    $region33: #{_lambda_.28} parent=5 // pred_check
      %p1039 = pneg %p1038
    $region34: #{_lambda_.28} parent=5 // pred_check_branch
      %1041 = sbr.rel (%p1039) target = $region36
    $region35: #{_lambda_.28} parent=5 // pred_region
      %s1042 = ssub.s32 %s8, 2
      // Predicated region
      $region37: #{_lambda_.28} parent=35 // pred_check
        %p1043 = pneg %p84
      $region38: #{_lambda_.28} parent=35 // pred_check_branch
        %1045 = sbr.rel (%p1043) target = $region40
      $region39: #{_lambda_.28} parent=35 // pred_region
        %p1046 = scmp.lt.s32.totalorder %s14, 1
        %s1047 = scalar_select %p1046, %s14, 1
        %s1048 = smul.addr %s1047, 4
        %s1049 = smul.addr %s1048, 4
        %s1050 = scalar_lea.vmem %s2, %s1049
      $region40: #{_lambda_.28} parent=35 // pred_fallthru
        _
    $region36: #{_lambda_.28} parent=5 // pred_fallthru
      _
  $region6: #{_lambda_.28} parent=0 // loop_footer
    %s12 = sadd.s32 1, %s8
  $region7: #{_lambda_.28} parent=0 // loop_footer_branch
    %7 = sbr.rel target = $region3
  $region8: #{_lambda_.28} parent=0 // loop_exit
    _

</llo_original>
